<compile_context>
chip_gen: v7x
topology: tpu7x:2x2x1
jax: 0.10.0
libtpu: 0.0.40
codegen_flags: <defaults>
</compile_context>

<pallas_src>
import math
import numpy as np
import jax
import jax.numpy as jnp
from jax.experimental import pallas as pl
from jax.experimental.pallas import tpu as pltpu

# ----- hyper-parameters mirroring the nn.Module __init__ ---------------------
VOCAB_SIZE = 10000      # nn.Embedding(10000, n_hidden)
N_HIDDEN   = 100        # d_model / embedding dim (padded to 128 lanes in-kernel)
HP         = 128        # lane-padded d_model
N_INPUT    = 1          # audio channels in
N_OUTPUT   = 7
STRIDE     = 16         # conv1 stride
N_CHANNEL  = 32
N_LAYERS   = 2          # TransformerEncoder layers
FFN_DIM    = 100        # TransformerEncoderLayer dim_feedforward
CONV1_K    = 80
POOL_K     = 4
BN_EPS     = 1e-5
LN_EPS     = 1e-5
PE_MAX_LEN = 512        # rows of the sinusoidal PE buffer we materialize


# =============================================================================
# Forward pass: one pallas_call, grid over the batch.
# =============================================================================
def multimodal_forward(params, tokens, audio):
    """tokens: (B, S) int32, audio: (B, 1, L) float32 -> (B, N_OUTPUT) float32."""
    B, S = tokens.shape
    L = audio.shape[-1]
    NC = N_CHANNEL
    assert audio.shape[1] == N_INPUT and S <= PE_MAX_LEN

    # -------- static lengths through the audio conv/pool chain ---------------
    L1 = (L - CONV1_K) // STRIDE + 1       # conv1 output length
    L1p = L1 // POOL_K                     # pool1 output length
    L2 = L1p - 2;  L2p = L2 // POOL_K
    L3 = L2p - 2;  L3p = L3 // POOL_K
    L4 = L3p - 2;  L4p = L4 // POOL_K
    assert L4p >= 1, "audio too short for the conv/pool chain"
    # pooled-phase im2col validity: row p needs samples [64p, 64p+128)
    assert L % 64 == 0 and L1p <= L // 64 - 1

    sm_scale = 1.0 / math.sqrt(N_HIDDEN)   # nhead = 1 -> head_dim = d_model

    # -------- XLA glue --------------------------------------------------------
    # embedding gather * sqrt(d_model) + positional encoding (lanes 100:128 = 0)
    emb = jnp.take(params["embedding"], tokens, axis=0)                  # (B,S,128)
    x_text = emb * jnp.float32(math.sqrt(N_HIDDEN)) + params["pos_enc"][None, :S, :]
    # pooled-phase im2col for conv1: row p = raw samples [64p, 64p+128)
    xv = audio.reshape(B, L // 64, 64)
    a_im2col = jnp.concatenate([xv[:, :-1, :], xv[:, 1:, :]], axis=-1)[:, :L1p, :]

    # -------- the fused kernel (one batch element per grid step) -------------
    def kernel(a_ref, c1w, c1ss, c2w, c2ss, c3w, c3ss, c4w, c4ss,        # audio
               x_ref, qkvw, qkvb, wow, wob, f1w, f1b, f2w, f2b, ln,      # text
               w1a, w1m, w1u, b1h, w2, b2,                               # head
               o_ref,                                                    # (1, 7)
               p1, c2s, p2, c3s, p3, c4s):                               # scratch
        f32 = jnp.float32

        # ---------------- audio branch ----------------------------------------
        # conv1: single (L1p,128)x(128,128) contraction over pooled-phase im2col,
        # eval-BN + bias + ReLU as a tiled per-lane scale/shift, MaxPool1d(4) as
        # 3 in-vreg maxima over the four 32-lane phase groups.
        y = jnp.dot(a_ref[...], c1w[...], preferred_element_type=f32)    # (L1p,128)
        y = jnp.maximum(y * c1ss[0:1, :] + c1ss[1:2, :], 0.0)
        p1[...] = jnp.maximum(jnp.maximum(y[:, 0 * NC:1 * NC], y[:, 1 * NC:2 * NC]),
                              jnp.maximum(y[:, 2 * NC:3 * NC], y[:, 3 * NC:4 * NC]))

        def conv3_bn_relu(src, n_out, c_in, w_ref, ss_ref, dst):
            # kernel-3 Conv1d as 3 shifted accumulating matmuls (operands here are
            # tiny, <=122 rows, so no vreg-pressure concern); eval-BN + ReLU folded.
            z = jnp.dot(src[pl.ds(0, n_out), :], w_ref[pl.ds(0, c_in), :],
                        preferred_element_type=f32)
            for j in range(1, 3):
                z = z + jnp.dot(src[pl.ds(j, n_out), :],
                                w_ref[pl.ds(j * c_in, c_in), :],
                                preferred_element_type=f32)
            dst[...] = jnp.maximum(z * ss_ref[0:1, :] + ss_ref[1:2, :], 0.0)

        def max_pool4(src, n_out):
            # MaxPool1d(4), floor semantics, stride-4 sublane reads from scratch.
            out = src[pl.ds(0, n_out, stride=POOL_K), :]
            for k in range(1, POOL_K):
                out = jnp.maximum(out, src[pl.ds(k, n_out, stride=POOL_K), :])
            return out

        conv3_bn_relu(p1, L2, NC, c2w, c2ss, c2s)
        p2[...] = max_pool4(c2s, L2p)
        conv3_bn_relu(p2, L3, NC, c3w, c3ss, c3s)
        p3[...] = max_pool4(c3s, L3p)
        conv3_bn_relu(p3, L4, 2 * NC, c4w, c4ss, c4s)
        pooled4 = max_pool4(c4s, L4p)                                    # (L4p, 64)
        # F.avg_pool1d over the entire remaining length
        audio_feat = jnp.mean(pooled4, axis=0, keepdims=True)            # (1, 64)

        # ---------------- text branch: 2-layer transformer encoder ------------
        rows = jax.lax.broadcasted_iota(jnp.int32, (S, S), 0)
        cols = jax.lax.broadcasted_iota(jnp.int32, (S, S), 1)
        causal = cols <= rows        # src_mask: -inf strictly above the diagonal

        def layer_norm(v, g, beta):
            # statistics over the 100 real lanes only; padded input lanes are zero
            # so the sums are unaffected, and padded gamma/beta are zero so padded
            # lanes stay exactly zero after the affine.
            mu = jnp.sum(v, axis=-1, keepdims=True) * (1.0 / N_HIDDEN)
            ex2 = jnp.sum(v * v, axis=-1, keepdims=True) * (1.0 / N_HIDDEN)
            var = ex2 - mu * mu
            return (v - mu) * jax.lax.rsqrt(var + LN_EPS) * g + beta

        h = x_ref[...]                                                   # (S, 128)
        for layer in range(N_LAYERS):
            # fused QKV projection; Q/K/V are exact 128-lane column tiles.
            qkv = jnp.dot(h, qkvw[layer], preferred_element_type=f32) + qkvb[layer]
            q = qkv[:, 0:HP]
            k = qkv[:, HP:2 * HP]
            v = qkv[:, 2 * HP:3 * HP]
            s = jnp.dot(q, k.T, preferred_element_type=f32) * sm_scale   # (S, S)
            s = jnp.where(causal, s, -1e30)
            e = jnp.exp(s - jnp.max(s, axis=-1, keepdims=True))
            p = e * pl.reciprocal(jnp.sum(e, axis=-1, keepdims=True), approx=True)
            ctx = jnp.dot(p, v, preferred_element_type=f32)              # (S, 128)
            attn = jnp.dot(ctx, wow[layer], preferred_element_type=f32) + wob[layer]
            h = layer_norm(h + attn, ln[layer, 0:1, :], ln[layer, 1:2, :])  # post-LN
            ff = jnp.maximum(jnp.dot(h, f1w[layer], preferred_element_type=f32)
                             + f1b[layer], 0.0)
            ff = jnp.dot(ff, f2w[layer], preferred_element_type=f32) + f2b[layer]
            h = layer_norm(h + ff, ln[layer, 2:3, :], ln[layer, 3:4, :])

        avg_p = jnp.mean(h, axis=0, keepdims=True)                       # (1, 128)
        max_p = jnp.max(h, axis=0, keepdims=True)                        # (1, 128)

        # ---------------- fused MLP head (lin1 split into row blocks) ---------
        z = (jnp.dot(avg_p, w1a[...], preferred_element_type=f32)
             + jnp.dot(max_p, w1m[...], preferred_element_type=f32)
             + jnp.dot(audio_feat, w1u[...], preferred_element_type=f32)
             + b1h[...])
        z = jnp.maximum(z, 0.0)
        o_ref[...] = jnp.dot(z, w2[...], preferred_element_type=f32) + b2[...]

    # -------- specs -----------------------------------------------------------
    def full_spec(arr):
        nd = arr.ndim
        return pl.BlockSpec(arr.shape, lambda b, nd=nd: (0,) * nd)

    aweights = [params["c1_w"], params["c1_ss"], params["c2_w"], params["c2_ss"],
                params["c3_w"], params["c3_ss"], params["c4_w"], params["c4_ss"]]
    tweights = [params["qkv_w"], params["qkv_b"], params["attn_o_w"],
                params["attn_o_b"], params["ff1_w"], params["ff1_b"],
                params["ff2_w"], params["ff2_b"], params["ln"]]
    hweights = [params["lin1_w_avg"], params["lin1_w_max"], params["lin1_w_aud"],
                params["lin1_b"], params["lin2_w"], params["lin2_b"]]

    in_specs = ([pl.BlockSpec((None, L1p, HP), lambda b: (b, 0, 0))]
                + [full_spec(w) for w in aweights]
                + [pl.BlockSpec((None, S, HP), lambda b: (b, 0, 0))]
                + [full_spec(w) for w in tweights]
                + [full_spec(w) for w in hweights])

    out = pl.pallas_call(
        kernel,
        grid=(B,),
        out_shape=jax.ShapeDtypeStruct((B, 1, N_OUTPUT), jnp.float32),
        in_specs=in_specs,
        out_specs=pl.BlockSpec((None, 1, N_OUTPUT), lambda b: (b, 0, 0)),
        scratch_shapes=[
            pltpu.VMEM((L1p, NC), jnp.float32),       # pool1 output
            pltpu.VMEM((L2, NC), jnp.float32),        # conv2 output
            pltpu.VMEM((L2p, NC), jnp.float32),       # pool2 output
            pltpu.VMEM((L3, 2 * NC), jnp.float32),    # conv3 output
            pltpu.VMEM((L3p, 2 * NC), jnp.float32),   # pool3 output
            pltpu.VMEM((L4, 2 * NC), jnp.float32),    # conv4 output
        ],
        compiler_params=pltpu.CompilerParams(
            dimension_semantics=("parallel",)),       # 2x on v7x (2 TCs/chip)
    )(a_im2col, *aweights, x_text, *tweights, *hweights)
    return out.reshape(B, N_OUTPUT)


# =============================================================================
# Deterministic synthetic parameters, stored in kernel-ready (lane-padded) layout.
# (Importing a real PyTorch state_dict must apply the same transposition /
#  BN-folding / 128-lane zero-padding / pooled-phase conv1 / lin1-splitting.)
# =============================================================================
def init_params(key):
    H, NC, FF = N_HIDDEN, N_CHANNEL, FFN_DIM
    keys = iter(jax.random.split(key, 128))

    def nrm(shape, s=0.05):
        return (s * jax.random.normal(next(keys), shape)).astype(jnp.float32)

    def unif(shape, lo=0.5, hi=1.5):
        return jax.random.uniform(next(keys), shape, minval=lo, maxval=hi
                                  ).astype(jnp.float32)

    def padw(w, rows, cols):
        return jnp.pad(w, ((0, rows - w.shape[0]), (0, cols - w.shape[1])))

    def pad1(v):
        return jnp.pad(v, (0, HP - v.shape[0]))

    p = {}
    p["embedding"] = padw(nrm((VOCAB_SIZE, H), 0.1), VOCAB_SIZE, HP)

    # sinusoidal PositionalEncoding buffer (first PE_MAX_LEN rows), lane-padded
    pos = np.arange(PE_MAX_LEN, dtype=np.float32)[:, None]
    div = np.exp(np.arange(0, H, 2, dtype=np.float32) * (-math.log(10000.0) / H))
    pe = np.zeros((PE_MAX_LEN, HP), dtype=np.float32)
    pe[:, 0:H:2] = np.sin(pos * div)
    pe[:, 1:H:2] = np.cos(pos * div)
    p["pos_enc"] = jnp.asarray(pe)

    # Transformer weights pre-transposed for `x @ W`, zero-padded 100 -> 128 lanes.
    # Q/K/V columns packed as exact 128-lane tiles [Q(128) | K(128) | V(128)].
    qkv_w, qkv_b, wo_l, wob_l, f1w_l, f1b_l, f2w_l, f2b_l, ln_l = ([] for _ in range(9))
    for _ in range(N_LAYERS):
        qkv_w.append(jnp.concatenate([padw(nrm((H, H)), HP, HP) for _ in range(3)],
                                     axis=1))                            # (128, 384)
        qkv_b.append(jnp.concatenate([padw(nrm((1, H)), 1, HP) for _ in range(3)],
                                     axis=1))                            # (1, 384)
        wo_l.append(padw(nrm((H, H)), HP, HP));   wob_l.append(padw(nrm((1, H)), 1, HP))
        f1w_l.append(padw(nrm((H, FF)), HP, HP)); f1b_l.append(padw(nrm((1, FF)), 1, HP))
        f2w_l.append(padw(nrm((FF, H)), HP, HP)); f2b_l.append(padw(nrm((1, H)), 1, HP))
        # LN gamma/beta padded with ZEROS so padded lanes stay zero.
        ln_l.append(jnp.stack([pad1(unif((H,), 0.9, 1.1)), pad1(nrm((H,))),
                               pad1(unif((H,), 0.9, 1.1)), pad1(nrm((H,)))], axis=0))
    p["qkv_w"] = jnp.stack(qkv_w);   p["qkv_b"] = jnp.stack(qkv_b)
    p["attn_o_w"] = jnp.stack(wo_l); p["attn_o_b"] = jnp.stack(wob_l)
    p["ff1_w"] = jnp.stack(f1w_l);   p["ff1_b"] = jnp.stack(f1b_l)
    p["ff2_w"] = jnp.stack(f2w_l);   p["ff2_b"] = jnp.stack(f2b_l)
    p["ln"] = jnp.stack(ln_l)

    def bn_fold(c_out, bias):
        gamma, beta = unif((c_out,)), nrm((c_out,))
        mean, var = nrm((c_out,)), unif((c_out,))
        scale = gamma / jnp.sqrt(var + BN_EPS)
        shift = beta + (bias - mean) * scale
        return scale, shift

    # conv1 in pooled-phase layout: (128, 128) banded weight, 4 column groups of
    # 32 channels = the 4 MaxPool phases; BN scale/shift tiled across the groups.
    w1 = nrm((NC, N_INPUT, CONV1_K)); b1c = nrm((NC,))
    wt = jnp.transpose(w1, (2, 1, 0)).reshape(CONV1_K, NC)               # (80, 32)
    c1w = jnp.zeros((HP, POOL_K * NC), jnp.float32)
    for k in range(POOL_K):
        c1w = c1w.at[STRIDE * k:STRIDE * k + CONV1_K, NC * k:NC * (k + 1)].set(wt)
    s1, sh1 = bn_fold(NC, b1c)
    p["c1_w"] = c1w
    p["c1_ss"] = jnp.tile(jnp.stack([s1, sh1], axis=0), (1, POOL_K))     # (2, 128)

    # conv2-4: weight -> (K*C_in, C_out) matmul layout, eval-BN + bias folded.
    def conv_block(c_in, c_out, ksz):
        w = nrm((c_out, c_in, ksz)); bias = nrm((c_out,))
        w_mat = jnp.transpose(w, (2, 1, 0)).reshape(ksz * c_in, c_out)
        scale, shift = bn_fold(c_out, bias)
        return w_mat, jnp.stack([scale, shift], axis=0)

    p["c2_w"], p["c2_ss"] = conv_block(NC, NC, 3)
    p["c3_w"], p["c3_ss"] = conv_block(NC, 2 * NC, 3)
    p["c4_w"], p["c4_ss"] = conv_block(2 * NC, 2 * NC, 3)

    # Fusion head: lin1 (264 -> 100) pre-split into [avg(100) | max(100) | audio(64)]
    # row blocks, zero-padded to 128 lanes.
    p["lin1_w_avg"] = padw(nrm((H, H)), HP, HP)
    p["lin1_w_max"] = padw(nrm((H, H)), HP, HP)
    p["lin1_w_aud"] = padw(nrm((2 * NC, H)), 2 * NC, HP)
    p["lin1_b"] = padw(nrm((1, H)), 1, HP)
    p["lin2_w"] = padw(nrm((H, N_OUTPUT)), HP, N_OUTPUT)
    p["lin2_b"] = nrm((1, N_OUTPUT))
    return p


if __name__ == "__main__":
    B, S, L = 2, 8, 8000            # L=8000 keeps the conv/pool chain valid
    key = jax.random.PRNGKey(0)
    pkey, tkey, akey = jax.random.split(key, 3)
    params = init_params(pkey)
    tokens = jax.random.randint(tkey, (B, S), 0, VOCAB_SIZE, dtype=jnp.int32)
    audio = jax.random.normal(akey, (B, N_INPUT, L), dtype=jnp.float32)

    out = jax.jit(multimodal_forward)(params, tokens, audio)
    out = jax.block_until_ready(out)
    assert out.shape == (B, N_OUTPUT), out.shape
    assert bool(jnp.all(jnp.isfinite(out)))
    print("KERNEL_OK")
</pallas_src>

<mosaic_0001>
module attributes {stable_mosaic.version = 11 : i64} {
  func.func @kernel(%arg0: i32, %arg1: memref<1x124x128xf32, #tpu.memory_space<vmem>>, %arg2: memref<128x128xf32, #tpu.memory_space<vmem>>, %arg3: memref<2x128xf32, #tpu.memory_space<vmem>>, %arg4: memref<96x32xf32, #tpu.memory_space<vmem>>, %arg5: memref<2x32xf32, #tpu.memory_space<vmem>>, %arg6: memref<96x64xf32, #tpu.memory_space<vmem>>, %arg7: memref<2x64xf32, #tpu.memory_space<vmem>>, %arg8: memref<192x64xf32, #tpu.memory_space<vmem>>, %arg9: memref<2x64xf32, #tpu.memory_space<vmem>>, %arg10: memref<1x8x128xf32, #tpu.memory_space<vmem>>, %arg11: memref<2x128x384xf32, #tpu.memory_space<vmem>>, %arg12: memref<2x1x384xf32, #tpu.memory_space<vmem>>, %arg13: memref<2x128x128xf32, #tpu.memory_space<vmem>>, %arg14: memref<2x1x128xf32, #tpu.memory_space<vmem>>, %arg15: memref<2x128x128xf32, #tpu.memory_space<vmem>>, %arg16: memref<2x1x128xf32, #tpu.memory_space<vmem>>, %arg17: memref<2x128x128xf32, #tpu.memory_space<vmem>>, %arg18: memref<2x1x128xf32, #tpu.memory_space<vmem>>, %arg19: memref<2x4x128xf32, #tpu.memory_space<vmem>>, %arg20: memref<128x128xf32, #tpu.memory_space<vmem>>, %arg21: memref<128x128xf32, #tpu.memory_space<vmem>>, %arg22: memref<64x128xf32, #tpu.memory_space<vmem>>, %arg23: memref<1x128xf32, #tpu.memory_space<vmem>>, %arg24: memref<128x7xf32, #tpu.memory_space<vmem>>, %arg25: memref<1x7xf32, #tpu.memory_space<vmem>>, %arg26: memref<1x1x7xf32, #tpu.memory_space<vmem>>, %arg27: memref<124x32xf32, #tpu.memory_space<vmem>>, %arg28: memref<122x32xf32, #tpu.memory_space<vmem>>, %arg29: memref<30x32xf32, #tpu.memory_space<vmem>>, %arg30: memref<28x64xf32, #tpu.memory_space<vmem>>, %arg31: memref<7x64xf32, #tpu.memory_space<vmem>>, %arg32: memref<5x64xf32, #tpu.memory_space<vmem>>) attributes {dimension_semantics = [#tpu.dimension_semantics<parallel>], iteration_bounds = array<i64: 2>, scalar_prefetch = 0 : i64, scratch_operands = 6 : i64, tpu.core_type = #tpu.core_type<tc>, window_params = [{transform_indices = @transform_0, window_bounds = array<i64: 1, 124, 128>}, {pipeline_mode = #tpu.pipeline_mode<synchronous>, transform_indices = @transform_1, window_bounds = array<i64: 128, 128>}, {pipeline_mode = #tpu.pipeline_mode<synchronous>, transform_indices = @transform_2, window_bounds = array<i64: 2, 128>}, {pipeline_mode = #tpu.pipeline_mode<synchronous>, transform_indices = @transform_3, window_bounds = array<i64: 96, 32>}, {pipeline_mode = #tpu.pipeline_mode<synchronous>, transform_indices = @transform_4, window_bounds = array<i64: 2, 32>}, {pipeline_mode = #tpu.pipeline_mode<synchronous>, transform_indices = @transform_5, window_bounds = array<i64: 96, 64>}, {pipeline_mode = #tpu.pipeline_mode<synchronous>, transform_indices = @transform_6, window_bounds = array<i64: 2, 64>}, {pipeline_mode = #tpu.pipeline_mode<synchronous>, transform_indices = @transform_7, window_bounds = array<i64: 192, 64>}, {pipeline_mode = #tpu.pipeline_mode<synchronous>, transform_indices = @transform_8, window_bounds = array<i64: 2, 64>}, {transform_indices = @transform_9, window_bounds = array<i64: 1, 8, 128>}, {pipeline_mode = #tpu.pipeline_mode<synchronous>, transform_indices = @transform_10, window_bounds = array<i64: 2, 128, 384>}, {pipeline_mode = #tpu.pipeline_mode<synchronous>, transform_indices = @transform_11, window_bounds = array<i64: 2, 1, 384>}, {pipeline_mode = #tpu.pipeline_mode<synchronous>, transform_indices = @transform_12, window_bounds = array<i64: 2, 128, 128>}, {pipeline_mode = #tpu.pipeline_mode<synchronous>, transform_indices = @transform_13, window_bounds = array<i64: 2, 1, 128>}, {pipeline_mode = #tpu.pipeline_mode<synchronous>, transform_indices = @transform_14, window_bounds = array<i64: 2, 128, 128>}, {pipeline_mode = #tpu.pipeline_mode<synchronous>, transform_indices = @transform_15, window_bounds = array<i64: 2, 1, 128>}, {pipeline_mode = #tpu.pipeline_mode<synchronous>, transform_indices = @transform_16, window_bounds = array<i64: 2, 128, 128>}, {pipeline_mode = #tpu.pipeline_mode<synchronous>, transform_indices = @transform_17, window_bounds = array<i64: 2, 1, 128>}, {pipeline_mode = #tpu.pipeline_mode<synchronous>, transform_indices = @transform_18, window_bounds = array<i64: 2, 4, 128>}, {pipeline_mode = #tpu.pipeline_mode<synchronous>, transform_indices = @transform_19, window_bounds = array<i64: 128, 128>}, {pipeline_mode = #tpu.pipeline_mode<synchronous>, transform_indices = @transform_20, window_bounds = array<i64: 128, 128>}, {pipeline_mode = #tpu.pipeline_mode<synchronous>, transform_indices = @transform_21, window_bounds = array<i64: 64, 128>}, {pipeline_mode = #tpu.pipeline_mode<synchronous>, transform_indices = @transform_22, window_bounds = array<i64: 1, 128>}, {pipeline_mode = #tpu.pipeline_mode<synchronous>, transform_indices = @transform_23, window_bounds = array<i64: 128, 7>}, {pipeline_mode = #tpu.pipeline_mode<synchronous>, transform_indices = @transform_24, window_bounds = array<i64: 1, 7>}, {transform_indices = @transform_25, window_bounds = array<i64: 1, 1, 7>}]} {
    %c0 = arith.constant 0 : index
    %c0_0 = arith.constant 0 : index
    %c0_1 = arith.constant 0 : index
    %0 = vector.load %arg1[%c0, %c0_0, %c0_1] : memref<1x124x128xf32, #tpu.memory_space<vmem>>, vector<1x124x128xf32>
    %1 = vector.shape_cast %0 : vector<1x124x128xf32> to vector<124x128xf32>
    %c0_2 = arith.constant 0 : index
    %c0_3 = arith.constant 0 : index
    %2 = vector.load %arg2[%c0_2, %c0_3] : memref<128x128xf32, #tpu.memory_space<vmem>>, vector<128x128xf32>
    %cst = arith.constant dense<0.000000e+00> : vector<124x128xf32>
    %3 = tpu.matmul %1, %2, %cst {dimension_numbers = #tpu.dot_dimension_numbers<[1], [0], [0], [1], [0, 0, 1, 1], [], []>} : vector<124x128xf32>, vector<128x128xf32>, vector<124x128xf32> -> vector<124x128xf32>
    %c0_4 = arith.constant 0 : index
    %c0_5 = arith.constant 0 : index
    %4 = vector.load %arg3[%c0_4, %c0_5] : memref<2x128xf32, #tpu.memory_space<vmem>>, vector<1x128xf32>
    %5 = vector.broadcast %4 : vector<1x128xf32> to vector<124x128xf32>
    %6 = arith.mulf %3, %5 : vector<124x128xf32>
    %c1 = arith.constant 1 : index
    %c0_6 = arith.constant 0 : index
    %7 = vector.load %arg3[%c1, %c0_6] : memref<2x128xf32, #tpu.memory_space<vmem>>, vector<1x128xf32>
    %8 = vector.broadcast %7 : vector<1x128xf32> to vector<124x128xf32>
    %9 = arith.addf %6, %8 : vector<124x128xf32>
    %cst_7 = arith.constant 0.000000e+00 : f32
    %10 = vector.broadcast %cst_7 : f32 to vector<124x128xf32>
    %11 = arith.maximumf %9, %10 : vector<124x128xf32>
    %12 = vector.extract_strided_slice %11 {offsets = [0, 0], sizes = [124, 32], strides = [1, 1]} : vector<124x128xf32> to vector<124x32xf32>
    %13 = vector.extract_strided_slice %11 {offsets = [0, 32], sizes = [124, 32], strides = [1, 1]} : vector<124x128xf32> to vector<124x32xf32>
    %14 = arith.maximumf %12, %13 : vector<124x32xf32>
    %15 = vector.extract_strided_slice %11 {offsets = [0, 64], sizes = [124, 32], strides = [1, 1]} : vector<124x128xf32> to vector<124x32xf32>
    %16 = vector.extract_strided_slice %11 {offsets = [0, 96], sizes = [124, 32], strides = [1, 1]} : vector<124x128xf32> to vector<124x32xf32>
    %17 = arith.maximumf %15, %16 : vector<124x32xf32>
    %18 = arith.maximumf %14, %17 : vector<124x32xf32>
    %c0_8 = arith.constant 0 : index
    %c0_9 = arith.constant 0 : index
    %19 = vector.load %arg27[%c0_8, %c0_9] : memref<124x32xf32, #tpu.memory_space<vmem>>, vector<124x32xf32>
    tpu.vector_store %arg27[%c0_8, %c0_9], %18 {strides = array<i32>} : memref<124x32xf32, #tpu.memory_space<vmem>>, vector<124x32xf32>,
    %c0_10 = arith.constant 0 : index
    %c0_11 = arith.constant 0 : index
    %20 = vector.load %arg27[%c0_10, %c0_11] : memref<124x32xf32, #tpu.memory_space<vmem>>, vector<122x32xf32>
    %c0_12 = arith.constant 0 : index
    %c0_13 = arith.constant 0 : index
    %21 = vector.load %arg4[%c0_12, %c0_13] : memref<96x32xf32, #tpu.memory_space<vmem>>, vector<32x32xf32>
    %cst_14 = arith.constant dense<0.000000e+00> : vector<122x32xf32>
    %22 = tpu.matmul %20, %21, %cst_14 {dimension_numbers = #tpu.dot_dimension_numbers<[1], [0], [0], [1], [0, 0, 1, 1], [], []>} : vector<122x32xf32>, vector<32x32xf32>, vector<122x32xf32> -> vector<122x32xf32>
    %c1_15 = arith.constant 1 : index
    %c0_16 = arith.constant 0 : index
    %23 = vector.load %arg27[%c1_15, %c0_16] : memref<124x32xf32, #tpu.memory_space<vmem>>, vector<122x32xf32>
    %c32 = arith.constant 32 : index
    %c0_17 = arith.constant 0 : index
    %24 = vector.load %arg4[%c32, %c0_17] : memref<96x32xf32, #tpu.memory_space<vmem>>, vector<32x32xf32>
    %cst_18 = arith.constant dense<0.000000e+00> : vector<122x32xf32>
    %25 = tpu.matmul %23, %24, %cst_18 {dimension_numbers = #tpu.dot_dimension_numbers<[1], [0], [0], [1], [0, 0, 1, 1], [], []>} : vector<122x32xf32>, vector<32x32xf32>, vector<122x32xf32> -> vector<122x32xf32>
    %26 = arith.addf %22, %25 : vector<122x32xf32>
    %c2 = arith.constant 2 : index
    %c0_19 = arith.constant 0 : index
    %27 = vector.load %arg27[%c2, %c0_19] : memref<124x32xf32, #tpu.memory_space<vmem>>, vector<122x32xf32>
    %c64 = arith.constant 64 : index
    %c0_20 = arith.constant 0 : index
    %28 = vector.load %arg4[%c64, %c0_20] : memref<96x32xf32, #tpu.memory_space<vmem>>, vector<32x32xf32>
    %cst_21 = arith.constant dense<0.000000e+00> : vector<122x32xf32>
    %29 = tpu.matmul %27, %28, %cst_21 {dimension_numbers = #tpu.dot_dimension_numbers<[1], [0], [0], [1], [0, 0, 1, 1], [], []>} : vector<122x32xf32>, vector<32x32xf32>, vector<122x32xf32> -> vector<122x32xf32>
    %30 = arith.addf %26, %29 : vector<122x32xf32>
    %c0_22 = arith.constant 0 : index
    %c0_23 = arith.constant 0 : index
    %31 = vector.load %arg5[%c0_22, %c0_23] : memref<2x32xf32, #tpu.memory_space<vmem>>, vector<1x32xf32>
    %32 = vector.broadcast %31 : vector<1x32xf32> to vector<122x32xf32>
    %33 = arith.mulf %30, %32 : vector<122x32xf32>
    %c1_24 = arith.constant 1 : index
    %c0_25 = arith.constant 0 : index
    %34 = vector.load %arg5[%c1_24, %c0_25] : memref<2x32xf32, #tpu.memory_space<vmem>>, vector<1x32xf32>
    %35 = vector.broadcast %34 : vector<1x32xf32> to vector<122x32xf32>
    %36 = arith.addf %33, %35 : vector<122x32xf32>
    %cst_26 = arith.constant 0.000000e+00 : f32
    %37 = vector.broadcast %cst_26 : f32 to vector<122x32xf32>
    %38 = arith.maximumf %36, %37 : vector<122x32xf32>
    %c0_27 = arith.constant 0 : index
    %c0_28 = arith.constant 0 : index
    %39 = vector.load %arg28[%c0_27, %c0_28] : memref<122x32xf32, #tpu.memory_space<vmem>>, vector<122x32xf32>
    tpu.vector_store %arg28[%c0_27, %c0_28], %38 {strides = array<i32>} : memref<122x32xf32, #tpu.memory_space<vmem>>, vector<122x32xf32>,
    %c0_29 = arith.constant 0 : index
    %c0_30 = arith.constant 0 : index
    %40 = tpu.strided_load %arg28[%c0_29, %c0_30] {strides = array<i32: 4, 1>} : memref<122x32xf32, #tpu.memory_space<vmem>>, vector<30x32xf32>
    %c1_31 = arith.constant 1 : index
    %c0_32 = arith.constant 0 : index
    %41 = tpu.strided_load %arg28[%c1_31, %c0_32] {strides = array<i32: 4, 1>} : memref<122x32xf32, #tpu.memory_space<vmem>>, vector<30x32xf32>
    %42 = arith.maximumf %40, %41 : vector<30x32xf32>
    %c2_33 = arith.constant 2 : index
    %c0_34 = arith.constant 0 : index
    %43 = tpu.strided_load %arg28[%c2_33, %c0_34] {strides = array<i32: 4, 1>} : memref<122x32xf32, #tpu.memory_space<vmem>>, vector<30x32xf32>
    %44 = arith.maximumf %42, %43 : vector<30x32xf32>
    %c3 = arith.constant 3 : index
    %c0_35 = arith.constant 0 : index
    %45 = tpu.strided_load %arg28[%c3, %c0_35] {strides = array<i32: 4, 1>} : memref<122x32xf32, #tpu.memory_space<vmem>>, vector<30x32xf32>
    %46 = arith.maximumf %44, %45 : vector<30x32xf32>
    %c0_36 = arith.constant 0 : index
    %c0_37 = arith.constant 0 : index
    %47 = vector.load %arg29[%c0_36, %c0_37] : memref<30x32xf32, #tpu.memory_space<vmem>>, vector<30x32xf32>
    tpu.vector_store %arg29[%c0_36, %c0_37], %46 {strides = array<i32>} : memref<30x32xf32, #tpu.memory_space<vmem>>, vector<30x32xf32>,
    %c0_38 = arith.constant 0 : index
    %c0_39 = arith.constant 0 : index
    %48 = vector.load %arg29[%c0_38, %c0_39] : memref<30x32xf32, #tpu.memory_space<vmem>>, vector<28x32xf32>
    %c0_40 = arith.constant 0 : index
    %c0_41 = arith.constant 0 : index
    %49 = vector.load %arg6[%c0_40, %c0_41] : memref<96x64xf32, #tpu.memory_space<vmem>>, vector<32x64xf32>
    %cst_42 = arith.constant dense<0.000000e+00> : vector<28x64xf32>
    %50 = tpu.matmul %48, %49, %cst_42 {dimension_numbers = #tpu.dot_dimension_numbers<[1], [0], [0], [1], [0, 0, 1, 1], [], []>} : vector<28x32xf32>, vector<32x64xf32>, vector<28x64xf32> -> vector<28x64xf32>
    %c1_43 = arith.constant 1 : index
    %c0_44 = arith.constant 0 : index
    %51 = vector.load %arg29[%c1_43, %c0_44] : memref<30x32xf32, #tpu.memory_space<vmem>>, vector<28x32xf32>
    %c32_45 = arith.constant 32 : index
    %c0_46 = arith.constant 0 : index
    %52 = vector.load %arg6[%c32_45, %c0_46] : memref<96x64xf32, #tpu.memory_space<vmem>>, vector<32x64xf32>
    %cst_47 = arith.constant dense<0.000000e+00> : vector<28x64xf32>
    %53 = tpu.matmul %51, %52, %cst_47 {dimension_numbers = #tpu.dot_dimension_numbers<[1], [0], [0], [1], [0, 0, 1, 1], [], []>} : vector<28x32xf32>, vector<32x64xf32>, vector<28x64xf32> -> vector<28x64xf32>
    %54 = arith.addf %50, %53 : vector<28x64xf32>
    %c2_48 = arith.constant 2 : index
    %c0_49 = arith.constant 0 : index
    %55 = vector.load %arg29[%c2_48, %c0_49] : memref<30x32xf32, #tpu.memory_space<vmem>>, vector<28x32xf32>
    %c64_50 = arith.constant 64 : index
    %c0_51 = arith.constant 0 : index
    %56 = vector.load %arg6[%c64_50, %c0_51] : memref<96x64xf32, #tpu.memory_space<vmem>>, vector<32x64xf32>
    %cst_52 = arith.constant dense<0.000000e+00> : vector<28x64xf32>
    %57 = tpu.matmul %55, %56, %cst_52 {dimension_numbers = #tpu.dot_dimension_numbers<[1], [0], [0], [1], [0, 0, 1, 1], [], []>} : vector<28x32xf32>, vector<32x64xf32>, vector<28x64xf32> -> vector<28x64xf32>
    %58 = arith.addf %54, %57 : vector<28x64xf32>
    %c0_53 = arith.constant 0 : index
    %c0_54 = arith.constant 0 : index
    %59 = vector.load %arg7[%c0_53, %c0_54] : memref<2x64xf32, #tpu.memory_space<vmem>>, vector<1x64xf32>
    %60 = vector.broadcast %59 : vector<1x64xf32> to vector<28x64xf32>
    %61 = arith.mulf %58, %60 : vector<28x64xf32>
    %c1_55 = arith.constant 1 : index
    %c0_56 = arith.constant 0 : index
    %62 = vector.load %arg7[%c1_55, %c0_56] : memref<2x64xf32, #tpu.memory_space<vmem>>, vector<1x64xf32>
    %63 = vector.broadcast %62 : vector<1x64xf32> to vector<28x64xf32>
    %64 = arith.addf %61, %63 : vector<28x64xf32>
    %cst_57 = arith.constant 0.000000e+00 : f32
    %65 = vector.broadcast %cst_57 : f32 to vector<28x64xf32>
    %66 = arith.maximumf %64, %65 : vector<28x64xf32>
    %c0_58 = arith.constant 0 : index
    %c0_59 = arith.constant 0 : index
    %67 = vector.load %arg30[%c0_58, %c0_59] : memref<28x64xf32, #tpu.memory_space<vmem>>, vector<28x64xf32>
    tpu.vector_store %arg30[%c0_58, %c0_59], %66 {strides = array<i32>} : memref<28x64xf32, #tpu.memory_space<vmem>>, vector<28x64xf32>,
    %c0_60 = arith.constant 0 : index
    %c0_61 = arith.constant 0 : index
    %68 = tpu.strided_load %arg30[%c0_60, %c0_61] {strides = array<i32: 4, 1>} : memref<28x64xf32, #tpu.memory_space<vmem>>, vector<7x64xf32>
    %c1_62 = arith.constant 1 : index
    %c0_63 = arith.constant 0 : index
    %69 = tpu.strided_load %arg30[%c1_62, %c0_63] {strides = array<i32: 4, 1>} : memref<28x64xf32, #tpu.memory_space<vmem>>, vector<7x64xf32>
    %70 = arith.maximumf %68, %69 : vector<7x64xf32>
    %c2_64 = arith.constant 2 : index
    %c0_65 = arith.constant 0 : index
    %71 = tpu.strided_load %arg30[%c2_64, %c0_65] {strides = array<i32: 4, 1>} : memref<28x64xf32, #tpu.memory_space<vmem>>, vector<7x64xf32>
    %72 = arith.maximumf %70, %71 : vector<7x64xf32>
    %c3_66 = arith.constant 3 : index
    %c0_67 = arith.constant 0 : index
    %73 = tpu.strided_load %arg30[%c3_66, %c0_67] {strides = array<i32: 4, 1>} : memref<28x64xf32, #tpu.memory_space<vmem>>, vector<7x64xf32>
    %74 = arith.maximumf %72, %73 : vector<7x64xf32>
    %c0_68 = arith.constant 0 : index
    %c0_69 = arith.constant 0 : index
    %75 = vector.load %arg31[%c0_68, %c0_69] : memref<7x64xf32, #tpu.memory_space<vmem>>, vector<7x64xf32>
    tpu.vector_store %arg31[%c0_68, %c0_69], %74 {strides = array<i32>} : memref<7x64xf32, #tpu.memory_space<vmem>>, vector<7x64xf32>,
    %c0_70 = arith.constant 0 : index
    %c0_71 = arith.constant 0 : index
    %76 = vector.load %arg31[%c0_70, %c0_71] : memref<7x64xf32, #tpu.memory_space<vmem>>, vector<5x64xf32>
    %c0_72 = arith.constant 0 : index
    %c0_73 = arith.constant 0 : index
    %77 = vector.load %arg8[%c0_72, %c0_73] : memref<192x64xf32, #tpu.memory_space<vmem>>, vector<64x64xf32>
    %cst_74 = arith.constant dense<0.000000e+00> : vector<5x64xf32>
    %78 = tpu.matmul %76, %77, %cst_74 {dimension_numbers = #tpu.dot_dimension_numbers<[1], [0], [0], [1], [0, 0, 1, 1], [], []>} : vector<5x64xf32>, vector<64x64xf32>, vector<5x64xf32> -> vector<5x64xf32>
    %c1_75 = arith.constant 1 : index
    %c0_76 = arith.constant 0 : index
    %79 = vector.load %arg31[%c1_75, %c0_76] : memref<7x64xf32, #tpu.memory_space<vmem>>, vector<5x64xf32>
    %c64_77 = arith.constant 64 : index
    %c0_78 = arith.constant 0 : index
    %80 = vector.load %arg8[%c64_77, %c0_78] : memref<192x64xf32, #tpu.memory_space<vmem>>, vector<64x64xf32>
    %cst_79 = arith.constant dense<0.000000e+00> : vector<5x64xf32>
    %81 = tpu.matmul %79, %80, %cst_79 {dimension_numbers = #tpu.dot_dimension_numbers<[1], [0], [0], [1], [0, 0, 1, 1], [], []>} : vector<5x64xf32>, vector<64x64xf32>, vector<5x64xf32> -> vector<5x64xf32>
    %82 = arith.addf %78, %81 : vector<5x64xf32>
    %c2_80 = arith.constant 2 : index
    %c0_81 = arith.constant 0 : index
    %83 = vector.load %arg31[%c2_80, %c0_81] : memref<7x64xf32, #tpu.memory_space<vmem>>, vector<5x64xf32>
    %c128 = arith.constant 128 : index
    %c0_82 = arith.constant 0 : index
    %84 = vector.load %arg8[%c128, %c0_82] : memref<192x64xf32, #tpu.memory_space<vmem>>, vector<64x64xf32>
    %cst_83 = arith.constant dense<0.000000e+00> : vector<5x64xf32>
    %85 = tpu.matmul %83, %84, %cst_83 {dimension_numbers = #tpu.dot_dimension_numbers<[1], [0], [0], [1], [0, 0, 1, 1], [], []>} : vector<5x64xf32>, vector<64x64xf32>, vector<5x64xf32> -> vector<5x64xf32>
    %86 = arith.addf %82, %85 : vector<5x64xf32>
    %c0_84 = arith.constant 0 : index
    %c0_85 = arith.constant 0 : index
    %87 = vector.load %arg9[%c0_84, %c0_85] : memref<2x64xf32, #tpu.memory_space<vmem>>, vector<1x64xf32>
    %88 = vector.broadcast %87 : vector<1x64xf32> to vector<5x64xf32>
    %89 = arith.mulf %86, %88 : vector<5x64xf32>
    %c1_86 = arith.constant 1 : index
    %c0_87 = arith.constant 0 : index
    %90 = vector.load %arg9[%c1_86, %c0_87] : memref<2x64xf32, #tpu.memory_space<vmem>>, vector<1x64xf32>
    %91 = vector.broadcast %90 : vector<1x64xf32> to vector<5x64xf32>
    %92 = arith.addf %89, %91 : vector<5x64xf32>
    %cst_88 = arith.constant 0.000000e+00 : f32
    %93 = vector.broadcast %cst_88 : f32 to vector<5x64xf32>
    %94 = arith.maximumf %92, %93 : vector<5x64xf32>
    %c0_89 = arith.constant 0 : index
    %c0_90 = arith.constant 0 : index
    %95 = vector.load %arg32[%c0_89, %c0_90] : memref<5x64xf32, #tpu.memory_space<vmem>>, vector<5x64xf32>
    tpu.vector_store %arg32[%c0_89, %c0_90], %94 {strides = array<i32>} : memref<5x64xf32, #tpu.memory_space<vmem>>, vector<5x64xf32>,
    %c0_91 = arith.constant 0 : index
    %c0_92 = arith.constant 0 : index
    %96 = tpu.strided_load %arg32[%c0_91, %c0_92] {strides = array<i32: 4, 1>} : memref<5x64xf32, #tpu.memory_space<vmem>>, vector<1x64xf32>
    %c1_93 = arith.constant 1 : index
    %c0_94 = arith.constant 0 : index
    %97 = tpu.strided_load %arg32[%c1_93, %c0_94] {strides = array<i32: 4, 1>} : memref<5x64xf32, #tpu.memory_space<vmem>>, vector<1x64xf32>
    %98 = arith.maximumf %96, %97 : vector<1x64xf32>
    %c2_95 = arith.constant 2 : index
    %c0_96 = arith.constant 0 : index
    %99 = tpu.strided_load %arg32[%c2_95, %c0_96] {strides = array<i32: 4, 1>} : memref<5x64xf32, #tpu.memory_space<vmem>>, vector<1x64xf32>
    %100 = arith.maximumf %98, %99 : vector<1x64xf32>
    %c3_97 = arith.constant 3 : index
    %c0_98 = arith.constant 0 : index
    %101 = tpu.strided_load %arg32[%c3_97, %c0_98] {strides = array<i32: 4, 1>} : memref<5x64xf32, #tpu.memory_space<vmem>>, vector<1x64xf32>
    %102 = arith.maximumf %100, %101 : vector<1x64xf32>
    %cst_99 = arith.constant dense<0.000000e+00> : vector<64xf32>
    %103 = vector.multi_reduction <add>, %102, %cst_99 [0] : vector<1x64xf32> to vector<64xf32>
    %104 = vector.shape_cast %103 : vector<64xf32> to vector<1x64xf32>
    %cst_100 = arith.constant 1.000000e+00 : f32
    %105 = vector.broadcast %cst_100 : f32 to vector<1x64xf32>
    %106 = arith.divf %104, %105 : vector<1x64xf32>
    %107 = tpu.iota {dimensions = array<i32: 0>} : vector<8x8xi32>
    %108 = tpu.iota {dimensions = array<i32: 1>} : vector<8x8xi32>
    %109 = arith.cmpi sle, %108, %107 : vector<8x8xi32>
    %c0_101 = arith.constant 0 : index
    %c0_102 = arith.constant 0 : index
    %c0_103 = arith.constant 0 : index
    %110 = vector.load %arg10[%c0_101, %c0_102, %c0_103] : memref<1x8x128xf32, #tpu.memory_space<vmem>>, vector<1x8x128xf32>
    %111 = vector.shape_cast %110 : vector<1x8x128xf32> to vector<8x128xf32>
    %c0_104 = arith.constant 0 : index
    %c0_105 = arith.constant 0 : index
    %c0_106 = arith.constant 0 : index
    %112 = vector.load %arg11[%c0_104, %c0_105, %c0_106] : memref<2x128x384xf32, #tpu.memory_space<vmem>>, vector<1x128x384xf32>
    %113 = vector.shape_cast %112 : vector<1x128x384xf32> to vector<128x384xf32>
    %cst_107 = arith.constant dense<0.000000e+00> : vector<8x384xf32>
    %114 = tpu.matmul %111, %113, %cst_107 {dimension_numbers = #tpu.dot_dimension_numbers<[1], [0], [0], [1], [0, 0, 1, 1], [], []>} : vector<8x128xf32>, vector<128x384xf32>, vector<8x384xf32> -> vector<8x384xf32>
    %c0_108 = arith.constant 0 : index
    %c0_109 = arith.constant 0 : index
    %c0_110 = arith.constant 0 : index
    %115 = vector.load %arg12[%c0_108, %c0_109, %c0_110] : memref<2x1x384xf32, #tpu.memory_space<vmem>>, vector<1x1x384xf32>
    %116 = vector.shape_cast %115 : vector<1x1x384xf32> to vector<1x384xf32>
    %117 = vector.broadcast %116 : vector<1x384xf32> to vector<8x384xf32>
    %118 = arith.addf %114, %117 : vector<8x384xf32>
    %119 = vector.extract_strided_slice %118 {offsets = [0, 0], sizes = [8, 128], strides = [1, 1]} : vector<8x384xf32> to vector<8x128xf32>
    %120 = vector.extract_strided_slice %118 {offsets = [0, 128], sizes = [8, 128], strides = [1, 1]} : vector<8x384xf32> to vector<8x128xf32>
    %121 = vector.extract_strided_slice %118 {offsets = [0, 256], sizes = [8, 128], strides = [1, 1]} : vector<8x384xf32> to vector<8x128xf32>
    %122 = tpu.transpose %120, [1, 0] : vector<8x128xf32> -> vector<128x8xf32>
    %cst_111 = arith.constant dense<0.000000e+00> : vector<8x8xf32>
    %123 = tpu.matmul %119, %122, %cst_111 {dimension_numbers = #tpu.dot_dimension_numbers<[1], [0], [0], [1], [0, 0, 1, 1], [], []>} : vector<8x128xf32>, vector<128x8xf32>, vector<8x8xf32> -> vector<8x8xf32>
    %cst_112 = arith.constant 1.000000e-01 : f32
    %124 = vector.broadcast %cst_112 : f32 to vector<8x8xf32>
    %125 = arith.mulf %123, %124 : vector<8x8xf32>
    %cst_113 = arith.constant -1.000000e+30 : f32
    %126 = vector.broadcast %cst_113 : f32 to vector<8x8xf32>
    %127 = arith.select %109, %125, %126 : vector<8x8xi1>, vector<8x8xf32>
    %cst_114 = arith.constant dense<0xFF800000> : vector<8xf32>
    %128 = vector.multi_reduction <maximumf>, %127, %cst_114 [1] : vector<8x8xf32> to vector<8xf32>
    %129 = vector.shape_cast %128 : vector<8xf32> to vector<8x1xf32>
    %130 = vector.broadcast %129 : vector<8x1xf32> to vector<8x8xf32>
    %131 = arith.subf %127, %130 : vector<8x8xf32>
    %132 = math.exp %131 : vector<8x8xf32>
    %cst_115 = arith.constant dense<0.000000e+00> : vector<8xf32>
    %133 = vector.multi_reduction <add>, %132, %cst_115 [1] : vector<8x8xf32> to vector<8xf32>
    %134 = vector.shape_cast %133 : vector<8xf32> to vector<8x1xf32>
    %135 = tpu.reciprocal %134 {approx = true} : vector<8x1xf32> -> vector<8x1xf32>
    %136 = vector.broadcast %135 : vector<8x1xf32> to vector<8x8xf32>
    %137 = arith.mulf %132, %136 : vector<8x8xf32>
    %cst_116 = arith.constant dense<0.000000e+00> : vector<8x128xf32>
    %138 = tpu.matmul %137, %121, %cst_116 {dimension_numbers = #tpu.dot_dimension_numbers<[1], [0], [0], [1], [0, 0, 1, 1], [], []>} : vector<8x8xf32>, vector<8x128xf32>, vector<8x128xf32> -> vector<8x128xf32>
    %c0_117 = arith.constant 0 : index
    %c0_118 = arith.constant 0 : index
    %c0_119 = arith.constant 0 : index
    %139 = vector.load %arg13[%c0_117, %c0_118, %c0_119] : memref<2x128x128xf32, #tpu.memory_space<vmem>>, vector<1x128x128xf32>
    %140 = vector.shape_cast %139 : vector<1x128x128xf32> to vector<128x128xf32>
    %cst_120 = arith.constant dense<0.000000e+00> : vector<8x128xf32>
    %141 = tpu.matmul %138, %140, %cst_120 {dimension_numbers = #tpu.dot_dimension_numbers<[1], [0], [0], [1], [0, 0, 1, 1], [], []>} : vector<8x128xf32>, vector<128x128xf32>, vector<8x128xf32> -> vector<8x128xf32>
    %c0_121 = arith.constant 0 : index
    %c0_122 = arith.constant 0 : index
    %c0_123 = arith.constant 0 : index
    %142 = vector.load %arg14[%c0_121, %c0_122, %c0_123] : memref<2x1x128xf32, #tpu.memory_space<vmem>>, vector<1x1x128xf32>
    %143 = vector.shape_cast %142 : vector<1x1x128xf32> to vector<1x128xf32>
    %144 = vector.broadcast %143 : vector<1x128xf32> to vector<8x128xf32>
    %145 = arith.addf %141, %144 : vector<8x128xf32>
    %146 = arith.addf %111, %145 : vector<8x128xf32>
    %c0_124 = arith.constant 0 : index
    %c0_125 = arith.constant 0 : index
    %c0_126 = arith.constant 0 : index
    %147 = vector.load %arg19[%c0_124, %c0_125, %c0_126] : memref<2x4x128xf32, #tpu.memory_space<vmem>>, vector<1x1x128xf32>
    %148 = vector.shape_cast %147 : vector<1x1x128xf32> to vector<1x128xf32>
    %c0_127 = arith.constant 0 : index
    %c1_128 = arith.constant 1 : index
    %c0_129 = arith.constant 0 : index
    %149 = vector.load %arg19[%c0_127, %c1_128, %c0_129] : memref<2x4x128xf32, #tpu.memory_space<vmem>>, vector<1x1x128xf32>
    %150 = vector.shape_cast %149 : vector<1x1x128xf32> to vector<1x128xf32>
    %cst_130 = arith.constant dense<0.000000e+00> : vector<8xf32>
    %151 = vector.multi_reduction <add>, %146, %cst_130 [1] : vector<8x128xf32> to vector<8xf32>
    %152 = vector.shape_cast %151 : vector<8xf32> to vector<8x1xf32>
    %cst_131 = arith.constant 0.00999999977 : f32
    %153 = vector.broadcast %cst_131 : f32 to vector<8x1xf32>
    %154 = arith.mulf %152, %153 : vector<8x1xf32>
    %155 = arith.mulf %146, %146 : vector<8x128xf32>
    %cst_132 = arith.constant dense<0.000000e+00> : vector<8xf32>
    %156 = vector.multi_reduction <add>, %155, %cst_132 [1] : vector<8x128xf32> to vector<8xf32>
    %157 = vector.shape_cast %156 : vector<8xf32> to vector<8x1xf32>
    %cst_133 = arith.constant 0.00999999977 : f32
    %158 = vector.broadcast %cst_133 : f32 to vector<8x1xf32>
    %159 = arith.mulf %157, %158 : vector<8x1xf32>
    %160 = arith.mulf %154, %154 : vector<8x1xf32>
    %161 = arith.subf %159, %160 : vector<8x1xf32>
    %162 = vector.broadcast %154 : vector<8x1xf32> to vector<8x128xf32>
    %163 = arith.subf %146, %162 : vector<8x128xf32>
    %cst_134 = arith.constant 9.99999974E-6 : f32
    %164 = vector.broadcast %cst_134 : f32 to vector<8x1xf32>
    %165 = arith.addf %161, %164 : vector<8x1xf32>
    %166 = math.rsqrt %165 : vector<8x1xf32>
    %167 = vector.broadcast %166 : vector<8x1xf32> to vector<8x128xf32>
    %168 = arith.mulf %163, %167 : vector<8x128xf32>
    %169 = vector.broadcast %148 : vector<1x128xf32> to vector<8x128xf32>
    %170 = arith.mulf %168, %169 : vector<8x128xf32>
    %171 = vector.broadcast %150 : vector<1x128xf32> to vector<8x128xf32>
    %172 = arith.addf %170, %171 : vector<8x128xf32>
    %c0_135 = arith.constant 0 : index
    %c0_136 = arith.constant 0 : index
    %c0_137 = arith.constant 0 : index
    %173 = vector.load %arg15[%c0_135, %c0_136, %c0_137] : memref<2x128x128xf32, #tpu.memory_space<vmem>>, vector<1x128x128xf32>
    %174 = vector.shape_cast %173 : vector<1x128x128xf32> to vector<128x128xf32>
    %cst_138 = arith.constant dense<0.000000e+00> : vector<8x128xf32>
    %175 = tpu.matmul %172, %174, %cst_138 {dimension_numbers = #tpu.dot_dimension_numbers<[1], [0], [0], [1], [0, 0, 1, 1], [], []>} : vector<8x128xf32>, vector<128x128xf32>, vector<8x128xf32> -> vector<8x128xf32>
    %c0_139 = arith.constant 0 : index
    %c0_140 = arith.constant 0 : index
    %c0_141 = arith.constant 0 : index
    %176 = vector.load %arg16[%c0_139, %c0_140, %c0_141] : memref<2x1x128xf32, #tpu.memory_space<vmem>>, vector<1x1x128xf32>
    %177 = vector.shape_cast %176 : vector<1x1x128xf32> to vector<1x128xf32>
    %178 = vector.broadcast %177 : vector<1x128xf32> to vector<8x128xf32>
    %179 = arith.addf %175, %178 : vector<8x128xf32>
    %cst_142 = arith.constant 0.000000e+00 : f32
    %180 = vector.broadcast %cst_142 : f32 to vector<8x128xf32>
    %181 = arith.maximumf %179, %180 : vector<8x128xf32>
    %c0_143 = arith.constant 0 : index
    %c0_144 = arith.constant 0 : index
    %c0_145 = arith.constant 0 : index
    %182 = vector.load %arg17[%c0_143, %c0_144, %c0_145] : memref<2x128x128xf32, #tpu.memory_space<vmem>>, vector<1x128x128xf32>
    %183 = vector.shape_cast %182 : vector<1x128x128xf32> to vector<128x128xf32>
    %cst_146 = arith.constant dense<0.000000e+00> : vector<8x128xf32>
    %184 = tpu.matmul %181, %183, %cst_146 {dimension_numbers = #tpu.dot_dimension_numbers<[1], [0], [0], [1], [0, 0, 1, 1], [], []>} : vector<8x128xf32>, vector<128x128xf32>, vector<8x128xf32> -> vector<8x128xf32>
    %c0_147 = arith.constant 0 : index
    %c0_148 = arith.constant 0 : index
    %c0_149 = arith.constant 0 : index
    %185 = vector.load %arg18[%c0_147, %c0_148, %c0_149] : memref<2x1x128xf32, #tpu.memory_space<vmem>>, vector<1x1x128xf32>
    %186 = vector.shape_cast %185 : vector<1x1x128xf32> to vector<1x128xf32>
    %187 = vector.broadcast %186 : vector<1x128xf32> to vector<8x128xf32>
    %188 = arith.addf %184, %187 : vector<8x128xf32>
    %189 = arith.addf %172, %188 : vector<8x128xf32>
    %c0_150 = arith.constant 0 : index
    %c2_151 = arith.constant 2 : index
    %c0_152 = arith.constant 0 : index
    %190 = vector.load %arg19[%c0_150, %c2_151, %c0_152] : memref<2x4x128xf32, #tpu.memory_space<vmem>>, vector<1x1x128xf32>
    %191 = vector.shape_cast %190 : vector<1x1x128xf32> to vector<1x128xf32>
    %c0_153 = arith.constant 0 : index
    %c3_154 = arith.constant 3 : index
    %c0_155 = arith.constant 0 : index
    %192 = vector.load %arg19[%c0_153, %c3_154, %c0_155] : memref<2x4x128xf32, #tpu.memory_space<vmem>>, vector<1x1x128xf32>
    %193 = vector.shape_cast %192 : vector<1x1x128xf32> to vector<1x128xf32>
    %cst_156 = arith.constant dense<0.000000e+00> : vector<8xf32>
    %194 = vector.multi_reduction <add>, %189, %cst_156 [1] : vector<8x128xf32> to vector<8xf32>
    %195 = vector.shape_cast %194 : vector<8xf32> to vector<8x1xf32>
    %cst_157 = arith.constant 0.00999999977 : f32
    %196 = vector.broadcast %cst_157 : f32 to vector<8x1xf32>
    %197 = arith.mulf %195, %196 : vector<8x1xf32>
    %198 = arith.mulf %189, %189 : vector<8x128xf32>
    %cst_158 = arith.constant dense<0.000000e+00> : vector<8xf32>
    %199 = vector.multi_reduction <add>, %198, %cst_158 [1] : vector<8x128xf32> to vector<8xf32>
    %200 = vector.shape_cast %199 : vector<8xf32> to vector<8x1xf32>
    %cst_159 = arith.constant 0.00999999977 : f32
    %201 = vector.broadcast %cst_159 : f32 to vector<8x1xf32>
    %202 = arith.mulf %200, %201 : vector<8x1xf32>
    %203 = arith.mulf %197, %197 : vector<8x1xf32>
    %204 = arith.subf %202, %203 : vector<8x1xf32>
    %205 = vector.broadcast %197 : vector<8x1xf32> to vector<8x128xf32>
    %206 = arith.subf %189, %205 : vector<8x128xf32>
    %cst_160 = arith.constant 9.99999974E-6 : f32
    %207 = vector.broadcast %cst_160 : f32 to vector<8x1xf32>
    %208 = arith.addf %204, %207 : vector<8x1xf32>
    %209 = math.rsqrt %208 : vector<8x1xf32>
    %210 = vector.broadcast %209 : vector<8x1xf32> to vector<8x128xf32>
    %211 = arith.mulf %206, %210 : vector<8x128xf32>
    %212 = vector.broadcast %191 : vector<1x128xf32> to vector<8x128xf32>
    %213 = arith.mulf %211, %212 : vector<8x128xf32>
    %214 = vector.broadcast %193 : vector<1x128xf32> to vector<8x128xf32>
    %215 = arith.addf %213, %214 : vector<8x128xf32>
    %c1_161 = arith.constant 1 : index
    %c0_162 = arith.constant 0 : index
    %c0_163 = arith.constant 0 : index
    %216 = vector.load %arg11[%c1_161, %c0_162, %c0_163] : memref<2x128x384xf32, #tpu.memory_space<vmem>>, vector<1x128x384xf32>
    %217 = vector.shape_cast %216 : vector<1x128x384xf32> to vector<128x384xf32>
    %cst_164 = arith.constant dense<0.000000e+00> : vector<8x384xf32>
    %218 = tpu.matmul %215, %217, %cst_164 {dimension_numbers = #tpu.dot_dimension_numbers<[1], [0], [0], [1], [0, 0, 1, 1], [], []>} : vector<8x128xf32>, vector<128x384xf32>, vector<8x384xf32> -> vector<8x384xf32>
    %c1_165 = arith.constant 1 : index
    %c0_166 = arith.constant 0 : index
    %c0_167 = arith.constant 0 : index
    %219 = vector.load %arg12[%c1_165, %c0_166, %c0_167] : memref<2x1x384xf32, #tpu.memory_space<vmem>>, vector<1x1x384xf32>
    %220 = vector.shape_cast %219 : vector<1x1x384xf32> to vector<1x384xf32>
    %221 = vector.broadcast %220 : vector<1x384xf32> to vector<8x384xf32>
    %222 = arith.addf %218, %221 : vector<8x384xf32>
    %223 = vector.extract_strided_slice %222 {offsets = [0, 0], sizes = [8, 128], strides = [1, 1]} : vector<8x384xf32> to vector<8x128xf32>
    %224 = vector.extract_strided_slice %222 {offsets = [0, 128], sizes = [8, 128], strides = [1, 1]} : vector<8x384xf32> to vector<8x128xf32>
    %225 = vector.extract_strided_slice %222 {offsets = [0, 256], sizes = [8, 128], strides = [1, 1]} : vector<8x384xf32> to vector<8x128xf32>
    %226 = tpu.transpose %224, [1, 0] : vector<8x128xf32> -> vector<128x8xf32>
    %cst_168 = arith.constant dense<0.000000e+00> : vector<8x8xf32>
    %227 = tpu.matmul %223, %226, %cst_168 {dimension_numbers = #tpu.dot_dimension_numbers<[1], [0], [0], [1], [0, 0, 1, 1], [], []>} : vector<8x128xf32>, vector<128x8xf32>, vector<8x8xf32> -> vector<8x8xf32>
    %cst_169 = arith.constant 1.000000e-01 : f32
    %228 = vector.broadcast %cst_169 : f32 to vector<8x8xf32>
    %229 = arith.mulf %227, %228 : vector<8x8xf32>
    %cst_170 = arith.constant -1.000000e+30 : f32
    %230 = vector.broadcast %cst_170 : f32 to vector<8x8xf32>
    %231 = arith.select %109, %229, %230 : vector<8x8xi1>, vector<8x8xf32>
    %cst_171 = arith.constant dense<0xFF800000> : vector<8xf32>
    %232 = vector.multi_reduction <maximumf>, %231, %cst_171 [1] : vector<8x8xf32> to vector<8xf32>
    %233 = vector.shape_cast %232 : vector<8xf32> to vector<8x1xf32>
    %234 = vector.broadcast %233 : vector<8x1xf32> to vector<8x8xf32>
    %235 = arith.subf %231, %234 : vector<8x8xf32>
    %236 = math.exp %235 : vector<8x8xf32>
    %cst_172 = arith.constant dense<0.000000e+00> : vector<8xf32>
    %237 = vector.multi_reduction <add>, %236, %cst_172 [1] : vector<8x8xf32> to vector<8xf32>
    %238 = vector.shape_cast %237 : vector<8xf32> to vector<8x1xf32>
    %239 = tpu.reciprocal %238 {approx = true} : vector<8x1xf32> -> vector<8x1xf32>
    %240 = vector.broadcast %239 : vector<8x1xf32> to vector<8x8xf32>
    %241 = arith.mulf %236, %240 : vector<8x8xf32>
    %cst_173 = arith.constant dense<0.000000e+00> : vector<8x128xf32>
    %242 = tpu.matmul %241, %225, %cst_173 {dimension_numbers = #tpu.dot_dimension_numbers<[1], [0], [0], [1], [0, 0, 1, 1], [], []>} : vector<8x8xf32>, vector<8x128xf32>, vector<8x128xf32> -> vector<8x128xf32>
    %c1_174 = arith.constant 1 : index
    %c0_175 = arith.constant 0 : index
    %c0_176 = arith.constant 0 : index
    %243 = vector.load %arg13[%c1_174, %c0_175, %c0_176] : memref<2x128x128xf32, #tpu.memory_space<vmem>>, vector<1x128x128xf32>
    %244 = vector.shape_cast %243 : vector<1x128x128xf32> to vector<128x128xf32>
    %cst_177 = arith.constant dense<0.000000e+00> : vector<8x128xf32>
    %245 = tpu.matmul %242, %244, %cst_177 {dimension_numbers = #tpu.dot_dimension_numbers<[1], [0], [0], [1], [0, 0, 1, 1], [], []>} : vector<8x128xf32>, vector<128x128xf32>, vector<8x128xf32> -> vector<8x128xf32>
    %c1_178 = arith.constant 1 : index
    %c0_179 = arith.constant 0 : index
    %c0_180 = arith.constant 0 : index
    %246 = vector.load %arg14[%c1_178, %c0_179, %c0_180] : memref<2x1x128xf32, #tpu.memory_space<vmem>>, vector<1x1x128xf32>
    %247 = vector.shape_cast %246 : vector<1x1x128xf32> to vector<1x128xf32>
    %248 = vector.broadcast %247 : vector<1x128xf32> to vector<8x128xf32>
    %249 = arith.addf %245, %248 : vector<8x128xf32>
    %250 = arith.addf %215, %249 : vector<8x128xf32>
    %c1_181 = arith.constant 1 : index
    %c0_182 = arith.constant 0 : index
    %c0_183 = arith.constant 0 : index
    %251 = vector.load %arg19[%c1_181, %c0_182, %c0_183] : memref<2x4x128xf32, #tpu.memory_space<vmem>>, vector<1x1x128xf32>
    %252 = vector.shape_cast %251 : vector<1x1x128xf32> to vector<1x128xf32>
    %c1_184 = arith.constant 1 : index
    %c1_185 = arith.constant 1 : index
    %c0_186 = arith.constant 0 : index
    %253 = vector.load %arg19[%c1_184, %c1_185, %c0_186] : memref<2x4x128xf32, #tpu.memory_space<vmem>>, vector<1x1x128xf32>
    %254 = vector.shape_cast %253 : vector<1x1x128xf32> to vector<1x128xf32>
    %cst_187 = arith.constant dense<0.000000e+00> : vector<8xf32>
    %255 = vector.multi_reduction <add>, %250, %cst_187 [1] : vector<8x128xf32> to vector<8xf32>
    %256 = vector.shape_cast %255 : vector<8xf32> to vector<8x1xf32>
    %cst_188 = arith.constant 0.00999999977 : f32
    %257 = vector.broadcast %cst_188 : f32 to vector<8x1xf32>
    %258 = arith.mulf %256, %257 : vector<8x1xf32>
    %259 = arith.mulf %250, %250 : vector<8x128xf32>
    %cst_189 = arith.constant dense<0.000000e+00> : vector<8xf32>
    %260 = vector.multi_reduction <add>, %259, %cst_189 [1] : vector<8x128xf32> to vector<8xf32>
    %261 = vector.shape_cast %260 : vector<8xf32> to vector<8x1xf32>
    %cst_190 = arith.constant 0.00999999977 : f32
    %262 = vector.broadcast %cst_190 : f32 to vector<8x1xf32>
    %263 = arith.mulf %261, %262 : vector<8x1xf32>
    %264 = arith.mulf %258, %258 : vector<8x1xf32>
    %265 = arith.subf %263, %264 : vector<8x1xf32>
    %266 = vector.broadcast %258 : vector<8x1xf32> to vector<8x128xf32>
    %267 = arith.subf %250, %266 : vector<8x128xf32>
    %cst_191 = arith.constant 9.99999974E-6 : f32
    %268 = vector.broadcast %cst_191 : f32 to vector<8x1xf32>
    %269 = arith.addf %265, %268 : vector<8x1xf32>
    %270 = math.rsqrt %269 : vector<8x1xf32>
    %271 = vector.broadcast %270 : vector<8x1xf32> to vector<8x128xf32>
    %272 = arith.mulf %267, %271 : vector<8x128xf32>
    %273 = vector.broadcast %252 : vector<1x128xf32> to vector<8x128xf32>
    %274 = arith.mulf %272, %273 : vector<8x128xf32>
    %275 = vector.broadcast %254 : vector<1x128xf32> to vector<8x128xf32>
    %276 = arith.addf %274, %275 : vector<8x128xf32>
    %c1_192 = arith.constant 1 : index
    %c0_193 = arith.constant 0 : index
    %c0_194 = arith.constant 0 : index
    %277 = vector.load %arg15[%c1_192, %c0_193, %c0_194] : memref<2x128x128xf32, #tpu.memory_space<vmem>>, vector<1x128x128xf32>
    %278 = vector.shape_cast %277 : vector<1x128x128xf32> to vector<128x128xf32>
    %cst_195 = arith.constant dense<0.000000e+00> : vector<8x128xf32>
    %279 = tpu.matmul %276, %278, %cst_195 {dimension_numbers = #tpu.dot_dimension_numbers<[1], [0], [0], [1], [0, 0, 1, 1], [], []>} : vector<8x128xf32>, vector<128x128xf32>, vector<8x128xf32> -> vector<8x128xf32>
    %c1_196 = arith.constant 1 : index
    %c0_197 = arith.constant 0 : index
    %c0_198 = arith.constant 0 : index
    %280 = vector.load %arg16[%c1_196, %c0_197, %c0_198] : memref<2x1x128xf32, #tpu.memory_space<vmem>>, vector<1x1x128xf32>
    %281 = vector.shape_cast %280 : vector<1x1x128xf32> to vector<1x128xf32>
    %282 = vector.broadcast %281 : vector<1x128xf32> to vector<8x128xf32>
    %283 = arith.addf %279, %282 : vector<8x128xf32>
    %cst_199 = arith.constant 0.000000e+00 : f32
    %284 = vector.broadcast %cst_199 : f32 to vector<8x128xf32>
    %285 = arith.maximumf %283, %284 : vector<8x128xf32>
    %c1_200 = arith.constant 1 : index
    %c0_201 = arith.constant 0 : index
    %c0_202 = arith.constant 0 : index
    %286 = vector.load %arg17[%c1_200, %c0_201, %c0_202] : memref<2x128x128xf32, #tpu.memory_space<vmem>>, vector<1x128x128xf32>
    %287 = vector.shape_cast %286 : vector<1x128x128xf32> to vector<128x128xf32>
    %cst_203 = arith.constant dense<0.000000e+00> : vector<8x128xf32>
    %288 = tpu.matmul %285, %287, %cst_203 {dimension_numbers = #tpu.dot_dimension_numbers<[1], [0], [0], [1], [0, 0, 1, 1], [], []>} : vector<8x128xf32>, vector<128x128xf32>, vector<8x128xf32> -> vector<8x128xf32>
    %c1_204 = arith.constant 1 : index
    %c0_205 = arith.constant 0 : index
    %c0_206 = arith.constant 0 : index
    %289 = vector.load %arg18[%c1_204, %c0_205, %c0_206] : memref<2x1x128xf32, #tpu.memory_space<vmem>>, vector<1x1x128xf32>
    %290 = vector.shape_cast %289 : vector<1x1x128xf32> to vector<1x128xf32>
    %291 = vector.broadcast %290 : vector<1x128xf32> to vector<8x128xf32>
    %292 = arith.addf %288, %291 : vector<8x128xf32>
    %293 = arith.addf %276, %292 : vector<8x128xf32>
    %c1_207 = arith.constant 1 : index
    %c2_208 = arith.constant 2 : index
    %c0_209 = arith.constant 0 : index
    %294 = vector.load %arg19[%c1_207, %c2_208, %c0_209] : memref<2x4x128xf32, #tpu.memory_space<vmem>>, vector<1x1x128xf32>
    %295 = vector.shape_cast %294 : vector<1x1x128xf32> to vector<1x128xf32>
    %c1_210 = arith.constant 1 : index
    %c3_211 = arith.constant 3 : index
    %c0_212 = arith.constant 0 : index
    %296 = vector.load %arg19[%c1_210, %c3_211, %c0_212] : memref<2x4x128xf32, #tpu.memory_space<vmem>>, vector<1x1x128xf32>
    %297 = vector.shape_cast %296 : vector<1x1x128xf32> to vector<1x128xf32>
    %cst_213 = arith.constant dense<0.000000e+00> : vector<8xf32>
    %298 = vector.multi_reduction <add>, %293, %cst_213 [1] : vector<8x128xf32> to vector<8xf32>
    %299 = vector.shape_cast %298 : vector<8xf32> to vector<8x1xf32>
    %cst_214 = arith.constant 0.00999999977 : f32
    %300 = vector.broadcast %cst_214 : f32 to vector<8x1xf32>
    %301 = arith.mulf %299, %300 : vector<8x1xf32>
    %302 = arith.mulf %293, %293 : vector<8x128xf32>
    %cst_215 = arith.constant dense<0.000000e+00> : vector<8xf32>
    %303 = vector.multi_reduction <add>, %302, %cst_215 [1] : vector<8x128xf32> to vector<8xf32>
    %304 = vector.shape_cast %303 : vector<8xf32> to vector<8x1xf32>
    %cst_216 = arith.constant 0.00999999977 : f32
    %305 = vector.broadcast %cst_216 : f32 to vector<8x1xf32>
    %306 = arith.mulf %304, %305 : vector<8x1xf32>
    %307 = arith.mulf %301, %301 : vector<8x1xf32>
    %308 = arith.subf %306, %307 : vector<8x1xf32>
    %309 = vector.broadcast %301 : vector<8x1xf32> to vector<8x128xf32>
    %310 = arith.subf %293, %309 : vector<8x128xf32>
    %cst_217 = arith.constant 9.99999974E-6 : f32
    %311 = vector.broadcast %cst_217 : f32 to vector<8x1xf32>
    %312 = arith.addf %308, %311 : vector<8x1xf32>
    %313 = math.rsqrt %312 : vector<8x1xf32>
    %314 = vector.broadcast %313 : vector<8x1xf32> to vector<8x128xf32>
    %315 = arith.mulf %310, %314 : vector<8x128xf32>
    %316 = vector.broadcast %295 : vector<1x128xf32> to vector<8x128xf32>
    %317 = arith.mulf %315, %316 : vector<8x128xf32>
    %318 = vector.broadcast %297 : vector<1x128xf32> to vector<8x128xf32>
    %319 = arith.addf %317, %318 : vector<8x128xf32>
    %cst_218 = arith.constant dense<0.000000e+00> : vector<128xf32>
    %320 = vector.multi_reduction <add>, %319, %cst_218 [0] : vector<8x128xf32> to vector<128xf32>
    %321 = vector.shape_cast %320 : vector<128xf32> to vector<1x128xf32>
    %cst_219 = arith.constant 8.000000e+00 : f32
    %322 = vector.broadcast %cst_219 : f32 to vector<1x128xf32>
    %323 = arith.divf %321, %322 : vector<1x128xf32>
    %cst_220 = arith.constant dense<0xFF800000> : vector<128xf32>
    %324 = vector.multi_reduction <maximumf>, %319, %cst_220 [0] : vector<8x128xf32> to vector<128xf32>
    %325 = vector.shape_cast %324 : vector<128xf32> to vector<1x128xf32>
    %c0_221 = arith.constant 0 : index
    %c0_222 = arith.constant 0 : index
    %326 = vector.load %arg20[%c0_221, %c0_222] : memref<128x128xf32, #tpu.memory_space<vmem>>, vector<128x128xf32>
    %cst_223 = arith.constant dense<0.000000e+00> : vector<1x128xf32>
    %327 = tpu.matmul %323, %326, %cst_223 {dimension_numbers = #tpu.dot_dimension_numbers<[1], [0], [0], [1], [0, 0, 1, 1], [], []>} : vector<1x128xf32>, vector<128x128xf32>, vector<1x128xf32> -> vector<1x128xf32>
    %c0_224 = arith.constant 0 : index
    %c0_225 = arith.constant 0 : index
    %328 = vector.load %arg21[%c0_224, %c0_225] : memref<128x128xf32, #tpu.memory_space<vmem>>, vector<128x128xf32>
    %cst_226 = arith.constant dense<0.000000e+00> : vector<1x128xf32>
    %329 = tpu.matmul %325, %328, %cst_226 {dimension_numbers = #tpu.dot_dimension_numbers<[1], [0], [0], [1], [0, 0, 1, 1], [], []>} : vector<1x128xf32>, vector<128x128xf32>, vector<1x128xf32> -> vector<1x128xf32>
    %330 = arith.addf %327, %329 : vector<1x128xf32>
    %c0_227 = arith.constant 0 : index
    %c0_228 = arith.constant 0 : index
    %331 = vector.load %arg22[%c0_227, %c0_228] : memref<64x128xf32, #tpu.memory_space<vmem>>, vector<64x128xf32>
    %cst_229 = arith.constant dense<0.000000e+00> : vector<1x128xf32>
    %332 = tpu.matmul %106, %331, %cst_229 {dimension_numbers = #tpu.dot_dimension_numbers<[1], [0], [0], [1], [0, 0, 1, 1], [], []>} : vector<1x64xf32>, vector<64x128xf32>, vector<1x128xf32> -> vector<1x128xf32>
    %333 = arith.addf %330, %332 : vector<1x128xf32>
    %c0_230 = arith.constant 0 : index
    %c0_231 = arith.constant 0 : index
    %334 = vector.load %arg23[%c0_230, %c0_231] : memref<1x128xf32, #tpu.memory_space<vmem>>, vector<1x128xf32>
    %335 = arith.addf %333, %334 : vector<1x128xf32>
    %cst_232 = arith.constant 0.000000e+00 : f32
    %336 = vector.broadcast %cst_232 : f32 to vector<1x128xf32>
    %337 = arith.maximumf %335, %336 : vector<1x128xf32>
    %c0_233 = arith.constant 0 : index
    %c0_234 = arith.constant 0 : index
    %338 = vector.load %arg24[%c0_233, %c0_234] : memref<128x7xf32, #tpu.memory_space<vmem>>, vector<128x7xf32>
    %cst_235 = arith.constant dense<0.000000e+00> : vector<1x7xf32>
    %339 = tpu.matmul %337, %338, %cst_235 {dimension_numbers = #tpu.dot_dimension_numbers<[1], [0], [0], [1], [0, 0, 1, 1], [], []>} : vector<1x128xf32>, vector<128x7xf32>, vector<1x7xf32> -> vector<1x7xf32>
    %c0_236 = arith.constant 0 : index
    %c0_237 = arith.constant 0 : index
    %340 = vector.load %arg25[%c0_236, %c0_237] : memref<1x7xf32, #tpu.memory_space<vmem>>, vector<1x7xf32>
    %341 = arith.addf %339, %340 : vector<1x7xf32>
    %c0_238 = arith.constant 0 : index
    %c0_239 = arith.constant 0 : index
    %c0_240 = arith.constant 0 : index
    %342 = vector.load %arg26[%c0_238, %c0_239, %c0_240] : memref<1x1x7xf32, #tpu.memory_space<vmem>>, vector<1x1x7xf32>
    %343 = vector.shape_cast %342 : vector<1x1x7xf32> to vector<1x7xf32>
    %344 = vector.shape_cast %341 : vector<1x7xf32> to vector<1x1x7xf32>
    tpu.vector_store %arg26[%c0_238, %c0_239, %c0_240], %344 {strides = array<i32>} : memref<1x1x7xf32, #tpu.memory_space<vmem>>, vector<1x1x7xf32>,
    return
  }
  func.func @transform_0(%arg0: i32) -> (i32, i32, i32) {
    %c0_i32 = arith.constant 0 : i32
    %c0_i32_0 = arith.constant 0 : i32
    %c0_i32_1 = arith.constant 0 : i32
    return %arg0, %c0_i32, %c0_i32_0 : i32, i32, i32
  }
  func.func @transform_1(%arg0: i32) -> (i32, i32) {
    %c0_i32 = arith.constant 0 : i32
    %c0_i32_0 = arith.constant 0 : i32
    %c0_i32_1 = arith.constant 0 : i32
    return %c0_i32, %c0_i32_0 : i32, i32
  }
  func.func @transform_2(%arg0: i32) -> (i32, i32) {
    %c0_i32 = arith.constant 0 : i32
    %c0_i32_0 = arith.constant 0 : i32
    %c0_i32_1 = arith.constant 0 : i32
    return %c0_i32, %c0_i32_0 : i32, i32
  }
  func.func @transform_3(%arg0: i32) -> (i32, i32) {
    %c0_i32 = arith.constant 0 : i32
    %c0_i32_0 = arith.constant 0 : i32
    %c0_i32_1 = arith.constant 0 : i32
    return %c0_i32, %c0_i32_0 : i32, i32
  }
  func.func @transform_4(%arg0: i32) -> (i32, i32) {
    %c0_i32 = arith.constant 0 : i32
    %c0_i32_0 = arith.constant 0 : i32
    %c0_i32_1 = arith.constant 0 : i32
    return %c0_i32, %c0_i32_0 : i32, i32
  }
  func.func @transform_5(%arg0: i32) -> (i32, i32) {
    %c0_i32 = arith.constant 0 : i32
    %c0_i32_0 = arith.constant 0 : i32
    %c0_i32_1 = arith.constant 0 : i32
    return %c0_i32, %c0_i32_0 : i32, i32
  }
  func.func @transform_6(%arg0: i32) -> (i32, i32) {
    %c0_i32 = arith.constant 0 : i32
    %c0_i32_0 = arith.constant 0 : i32
    %c0_i32_1 = arith.constant 0 : i32
    return %c0_i32, %c0_i32_0 : i32, i32
  }
  func.func @transform_7(%arg0: i32) -> (i32, i32) {
    %c0_i32 = arith.constant 0 : i32
    %c0_i32_0 = arith.constant 0 : i32
    %c0_i32_1 = arith.constant 0 : i32
    return %c0_i32, %c0_i32_0 : i32, i32
  }
  func.func @transform_8(%arg0: i32) -> (i32, i32) {
    %c0_i32 = arith.constant 0 : i32
    %c0_i32_0 = arith.constant 0 : i32
    %c0_i32_1 = arith.constant 0 : i32
    return %c0_i32, %c0_i32_0 : i32, i32
  }
  func.func @transform_9(%arg0: i32) -> (i32, i32, i32) {
    %c0_i32 = arith.constant 0 : i32
    %c0_i32_0 = arith.constant 0 : i32
    %c0_i32_1 = arith.constant 0 : i32
    return %arg0, %c0_i32, %c0_i32_0 : i32, i32, i32
  }
  func.func @transform_10(%arg0: i32) -> (i32, i32, i32) {
    %c0_i32 = arith.constant 0 : i32
    %c0_i32_0 = arith.constant 0 : i32
    %c0_i32_1 = arith.constant 0 : i32
    %c0_i32_2 = arith.constant 0 : i32
    return %c0_i32, %c0_i32_0, %c0_i32_1 : i32, i32, i32
  }
  func.func @transform_11(%arg0: i32) -> (i32, i32, i32) {
    %c0_i32 = arith.constant 0 : i32
    %c0_i32_0 = arith.constant 0 : i32
    %c0_i32_1 = arith.constant 0 : i32
    %c0_i32_2 = arith.constant 0 : i32
    return %c0_i32, %c0_i32_0, %c0_i32_1 : i32, i32, i32
  }
  func.func @transform_12(%arg0: i32) -> (i32, i32, i32) {
    %c0_i32 = arith.constant 0 : i32
    %c0_i32_0 = arith.constant 0 : i32
    %c0_i32_1 = arith.constant 0 : i32
    %c0_i32_2 = arith.constant 0 : i32
    return %c0_i32, %c0_i32_0, %c0_i32_1 : i32, i32, i32
  }
  func.func @transform_13(%arg0: i32) -> (i32, i32, i32) {
    %c0_i32 = arith.constant 0 : i32
    %c0_i32_0 = arith.constant 0 : i32
    %c0_i32_1 = arith.constant 0 : i32
    %c0_i32_2 = arith.constant 0 : i32
    return %c0_i32, %c0_i32_0, %c0_i32_1 : i32, i32, i32
  }
  func.func @transform_14(%arg0: i32) -> (i32, i32, i32) {
    %c0_i32 = arith.constant 0 : i32
    %c0_i32_0 = arith.constant 0 : i32
    %c0_i32_1 = arith.constant 0 : i32
    %c0_i32_2 = arith.constant 0 : i32
    return %c0_i32, %c0_i32_0, %c0_i32_1 : i32, i32, i32
  }
  func.func @transform_15(%arg0: i32) -> (i32, i32, i32) {
    %c0_i32 = arith.constant 0 : i32
    %c0_i32_0 = arith.constant 0 : i32
    %c0_i32_1 = arith.constant 0 : i32
    %c0_i32_2 = arith.constant 0 : i32
    return %c0_i32, %c0_i32_0, %c0_i32_1 : i32, i32, i32
  }
  func.func @transform_16(%arg0: i32) -> (i32, i32, i32) {
    %c0_i32 = arith.constant 0 : i32
    %c0_i32_0 = arith.constant 0 : i32
    %c0_i32_1 = arith.constant 0 : i32
    %c0_i32_2 = arith.constant 0 : i32
    return %c0_i32, %c0_i32_0, %c0_i32_1 : i32, i32, i32
  }
  func.func @transform_17(%arg0: i32) -> (i32, i32, i32) {
    %c0_i32 = arith.constant 0 : i32
    %c0_i32_0 = arith.constant 0 : i32
    %c0_i32_1 = arith.constant 0 : i32
    %c0_i32_2 = arith.constant 0 : i32
    return %c0_i32, %c0_i32_0, %c0_i32_1 : i32, i32, i32
  }
  func.func @transform_18(%arg0: i32) -> (i32, i32, i32) {
    %c0_i32 = arith.constant 0 : i32
    %c0_i32_0 = arith.constant 0 : i32
    %c0_i32_1 = arith.constant 0 : i32
    %c0_i32_2 = arith.constant 0 : i32
    return %c0_i32, %c0_i32_0, %c0_i32_1 : i32, i32, i32
  }
  func.func @transform_19(%arg0: i32) -> (i32, i32) {
    %c0_i32 = arith.constant 0 : i32
    %c0_i32_0 = arith.constant 0 : i32
    %c0_i32_1 = arith.constant 0 : i32
    return %c0_i32, %c0_i32_0 : i32, i32
  }
  func.func @transform_20(%arg0: i32) -> (i32, i32) {
    %c0_i32 = arith.constant 0 : i32
    %c0_i32_0 = arith.constant 0 : i32
    %c0_i32_1 = arith.constant 0 : i32
    return %c0_i32, %c0_i32_0 : i32, i32
  }
  func.func @transform_21(%arg0: i32) -> (i32, i32) {
    %c0_i32 = arith.constant 0 : i32
    %c0_i32_0 = arith.constant 0 : i32
    %c0_i32_1 = arith.constant 0 : i32
    return %c0_i32, %c0_i32_0 : i32, i32
  }
  func.func @transform_22(%arg0: i32) -> (i32, i32) {
    %c0_i32 = arith.constant 0 : i32
    %c0_i32_0 = arith.constant 0 : i32
    %c0_i32_1 = arith.constant 0 : i32
    return %c0_i32, %c0_i32_0 : i32, i32
  }
  func.func @transform_23(%arg0: i32) -> (i32, i32) {
    %c0_i32 = arith.constant 0 : i32
    %c0_i32_0 = arith.constant 0 : i32
    %c0_i32_1 = arith.constant 0 : i32
    return %c0_i32, %c0_i32_0 : i32, i32
  }
  func.func @transform_24(%arg0: i32) -> (i32, i32) {
    %c0_i32 = arith.constant 0 : i32
    %c0_i32_0 = arith.constant 0 : i32
    %c0_i32_1 = arith.constant 0 : i32
    return %c0_i32, %c0_i32_0 : i32, i32
  }
  func.func @transform_25(%arg0: i32) -> (i32, i32, i32) {
    %c0_i32 = arith.constant 0 : i32
    %c0_i32_0 = arith.constant 0 : i32
    %c0_i32_1 = arith.constant 0 : i32
    return %arg0, %c0_i32, %c0_i32_0 : i32, i32, i32
  }
}

</mosaic_0001>

<llo_original>
// kernel: multimodal_forward.1
$region0: #{multimodal_forward.1}
  #allocation0 [shape = 'u32[]', space=smem, size = 0x4, offset = 0x4, fixed_abs, tag = 'smem constant byte address 0x4 - core index']
  #allocation1 [shape = 'u32[144,128]{1,0:T(1,128)}', space=vmem, size = 0x12000, scoped, tag = 'internal scratch']
  #allocation2 [shape = 'f32[124,32]{1,0:T(8,128)}', space=vmem, size = 0x10000, scoped, tag = 'scratch operand']
  #allocation3 [shape = 'f32[122,32]{1,0:T(8,128)}', space=vmem, size = 0x10000, scoped, tag = 'scratch operand']
  #allocation4 [shape = 'f32[30,32]{1,0:T(8,128)}', space=vmem, size = 0x4000, scoped, tag = 'scratch operand']
  #allocation5 [shape = 'f32[28,64]{1,0:T(8,128)}', space=vmem, size = 0x4000, scoped, tag = 'scratch operand']
  #allocation6 [shape = 'f32[7,64]{1,0:T(8,128)}', space=vmem, size = 0x1000, scoped, tag = 'scratch operand']
  #allocation7 [shape = 'f32[5,64]{1,0:T(8,128)}', space=vmem, size = 0x1000, scoped, tag = 'scratch operand']
  %s0 = inlined_call_operand.vmem [shape: f32[2,124,128], index: 0, kind: input, shape index: {}]
  %s1 = inlined_call_operand.hbm [shape: f32[128,128], index: 1, kind: input, shape index: {}]
  %s2 = inlined_call_operand.hbm [shape: f32[2,128], index: 2, kind: input, shape index: {}]
  %s3 = inlined_call_operand.vmem [shape: f32[96,32], index: 3, kind: input, shape index: {}]
  %s4 = inlined_call_operand.hbm [shape: f32[2,32], index: 4, kind: input, shape index: {}]
  %s5 = inlined_call_operand.vmem [shape: f32[96,64], index: 5, kind: input, shape index: {}]
  %s6 = inlined_call_operand.hbm [shape: f32[2,64], index: 6, kind: input, shape index: {}]
  %s7 = inlined_call_operand.vmem [shape: f32[192,64], index: 7, kind: input, shape index: {}]
  %s8 = inlined_call_operand.hbm [shape: f32[2,64], index: 8, kind: input, shape index: {}]
  %s9 = inlined_call_operand.vmem [shape: f32[2,8,128], index: 9, kind: input, shape index: {}]
  %s10 = inlined_call_operand.hbm [shape: f32[2,128,384], index: 10, kind: input, shape index: {}]
  %s11 = inlined_call_operand.hbm [shape: f32[2,1,384], index: 11, kind: input, shape index: {}]
  %s12 = inlined_call_operand.hbm [shape: f32[2,128,128], index: 12, kind: input, shape index: {}]
  %s13 = inlined_call_operand.hbm [shape: f32[2,1,128], index: 13, kind: input, shape index: {}]
  %s14 = inlined_call_operand.hbm [shape: f32[2,128,128], index: 14, kind: input, shape index: {}]
  %s15 = inlined_call_operand.hbm [shape: f32[2,1,128], index: 15, kind: input, shape index: {}]
  %s16 = inlined_call_operand.hbm [shape: f32[2,128,128], index: 16, kind: input, shape index: {}]
  %s17 = inlined_call_operand.hbm [shape: f32[2,1,128], index: 17, kind: input, shape index: {}]
  %s18 = inlined_call_operand.hbm [shape: f32[2,4,128], index: 18, kind: input, shape index: {}]
  %s19 = inlined_call_operand.hbm [shape: f32[128,128], index: 19, kind: input, shape index: {}]
  %s20 = inlined_call_operand.hbm [shape: f32[128,128], index: 20, kind: input, shape index: {}]
  %s21 = inlined_call_operand.hbm [shape: f32[64,128], index: 21, kind: input, shape index: {}]
  %s22 = inlined_call_operand.hbm [shape: f32[1,128], index: 22, kind: input, shape index: {}]
  %s23 = inlined_call_operand.vmem [shape: f32[128,7], index: 23, kind: input, shape index: {}]
  %s24 = inlined_call_operand.hbm [shape: f32[1,7], index: 24, kind: input, shape index: {}]
  %s25 = inlined_call_operand.hbm [shape: f32[2,1,7], index: 25, kind: output, shape index: {}]
  %s26 = sld [smem:[#allocation0]]
  $region209: #{multimodal_forward.1} parent=0
    _
  %s28 = ssub.s32 1, %s26
  %s29 = scalar_select 0, %s28, %s26
  $region1: #{multimodal_forward.1} parent=0
    #allocation8 [shape = 'u8[65536]{0}', space=vmem, size = 0x10000, scoped, tag = 'input window, operand 1, single buffered']
    #allocation9 [shape = 's32[2]{0}', space=sflag, size = 0x8, scoped, tag = 'scoped memory for multimodal_forward.1']
    #allocation10 [shape = 's32[2]{0}', space=sflag, size = 0x8, scoped, tag = 'scoped memory for multimodal_forward.1']
    #allocation11 [shape = 'u8[1024]{0}', space=vmem, size = 0x400, scoped, tag = 'input window, operand 2, single buffered']
    #allocation12 [shape = 's32[1]{0}', space=sflag, size = 0x4, scoped, tag = 'scoped memory for multimodal_forward.1']
    #allocation13 [shape = 'u8[1024]{0}', space=vmem, size = 0x400, scoped, tag = 'input window, operand 4, single buffered']
    #allocation14 [shape = 'u8[1024]{0}', space=vmem, size = 0x400, scoped, tag = 'input window, operand 6, single buffered']
    #allocation15 [shape = 's32[1]{0}', space=sflag, size = 0x4, scoped, tag = 'scoped memory for multimodal_forward.1']
    #allocation16 [shape = 'u8[1024]{0}', space=vmem, size = 0x400, scoped, tag = 'input window, operand 8, single buffered']
    #allocation17 [shape = 'u8[393216]{0}', space=vmem, size = 0x60000, scoped, tag = 'input window, operand 10, single buffered']
    #allocation18 [shape = 's32[1]{0}', space=sflag, size = 0x4, scoped, tag = 'scoped memory for multimodal_forward.1']
    #allocation19 [shape = 'u8[3072]{0}', space=vmem, size = 0xc00, scoped, tag = 'input window, operand 11, single buffered']
    #allocation20 [shape = 'u8[131072]{0}', space=vmem, size = 0x20000, scoped, tag = 'input window, operand 12, single buffered']
    #allocation21 [shape = 's32[1]{0}', space=sflag, size = 0x4, scoped, tag = 'scoped memory for multimodal_forward.1']
    #allocation22 [shape = 'u8[1024]{0}', space=vmem, size = 0x400, scoped, tag = 'input window, operand 13, single buffered']
    #allocation23 [shape = 'u8[131072]{0}', space=vmem, size = 0x20000, scoped, tag = 'input window, operand 14, single buffered']
    #allocation24 [shape = 's32[1]{0}', space=sflag, size = 0x4, scoped, tag = 'scoped memory for multimodal_forward.1']
    #allocation25 [shape = 'u8[1024]{0}', space=vmem, size = 0x400, scoped, tag = 'input window, operand 15, single buffered']
    #allocation26 [shape = 'u8[131072]{0}', space=vmem, size = 0x20000, scoped, tag = 'input window, operand 16, single buffered']
    #allocation27 [shape = 's32[1]{0}', space=sflag, size = 0x4, scoped, tag = 'scoped memory for multimodal_forward.1']
    #allocation28 [shape = 'u8[1024]{0}', space=vmem, size = 0x400, scoped, tag = 'input window, operand 17, single buffered']
    #allocation29 [shape = 'u8[4096]{0}', space=vmem, size = 0x1000, scoped, tag = 'input window, operand 18, single buffered']
    #allocation30 [shape = 's32[1]{0}', space=sflag, size = 0x4, scoped, tag = 'scoped memory for multimodal_forward.1']
    #allocation31 [shape = 'u8[65536]{0}', space=vmem, size = 0x10000, scoped, tag = 'input window, operand 19, single buffered']
    #allocation32 [shape = 'u8[65536]{0}', space=vmem, size = 0x10000, scoped, tag = 'input window, operand 20, single buffered']
    #allocation33 [shape = 's32[1]{0}', space=sflag, size = 0x4, scoped, tag = 'scoped memory for multimodal_forward.1']
    #allocation34 [shape = 'u8[32768]{0}', space=vmem, size = 0x8000, scoped, tag = 'input window, operand 21, single buffered']
    #allocation35 [shape = 'u8[512]{0}', space=vmem, size = 0x400, scoped, tag = 'input window, operand 22, single buffered']
    #allocation36 [shape = 's32[1]{0}', space=sflag, size = 0x4, scoped, tag = 'scoped memory for multimodal_forward.1']
    #allocation37 [shape = 'u8[512]{0}', space=vmem, size = 0x400, scoped, tag = 'input window, operand 24, single buffered']
    #allocation38 [shape = 'u8[1024]{0}', space=vmem, size = 0x400, scoped, tag = 'output window, operand 0']
    %30 = vsyncpa [#allocation9], 0
    %31 = vsyncpa [#allocation12], 0
    %32 = vsyncpa [#allocation15], 0
    %33 = vsyncpa [#allocation18], 0
    %34 = vsyncpa [#allocation21], 0
    %35 = vsyncpa [#allocation24], 0
    %36 = vsyncpa [#allocation27], 0
    %37 = vsyncpa [#allocation30], 0
    %38 = vsyncpa [#allocation33], 0
    %39 = vsyncpa [#allocation36], 0
    %40 = vsyncpa [#allocation10], 0
    %s41 = scalar_lea.sflag [#allocation10], 1
    %42 = vsyncpa %s41, 0
    loop: start=0, step=1, limit=4
    $region2: #{multimodal_forward.1} parent=1 // loop_pre_header
      _
    $region3: #{multimodal_forward.1} parent=1 // loop_header
      %s44 = sphi 0, %s48
      %p45 = scmp.ge.s32.totalorder %s44, 4
      %s54 = sphi 0, %s56
      %s57 = sphi 0, %s54
      %s58 = sphi 0, %s57
      %s74 = sphi 0, %s58
      %s78 = sphi 0, %s78
      %s80 = sphi 0, %s78
      %s81 = sphi 0, %s80
      %s95 = sphi 0, %s81
      %s99 = sphi 0, %s99
      %s101 = sphi 0, %s99
      %s102 = sphi 0, %s101
      %s116 = sphi 0, %s102
      %s120 = sphi 0, %s120
      %s122 = sphi 0, %s120
      %s123 = sphi 0, %s122
      %s137 = sphi 0, %s123
      %s141 = sphi 0, %s141
      %s143 = sphi 0, %s141
      %s144 = sphi 0, %s143
      %s158 = sphi 0, %s144
      %s162 = sphi 0, %s162
      %s164 = sphi 0, %s162
      %s165 = sphi 0, %s164
      %s179 = sphi 0, %s165
      %s183 = sphi 0, %s183
      %s185 = sphi 0, %s183
      %s186 = sphi 0, %s185
      %s200 = sphi 0, %s186
      %s204 = sphi 0, %s204
      %s206 = sphi 0, %s204
      %s207 = sphi 0, %s206
      %s221 = sphi 0, %s207
      %s225 = sphi 0, %s225
      %s227 = sphi 0, %s225
      %s228 = sphi 0, %s227
      %s242 = sphi 0, %s228
      %s248 = sphi 0, %s250
      %s251 = sphi 0, %s248
      %s252 = sphi 0, %s251
      %s268 = sphi 0, %s252
      %s272 = sphi 0, %s272
      %s274 = sphi 0, %s272
      %s275 = sphi 0, %s274
      %s289 = sphi 0, %s275
      %s293 = sphi 0, %s293
      %s295 = sphi 0, %s293
      %s296 = sphi 0, %s295
      %s310 = sphi 0, %s296
      %s314 = sphi 0, %s314
      %s316 = sphi 0, %s314
      %s317 = sphi 0, %s316
      %s331 = sphi 0, %s317
      %s335 = sphi 0, %s335
      %s337 = sphi 0, %s335
      %s338 = sphi 0, %s337
      %s352 = sphi 0, %s338
      %s356 = sphi 0, %s356
      %s358 = sphi 0, %s356
      %s359 = sphi 0, %s358
      %s373 = sphi 0, %s359
      %s377 = sphi 0, %s377
      %s379 = sphi 0, %s377
      %s380 = sphi 0, %s379
      %s394 = sphi 0, %s380
      %s398 = sphi 0, %s398
      %s400 = sphi 0, %s398
      %s401 = sphi 0, %s400
      %s415 = sphi 0, %s401
      %s419 = sphi 0, %s419
      %s421 = sphi 0, %s419
      %s422 = sphi 0, %s421
      %s436 = sphi 0, %s422
      %s440 = sphi 0, %s440
      %s442 = sphi 0, %s440
      %s443 = sphi 0, %s442
      %s457 = sphi 0, %s443
      %s461 = sphi 0, %s461
      %s463 = sphi 0, %s461
      %s464 = sphi 0, %s463
      %s478 = sphi 0, %s464
      %s482 = sphi 0, %s482
      %s484 = sphi 0, %s482
      %s485 = sphi 0, %s484
      %s499 = sphi 0, %s485
      %s503 = sphi 0, %s503
      %s505 = sphi 0, %s503
      %s506 = sphi 0, %s505
      %s520 = sphi 0, %s506
      %s524 = sphi 0, %s524
      %s526 = sphi 0, %s524
      %s527 = sphi 0, %s526
      %s541 = sphi 0, %s527
      %s545 = sphi 0, %s545
      %s547 = sphi 0, %s545
      %s548 = sphi 0, %s547
      %s562 = sphi 0, %s548
      %s566 = sphi 0, %s566
      %s568 = sphi 0, %s566
      %s569 = sphi 0, %s568
      %s583 = sphi 0, %s569
      %s589 = sphi 0, %s591
      %s592 = sphi 0, %s589
      %s593 = sphi 0, %s592
      %s609 = sphi 0, %s593
    $region4: #{multimodal_forward.1} parent=1 // loop_header_branch
      %47 = sbr.rel (%p45) target = $region8
    $region5: #{multimodal_forward.1} parent=1 // loop_body
      %s49 = ssub.s32 %s44, 1
      %s50 = ssub.s32 %s44, 2
      %s51 = sadd.s32 %s44, 1
      %s52 = ssub.s32 %s44, %s51
      %p53 = scmp.eq.s32.totalorder %s52, 0
      %s55 = sadd.s32 %s54, 1
      %s56 = scalar_select %p53, %s54, %s55
      %p59 = pneg %p53
      %p60 = scmp.eq.s32.totalorder %s44, 1
      %p61 = por %p59, %p60
      %p62 = scmp.ne.s32.totalorder %s54, %s57
      %p63 = scmp.eq.s32.totalorder %s44, 0
      %p64 = por %p62, %p63
      %p65 = scmp.ne.s32.totalorder %s54, %s57
      %p66 = scmp.eq.s32.totalorder %s49, 1
      %p67 = por %p65, %p66
      %p68 = scmp.ne.s32.totalorder %s57, %s58
      %p69 = scmp.eq.s32.totalorder %s49, 0
      %p70 = por %p68, %p69
      %p71 = scmp.ne.s32.totalorder %s57, %s58
      %p72 = scmp.eq.s32.totalorder %s50, 1
      %p73 = por %p71, %p72
      %p75 = scmp.ne.s32.totalorder %s58, %s74
      %p76 = scmp.eq.s32.totalorder %s50, 0
      %p77 = por %p75, %p76
      %s79 = sadd.s32 %s78, 1
      %p82 = scmp.eq.s32.totalorder %s44, 1
      %p83 = scmp.ne.s32.totalorder %s78, %s80
      %p84 = scmp.eq.s32.totalorder %s44, 0
      %p85 = por %p83, %p84
      %p86 = scmp.ne.s32.totalorder %s78, %s80
      %p87 = scmp.eq.s32.totalorder %s49, 1
      %p88 = por %p86, %p87
      %p89 = scmp.ne.s32.totalorder %s80, %s81
      %p90 = scmp.eq.s32.totalorder %s49, 0
      %p91 = por %p89, %p90
      %p92 = scmp.ne.s32.totalorder %s80, %s81
      %p93 = scmp.eq.s32.totalorder %s50, 1
      %p94 = por %p92, %p93
      %p96 = scmp.ne.s32.totalorder %s81, %s95
      %p97 = scmp.eq.s32.totalorder %s50, 0
      %p98 = por %p96, %p97
      %s100 = sadd.s32 %s99, 1
      %p103 = scmp.eq.s32.totalorder %s44, 1
      %p104 = scmp.ne.s32.totalorder %s99, %s101
      %p105 = scmp.eq.s32.totalorder %s44, 0
      %p106 = por %p104, %p105
      %p107 = scmp.ne.s32.totalorder %s99, %s101
      %p108 = scmp.eq.s32.totalorder %s49, 1
      %p109 = por %p107, %p108
      %p110 = scmp.ne.s32.totalorder %s101, %s102
      %p111 = scmp.eq.s32.totalorder %s49, 0
      %p112 = por %p110, %p111
      %p113 = scmp.ne.s32.totalorder %s101, %s102
      %p114 = scmp.eq.s32.totalorder %s50, 1
      %p115 = por %p113, %p114
      %p117 = scmp.ne.s32.totalorder %s102, %s116
      %p118 = scmp.eq.s32.totalorder %s50, 0
      %p119 = por %p117, %p118
      %s121 = sadd.s32 %s120, 1
      %p124 = scmp.eq.s32.totalorder %s44, 1
      %p125 = scmp.ne.s32.totalorder %s120, %s122
      %p126 = scmp.eq.s32.totalorder %s44, 0
      %p127 = por %p125, %p126
      %p128 = scmp.ne.s32.totalorder %s120, %s122
      %p129 = scmp.eq.s32.totalorder %s49, 1
      %p130 = por %p128, %p129
      %p131 = scmp.ne.s32.totalorder %s122, %s123
      %p132 = scmp.eq.s32.totalorder %s49, 0
      %p133 = por %p131, %p132
      %p134 = scmp.ne.s32.totalorder %s122, %s123
      %p135 = scmp.eq.s32.totalorder %s50, 1
      %p136 = por %p134, %p135
      %p138 = scmp.ne.s32.totalorder %s123, %s137
      %p139 = scmp.eq.s32.totalorder %s50, 0
      %p140 = por %p138, %p139
      %s142 = sadd.s32 %s141, 1
      %p145 = scmp.eq.s32.totalorder %s44, 1
      %p146 = scmp.ne.s32.totalorder %s141, %s143
      %p147 = scmp.eq.s32.totalorder %s44, 0
      %p148 = por %p146, %p147
      %p149 = scmp.ne.s32.totalorder %s141, %s143
      %p150 = scmp.eq.s32.totalorder %s49, 1
      %p151 = por %p149, %p150
      %p152 = scmp.ne.s32.totalorder %s143, %s144
      %p153 = scmp.eq.s32.totalorder %s49, 0
      %p154 = por %p152, %p153
      %p155 = scmp.ne.s32.totalorder %s143, %s144
      %p156 = scmp.eq.s32.totalorder %s50, 1
      %p157 = por %p155, %p156
      %p159 = scmp.ne.s32.totalorder %s144, %s158
      %p160 = scmp.eq.s32.totalorder %s50, 0
      %p161 = por %p159, %p160
      %s163 = sadd.s32 %s162, 1
      %p166 = scmp.eq.s32.totalorder %s44, 1
      %p167 = scmp.ne.s32.totalorder %s162, %s164
      %p168 = scmp.eq.s32.totalorder %s44, 0
      %p169 = por %p167, %p168
      %p170 = scmp.ne.s32.totalorder %s162, %s164
      %p171 = scmp.eq.s32.totalorder %s49, 1
      %p172 = por %p170, %p171
      %p173 = scmp.ne.s32.totalorder %s164, %s165
      %p174 = scmp.eq.s32.totalorder %s49, 0
      %p175 = por %p173, %p174
      %p176 = scmp.ne.s32.totalorder %s164, %s165
      %p177 = scmp.eq.s32.totalorder %s50, 1
      %p178 = por %p176, %p177
      %p180 = scmp.ne.s32.totalorder %s165, %s179
      %p181 = scmp.eq.s32.totalorder %s50, 0
      %p182 = por %p180, %p181
      %s184 = sadd.s32 %s183, 1
      %p187 = scmp.eq.s32.totalorder %s44, 1
      %p188 = scmp.ne.s32.totalorder %s183, %s185
      %p189 = scmp.eq.s32.totalorder %s44, 0
      %p190 = por %p188, %p189
      %p191 = scmp.ne.s32.totalorder %s183, %s185
      %p192 = scmp.eq.s32.totalorder %s49, 1
      %p193 = por %p191, %p192
      %p194 = scmp.ne.s32.totalorder %s185, %s186
      %p195 = scmp.eq.s32.totalorder %s49, 0
      %p196 = por %p194, %p195
      %p197 = scmp.ne.s32.totalorder %s185, %s186
      %p198 = scmp.eq.s32.totalorder %s50, 1
      %p199 = por %p197, %p198
      %p201 = scmp.ne.s32.totalorder %s186, %s200
      %p202 = scmp.eq.s32.totalorder %s50, 0
      %p203 = por %p201, %p202
      %s205 = sadd.s32 %s204, 1
      %p208 = scmp.eq.s32.totalorder %s44, 1
      %p209 = scmp.ne.s32.totalorder %s204, %s206
      %p210 = scmp.eq.s32.totalorder %s44, 0
      %p211 = por %p209, %p210
      %p212 = scmp.ne.s32.totalorder %s204, %s206
      %p213 = scmp.eq.s32.totalorder %s49, 1
      %p214 = por %p212, %p213
      %p215 = scmp.ne.s32.totalorder %s206, %s207
      %p216 = scmp.eq.s32.totalorder %s49, 0
      %p217 = por %p215, %p216
      %p218 = scmp.ne.s32.totalorder %s206, %s207
      %p219 = scmp.eq.s32.totalorder %s50, 1
      %p220 = por %p218, %p219
      %p222 = scmp.ne.s32.totalorder %s207, %s221
      %p223 = scmp.eq.s32.totalorder %s50, 0
      %p224 = por %p222, %p223
      %s226 = sadd.s32 %s225, 1
      %p229 = scmp.eq.s32.totalorder %s44, 1
      %p230 = scmp.ne.s32.totalorder %s225, %s227
      %p231 = scmp.eq.s32.totalorder %s44, 0
      %p232 = por %p230, %p231
      %p233 = scmp.ne.s32.totalorder %s225, %s227
      %p234 = scmp.eq.s32.totalorder %s49, 1
      %p235 = por %p233, %p234
      %p236 = scmp.ne.s32.totalorder %s227, %s228
      %p237 = scmp.eq.s32.totalorder %s49, 0
      %p238 = por %p236, %p237
      %p239 = scmp.ne.s32.totalorder %s227, %s228
      %p240 = scmp.eq.s32.totalorder %s50, 1
      %p241 = por %p239, %p240
      %p243 = scmp.ne.s32.totalorder %s228, %s242
      %p244 = scmp.eq.s32.totalorder %s50, 0
      %p245 = por %p243, %p244
      %s246 = ssub.s32 %s44, %s51
      %p247 = scmp.eq.s32.totalorder %s246, 0
      %s249 = sadd.s32 %s248, 1
      %s250 = scalar_select %p247, %s248, %s249
      %p253 = pneg %p247
      %p254 = scmp.eq.s32.totalorder %s44, 1
      %p255 = por %p253, %p254
      %p256 = scmp.ne.s32.totalorder %s248, %s251
      %p257 = scmp.eq.s32.totalorder %s44, 0
      %p258 = por %p256, %p257
      %p259 = scmp.ne.s32.totalorder %s248, %s251
      %p260 = scmp.eq.s32.totalorder %s49, 1
      %p261 = por %p259, %p260
      %p262 = scmp.ne.s32.totalorder %s251, %s252
      %p263 = scmp.eq.s32.totalorder %s49, 0
      %p264 = por %p262, %p263
      %p265 = scmp.ne.s32.totalorder %s251, %s252
      %p266 = scmp.eq.s32.totalorder %s50, 1
      %p267 = por %p265, %p266
      %p269 = scmp.ne.s32.totalorder %s252, %s268
      %p270 = scmp.eq.s32.totalorder %s50, 0
      %p271 = por %p269, %p270
      %s273 = sadd.s32 %s272, 1
      %p276 = scmp.eq.s32.totalorder %s44, 1
      %p277 = scmp.ne.s32.totalorder %s272, %s274
      %p278 = scmp.eq.s32.totalorder %s44, 0
      %p279 = por %p277, %p278
      %p280 = scmp.ne.s32.totalorder %s272, %s274
      %p281 = scmp.eq.s32.totalorder %s49, 1
      %p282 = por %p280, %p281
      %p283 = scmp.ne.s32.totalorder %s274, %s275
      %p284 = scmp.eq.s32.totalorder %s49, 0
      %p285 = por %p283, %p284
      %p286 = scmp.ne.s32.totalorder %s274, %s275
      %p287 = scmp.eq.s32.totalorder %s50, 1
      %p288 = por %p286, %p287
      %p290 = scmp.ne.s32.totalorder %s275, %s289
      %p291 = scmp.eq.s32.totalorder %s50, 0
      %p292 = por %p290, %p291
      %s294 = sadd.s32 %s293, 1
      %p297 = scmp.eq.s32.totalorder %s44, 1
      %p298 = scmp.ne.s32.totalorder %s293, %s295
      %p299 = scmp.eq.s32.totalorder %s44, 0
      %p300 = por %p298, %p299
      %p301 = scmp.ne.s32.totalorder %s293, %s295
      %p302 = scmp.eq.s32.totalorder %s49, 1
      %p303 = por %p301, %p302
      %p304 = scmp.ne.s32.totalorder %s295, %s296
      %p305 = scmp.eq.s32.totalorder %s49, 0
      %p306 = por %p304, %p305
      %p307 = scmp.ne.s32.totalorder %s295, %s296
      %p308 = scmp.eq.s32.totalorder %s50, 1
      %p309 = por %p307, %p308
      %p311 = scmp.ne.s32.totalorder %s296, %s310
      %p312 = scmp.eq.s32.totalorder %s50, 0
      %p313 = por %p311, %p312
      %s315 = sadd.s32 %s314, 1
      %p318 = scmp.eq.s32.totalorder %s44, 1
      %p319 = scmp.ne.s32.totalorder %s314, %s316
      %p320 = scmp.eq.s32.totalorder %s44, 0
      %p321 = por %p319, %p320
      %p322 = scmp.ne.s32.totalorder %s314, %s316
      %p323 = scmp.eq.s32.totalorder %s49, 1
      %p324 = por %p322, %p323
      %p325 = scmp.ne.s32.totalorder %s316, %s317
      %p326 = scmp.eq.s32.totalorder %s49, 0
      %p327 = por %p325, %p326
      %p328 = scmp.ne.s32.totalorder %s316, %s317
      %p329 = scmp.eq.s32.totalorder %s50, 1
      %p330 = por %p328, %p329
      %p332 = scmp.ne.s32.totalorder %s317, %s331
      %p333 = scmp.eq.s32.totalorder %s50, 0
      %p334 = por %p332, %p333
      %s336 = sadd.s32 %s335, 1
      %p339 = scmp.eq.s32.totalorder %s44, 1
      %p340 = scmp.ne.s32.totalorder %s335, %s337
      %p341 = scmp.eq.s32.totalorder %s44, 0
      %p342 = por %p340, %p341
      %p343 = scmp.ne.s32.totalorder %s335, %s337
      %p344 = scmp.eq.s32.totalorder %s49, 1
      %p345 = por %p343, %p344
      %p346 = scmp.ne.s32.totalorder %s337, %s338
      %p347 = scmp.eq.s32.totalorder %s49, 0
      %p348 = por %p346, %p347
      %p349 = scmp.ne.s32.totalorder %s337, %s338
      %p350 = scmp.eq.s32.totalorder %s50, 1
      %p351 = por %p349, %p350
      %p353 = scmp.ne.s32.totalorder %s338, %s352
      %p354 = scmp.eq.s32.totalorder %s50, 0
      %p355 = por %p353, %p354
      %s357 = sadd.s32 %s356, 1
      %p360 = scmp.eq.s32.totalorder %s44, 1
      %p361 = scmp.ne.s32.totalorder %s356, %s358
      %p362 = scmp.eq.s32.totalorder %s44, 0
      %p363 = por %p361, %p362
      %p364 = scmp.ne.s32.totalorder %s356, %s358
      %p365 = scmp.eq.s32.totalorder %s49, 1
      %p366 = por %p364, %p365
      %p367 = scmp.ne.s32.totalorder %s358, %s359
      %p368 = scmp.eq.s32.totalorder %s49, 0
      %p369 = por %p367, %p368
      %p370 = scmp.ne.s32.totalorder %s358, %s359
      %p371 = scmp.eq.s32.totalorder %s50, 1
      %p372 = por %p370, %p371
      %p374 = scmp.ne.s32.totalorder %s359, %s373
      %p375 = scmp.eq.s32.totalorder %s50, 0
      %p376 = por %p374, %p375
      %s378 = sadd.s32 %s377, 1
      %p381 = scmp.eq.s32.totalorder %s44, 1
      %p382 = scmp.ne.s32.totalorder %s377, %s379
      %p383 = scmp.eq.s32.totalorder %s44, 0
      %p384 = por %p382, %p383
      %p385 = scmp.ne.s32.totalorder %s377, %s379
      %p386 = scmp.eq.s32.totalorder %s49, 1
      %p387 = por %p385, %p386
      %p388 = scmp.ne.s32.totalorder %s379, %s380
      %p389 = scmp.eq.s32.totalorder %s49, 0
      %p390 = por %p388, %p389
      %p391 = scmp.ne.s32.totalorder %s379, %s380
      %p392 = scmp.eq.s32.totalorder %s50, 1
      %p393 = por %p391, %p392
      %p395 = scmp.ne.s32.totalorder %s380, %s394
      %p396 = scmp.eq.s32.totalorder %s50, 0
      %p397 = por %p395, %p396
      %s399 = sadd.s32 %s398, 1
      %p402 = scmp.eq.s32.totalorder %s44, 1
      %p403 = scmp.ne.s32.totalorder %s398, %s400
      %p404 = scmp.eq.s32.totalorder %s44, 0
      %p405 = por %p403, %p404
      %p406 = scmp.ne.s32.totalorder %s398, %s400
      %p407 = scmp.eq.s32.totalorder %s49, 1
      %p408 = por %p406, %p407
      %p409 = scmp.ne.s32.totalorder %s400, %s401
      %p410 = scmp.eq.s32.totalorder %s49, 0
      %p411 = por %p409, %p410
      %p412 = scmp.ne.s32.totalorder %s400, %s401
      %p413 = scmp.eq.s32.totalorder %s50, 1
      %p414 = por %p412, %p413
      %p416 = scmp.ne.s32.totalorder %s401, %s415
      %p417 = scmp.eq.s32.totalorder %s50, 0
      %p418 = por %p416, %p417
      %s420 = sadd.s32 %s419, 1
      %p423 = scmp.eq.s32.totalorder %s44, 1
      %p424 = scmp.ne.s32.totalorder %s419, %s421
      %p425 = scmp.eq.s32.totalorder %s44, 0
      %p426 = por %p424, %p425
      %p427 = scmp.ne.s32.totalorder %s419, %s421
      %p428 = scmp.eq.s32.totalorder %s49, 1
      %p429 = por %p427, %p428
      %p430 = scmp.ne.s32.totalorder %s421, %s422
      %p431 = scmp.eq.s32.totalorder %s49, 0
      %p432 = por %p430, %p431
      %p433 = scmp.ne.s32.totalorder %s421, %s422
      %p434 = scmp.eq.s32.totalorder %s50, 1
      %p435 = por %p433, %p434
      %p437 = scmp.ne.s32.totalorder %s422, %s436
      %p438 = scmp.eq.s32.totalorder %s50, 0
      %p439 = por %p437, %p438
      %s441 = sadd.s32 %s440, 1
      %p444 = scmp.eq.s32.totalorder %s44, 1
      %p445 = scmp.ne.s32.totalorder %s440, %s442
      %p446 = scmp.eq.s32.totalorder %s44, 0
      %p447 = por %p445, %p446
      %p448 = scmp.ne.s32.totalorder %s440, %s442
      %p449 = scmp.eq.s32.totalorder %s49, 1
      %p450 = por %p448, %p449
      %p451 = scmp.ne.s32.totalorder %s442, %s443
      %p452 = scmp.eq.s32.totalorder %s49, 0
      %p453 = por %p451, %p452
      %p454 = scmp.ne.s32.totalorder %s442, %s443
      %p455 = scmp.eq.s32.totalorder %s50, 1
      %p456 = por %p454, %p455
      %p458 = scmp.ne.s32.totalorder %s443, %s457
      %p459 = scmp.eq.s32.totalorder %s50, 0
      %p460 = por %p458, %p459
      %s462 = sadd.s32 %s461, 1
      %p465 = scmp.eq.s32.totalorder %s44, 1
      %p466 = scmp.ne.s32.totalorder %s461, %s463
      %p467 = scmp.eq.s32.totalorder %s44, 0
      %p468 = por %p466, %p467
      %p469 = scmp.ne.s32.totalorder %s461, %s463
      %p470 = scmp.eq.s32.totalorder %s49, 1
      %p471 = por %p469, %p470
      %p472 = scmp.ne.s32.totalorder %s463, %s464
      %p473 = scmp.eq.s32.totalorder %s49, 0
      %p474 = por %p472, %p473
      %p475 = scmp.ne.s32.totalorder %s463, %s464
      %p476 = scmp.eq.s32.totalorder %s50, 1
      %p477 = por %p475, %p476
      %p479 = scmp.ne.s32.totalorder %s464, %s478
      %p480 = scmp.eq.s32.totalorder %s50, 0
      %p481 = por %p479, %p480
      %s483 = sadd.s32 %s482, 1
      %p486 = scmp.eq.s32.totalorder %s44, 1
      %p487 = scmp.ne.s32.totalorder %s482, %s484
      %p488 = scmp.eq.s32.totalorder %s44, 0
      %p489 = por %p487, %p488
      %p490 = scmp.ne.s32.totalorder %s482, %s484
      %p491 = scmp.eq.s32.totalorder %s49, 1
      %p492 = por %p490, %p491
      %p493 = scmp.ne.s32.totalorder %s484, %s485
      %p494 = scmp.eq.s32.totalorder %s49, 0
      %p495 = por %p493, %p494
      %p496 = scmp.ne.s32.totalorder %s484, %s485
      %p497 = scmp.eq.s32.totalorder %s50, 1
      %p498 = por %p496, %p497
      %p500 = scmp.ne.s32.totalorder %s485, %s499
      %p501 = scmp.eq.s32.totalorder %s50, 0
      %p502 = por %p500, %p501
      %s504 = sadd.s32 %s503, 1
      %p507 = scmp.eq.s32.totalorder %s44, 1
      %p508 = scmp.ne.s32.totalorder %s503, %s505
      %p509 = scmp.eq.s32.totalorder %s44, 0
      %p510 = por %p508, %p509
      %p511 = scmp.ne.s32.totalorder %s503, %s505
      %p512 = scmp.eq.s32.totalorder %s49, 1
      %p513 = por %p511, %p512
      %p514 = scmp.ne.s32.totalorder %s505, %s506
      %p515 = scmp.eq.s32.totalorder %s49, 0
      %p516 = por %p514, %p515
      %p517 = scmp.ne.s32.totalorder %s505, %s506
      %p518 = scmp.eq.s32.totalorder %s50, 1
      %p519 = por %p517, %p518
      %p521 = scmp.ne.s32.totalorder %s506, %s520
      %p522 = scmp.eq.s32.totalorder %s50, 0
      %p523 = por %p521, %p522
      %s525 = sadd.s32 %s524, 1
      %p528 = scmp.eq.s32.totalorder %s44, 1
      %p529 = scmp.ne.s32.totalorder %s524, %s526
      %p530 = scmp.eq.s32.totalorder %s44, 0
      %p531 = por %p529, %p530
      %p532 = scmp.ne.s32.totalorder %s524, %s526
      %p533 = scmp.eq.s32.totalorder %s49, 1
      %p534 = por %p532, %p533
      %p535 = scmp.ne.s32.totalorder %s526, %s527
      %p536 = scmp.eq.s32.totalorder %s49, 0
      %p537 = por %p535, %p536
      %p538 = scmp.ne.s32.totalorder %s526, %s527
      %p539 = scmp.eq.s32.totalorder %s50, 1
      %p540 = por %p538, %p539
      %p542 = scmp.ne.s32.totalorder %s527, %s541
      %p543 = scmp.eq.s32.totalorder %s50, 0
      %p544 = por %p542, %p543
      %s546 = sadd.s32 %s545, 1
      %p549 = scmp.eq.s32.totalorder %s44, 1
      %p550 = scmp.ne.s32.totalorder %s545, %s547
      %p551 = scmp.eq.s32.totalorder %s44, 0
      %p552 = por %p550, %p551
      %p553 = scmp.ne.s32.totalorder %s545, %s547
      %p554 = scmp.eq.s32.totalorder %s49, 1
      %p555 = por %p553, %p554
      %p556 = scmp.ne.s32.totalorder %s547, %s548
      %p557 = scmp.eq.s32.totalorder %s49, 0
      %p558 = por %p556, %p557
      %p559 = scmp.ne.s32.totalorder %s547, %s548
      %p560 = scmp.eq.s32.totalorder %s50, 1
      %p561 = por %p559, %p560
      %p563 = scmp.ne.s32.totalorder %s548, %s562
      %p564 = scmp.eq.s32.totalorder %s50, 0
      %p565 = por %p563, %p564
      %s567 = sadd.s32 %s566, 1
      %p570 = scmp.eq.s32.totalorder %s44, 1
      %p571 = scmp.ne.s32.totalorder %s566, %s568
      %p572 = scmp.eq.s32.totalorder %s44, 0
      %p573 = por %p571, %p572
      %p574 = scmp.ne.s32.totalorder %s566, %s568
      %p575 = scmp.eq.s32.totalorder %s49, 1
      %p576 = por %p574, %p575
      %p577 = scmp.ne.s32.totalorder %s568, %s569
      %p578 = scmp.eq.s32.totalorder %s49, 0
      %p579 = por %p577, %p578
      %p580 = scmp.ne.s32.totalorder %s568, %s569
      %p581 = scmp.eq.s32.totalorder %s50, 1
      %p582 = por %p580, %p581
      %p584 = scmp.ne.s32.totalorder %s569, %s583
      %p585 = scmp.eq.s32.totalorder %s50, 0
      %p586 = por %p584, %p585
      %s587 = ssub.s32 %s44, %s51
      %p588 = scmp.eq.s32.totalorder %s587, 0
      %s590 = sadd.s32 %s589, 1
      %s591 = scalar_select %p588, %s589, %s590
      %p594 = pneg %p588
      %p595 = scmp.eq.s32.totalorder %s44, 1
      %p596 = por %p594, %p595
      %p597 = scmp.ne.s32.totalorder %s589, %s592
      %p598 = scmp.eq.s32.totalorder %s44, 0
      %p599 = por %p597, %p598
      %p600 = scmp.ne.s32.totalorder %s589, %s592
      %p601 = scmp.eq.s32.totalorder %s49, 1
      %p602 = por %p600, %p601
      %p603 = scmp.ne.s32.totalorder %s592, %s593
      %p604 = scmp.eq.s32.totalorder %s49, 0
      %p605 = por %p603, %p604
      %p606 = scmp.ne.s32.totalorder %s592, %s593
      %p607 = scmp.eq.s32.totalorder %s50, 1
      %p608 = por %p606, %p607
      %p610 = scmp.ne.s32.totalorder %s593, %s609
      %p611 = scmp.eq.s32.totalorder %s50, 0
      %p612 = por %p610, %p611
      %p613 = scmp.le.s32.totalorder 1, %s44
      %p614 = scmp.lt.s32.totalorder %s44, 3
      %p615 = pnand %p613, %p614
      %p616 = pneg %p615
      // Predicated region
      $region9: #{multimodal_forward.1} parent=5 // pred_check
        _
      $region10: #{multimodal_forward.1} parent=5 // pred_check_branch
        %618 = sbr.rel (%p615) target = $region12
      $region11: #{multimodal_forward.1} parent=5 // pred_region
        %s619 = ssub.s32 %s44, 1
        // Predicated region
        $region13: #{multimodal_forward.1} parent=11 // pred_check
          %p620 = pneg %p91
        $region14: #{multimodal_forward.1} parent=11 // pred_check_branch
          %622 = sbr.rel (%p620) target = $region16
        $region15: #{multimodal_forward.1} parent=11 // pred_region
          %s624 = ssub.s32 2048, 2048
          %625 = vsyncadd [#allocation9], %s624
          %s626 = sshll.u32 [#allocation8], 4
          %s627 = int_to_ptr.vmem [resolvable:$true] %s626
          %632 = dma.hbm_to_vmem [thread:$0]  %s1, 2048, %s627, [#allocation9], 128, 128, 8
        $region16: #{multimodal_forward.1} parent=11 // pred_fallthru
          _
        // Predicated region
        $region17: #{multimodal_forward.1} parent=11 // pred_check
          %p633 = pneg %p112
        $region18: #{multimodal_forward.1} parent=11 // pred_check_branch
          %635 = sbr.rel (%p633) target = $region20
        $region19: #{multimodal_forward.1} parent=11 // pred_region
          %s637 = ssub.s32 32, 32
          %638 = vsyncadd [#allocation12], %s637
          %s640 = sshll.u32 [#allocation11], 4
          %s641 = int_to_ptr.vmem [resolvable:$true] %s640
          %643 = dma.hbm_to_vmem [thread:$0]  %s2, 32, %s641, [#allocation12]
        $region20: #{multimodal_forward.1} parent=11 // pred_fallthru
          _
        // Predicated region
        $region21: #{multimodal_forward.1} parent=11 // pred_check
          %p644 = pneg %p133
        $region22: #{multimodal_forward.1} parent=11 // pred_check_branch
          %646 = sbr.rel (%p644) target = $region24
        $region23: #{multimodal_forward.1} parent=11 // pred_region
          _
        $region24: #{multimodal_forward.1} parent=11 // pred_fallthru
          _
        // Predicated region
        $region25: #{multimodal_forward.1} parent=11 // pred_check
          %p647 = pneg %p154
        $region26: #{multimodal_forward.1} parent=11 // pred_check_branch
          %649 = sbr.rel (%p647) target = $region28
        $region27: #{multimodal_forward.1} parent=11 // pred_region
          %s651 = ssub.s32 32, 32
          %652 = vsyncadd [#allocation12], %s651
          %s654 = sshll.u32 [#allocation13], 4
          %s655 = int_to_ptr.vmem [resolvable:$true] %s654
          %657 = dma.hbm_to_vmem [thread:$0]  %s4, 32, %s655, [#allocation12]
        $region28: #{multimodal_forward.1} parent=11 // pred_fallthru
          _
        // Predicated region
        $region29: #{multimodal_forward.1} parent=11 // pred_check
          %p658 = pneg %p175
        $region30: #{multimodal_forward.1} parent=11 // pred_check_branch
          %660 = sbr.rel (%p658) target = $region32
        $region31: #{multimodal_forward.1} parent=11 // pred_region
          _
        $region32: #{multimodal_forward.1} parent=11 // pred_fallthru
          _
        // Predicated region
        $region33: #{multimodal_forward.1} parent=11 // pred_check
          %p661 = pneg %p196
        $region34: #{multimodal_forward.1} parent=11 // pred_check_branch
          %663 = sbr.rel (%p661) target = $region36
        $region35: #{multimodal_forward.1} parent=11 // pred_region
          %s665 = ssub.s32 32, 32
          %666 = vsyncadd [#allocation15], %s665
          %s668 = sshll.u32 [#allocation14], 4
          %s669 = int_to_ptr.vmem [resolvable:$true] %s668
          %671 = dma.hbm_to_vmem [thread:$0]  %s6, 32, %s669, [#allocation15]
        $region36: #{multimodal_forward.1} parent=11 // pred_fallthru
          _
        // Predicated region
        $region37: #{multimodal_forward.1} parent=11 // pred_check
          %p672 = pneg %p217
        $region38: #{multimodal_forward.1} parent=11 // pred_check_branch
          %674 = sbr.rel (%p672) target = $region40
        $region39: #{multimodal_forward.1} parent=11 // pred_region
          _
        $region40: #{multimodal_forward.1} parent=11 // pred_fallthru
          _
        // Predicated region
        $region41: #{multimodal_forward.1} parent=11 // pred_check
          %p675 = pneg %p238
        $region42: #{multimodal_forward.1} parent=11 // pred_check_branch
          %677 = sbr.rel (%p675) target = $region44
        $region43: #{multimodal_forward.1} parent=11 // pred_region
          %s679 = ssub.s32 32, 32
          %680 = vsyncadd [#allocation15], %s679
          %s682 = sshll.u32 [#allocation16], 4
          %s683 = int_to_ptr.vmem [resolvable:$true] %s682
          %685 = dma.hbm_to_vmem [thread:$0]  %s8, 32, %s683, [#allocation15]
        $region44: #{multimodal_forward.1} parent=11 // pred_fallthru
          _
        // Predicated region
        $region45: #{multimodal_forward.1} parent=11 // pred_check
          %p686 = pneg %p285
        $region46: #{multimodal_forward.1} parent=11 // pred_check_branch
          %688 = sbr.rel (%p686) target = $region48
        $region47: #{multimodal_forward.1} parent=11 // pred_region
          %s690 = ssub.s32 12288, 12288
          %691 = vsyncadd [#allocation18], %s690
          %s692 = sshll.u32 [#allocation17], 4
          %s693 = int_to_ptr.vmem [resolvable:$true] %s692
          %698 = dma.hbm_to_vmem [thread:$0]  %s10, 12288, %s693, [#allocation18], 384, 384, 24
        $region48: #{multimodal_forward.1} parent=11 // pred_fallthru
          _
        // Predicated region
        $region49: #{multimodal_forward.1} parent=11 // pred_check
          %p699 = pneg %p306
        $region50: #{multimodal_forward.1} parent=11 // pred_check_branch
          %701 = sbr.rel (%p699) target = $region52
        $region51: #{multimodal_forward.1} parent=11 // pred_region
          %s703 = ssub.s32 96, 96
          %704 = vsyncadd [#allocation18], %s703
          %s705 = sshll.u32 [#allocation19], 4
          %s706 = int_to_ptr.vmem [resolvable:$true] %s705
          %711 = dma.hbm_to_vmem [thread:$0]  %s11, 96, %s706, [#allocation18], 48, 48, 3
        $region52: #{multimodal_forward.1} parent=11 // pred_fallthru
          _
        // Predicated region
        $region53: #{multimodal_forward.1} parent=11 // pred_check
          %p712 = pneg %p327
        $region54: #{multimodal_forward.1} parent=11 // pred_check_branch
          %714 = sbr.rel (%p712) target = $region56
        $region55: #{multimodal_forward.1} parent=11 // pred_region
          %s716 = ssub.s32 4096, 4096
          %717 = vsyncadd [#allocation21], %s716
          %s718 = sshll.u32 [#allocation20], 4
          %s719 = int_to_ptr.vmem [resolvable:$true] %s718
          %724 = dma.hbm_to_vmem [thread:$0]  %s12, 4096, %s719, [#allocation21], 128, 128, 8
        $region56: #{multimodal_forward.1} parent=11 // pred_fallthru
          _
        // Predicated region
        $region57: #{multimodal_forward.1} parent=11 // pred_check
          %p725 = pneg %p348
        $region58: #{multimodal_forward.1} parent=11 // pred_check_branch
          %727 = sbr.rel (%p725) target = $region60
        $region59: #{multimodal_forward.1} parent=11 // pred_region
          %s729 = ssub.s32 32, 32
          %730 = vsyncadd [#allocation21], %s729
          %s731 = sshll.u32 [#allocation22], 4
          %s732 = int_to_ptr.vmem [resolvable:$true] %s731
          %737 = dma.hbm_to_vmem [thread:$0]  %s13, 32, %s732, [#allocation21], 16, 16, 1
        $region60: #{multimodal_forward.1} parent=11 // pred_fallthru
          _
        // Predicated region
        $region61: #{multimodal_forward.1} parent=11 // pred_check
          %p738 = pneg %p369
        $region62: #{multimodal_forward.1} parent=11 // pred_check_branch
          %740 = sbr.rel (%p738) target = $region64
        $region63: #{multimodal_forward.1} parent=11 // pred_region
          %s742 = ssub.s32 4096, 4096
          %743 = vsyncadd [#allocation24], %s742
          %s744 = sshll.u32 [#allocation23], 4
          %s745 = int_to_ptr.vmem [resolvable:$true] %s744
          %750 = dma.hbm_to_vmem [thread:$0]  %s14, 4096, %s745, [#allocation24], 128, 128, 8
        $region64: #{multimodal_forward.1} parent=11 // pred_fallthru
          _
        // Predicated region
        $region65: #{multimodal_forward.1} parent=11 // pred_check
          %p751 = pneg %p390
        $region66: #{multimodal_forward.1} parent=11 // pred_check_branch
          %753 = sbr.rel (%p751) target = $region68
        $region67: #{multimodal_forward.1} parent=11 // pred_region
          %s755 = ssub.s32 32, 32
          %756 = vsyncadd [#allocation24], %s755
          %s757 = sshll.u32 [#allocation25], 4
          %s758 = int_to_ptr.vmem [resolvable:$true] %s757
          %763 = dma.hbm_to_vmem [thread:$0]  %s15, 32, %s758, [#allocation24], 16, 16, 1
        $region68: #{multimodal_forward.1} parent=11 // pred_fallthru
          _
        // Predicated region
        $region69: #{multimodal_forward.1} parent=11 // pred_check
          %p764 = pneg %p411
        $region70: #{multimodal_forward.1} parent=11 // pred_check_branch
          %766 = sbr.rel (%p764) target = $region72
        $region71: #{multimodal_forward.1} parent=11 // pred_region
          %s768 = ssub.s32 4096, 4096
          %769 = vsyncadd [#allocation27], %s768
          %s770 = sshll.u32 [#allocation26], 4
          %s771 = int_to_ptr.vmem [resolvable:$true] %s770
          %776 = dma.hbm_to_vmem [thread:$0]  %s16, 4096, %s771, [#allocation27], 128, 128, 8
        $region72: #{multimodal_forward.1} parent=11 // pred_fallthru
          _
        // Predicated region
        $region73: #{multimodal_forward.1} parent=11 // pred_check
          %p777 = pneg %p432
        $region74: #{multimodal_forward.1} parent=11 // pred_check_branch
          %779 = sbr.rel (%p777) target = $region76
        $region75: #{multimodal_forward.1} parent=11 // pred_region
          %s781 = ssub.s32 32, 32
          %782 = vsyncadd [#allocation27], %s781
          %s783 = sshll.u32 [#allocation28], 4
          %s784 = int_to_ptr.vmem [resolvable:$true] %s783
          %789 = dma.hbm_to_vmem [thread:$0]  %s17, 32, %s784, [#allocation27], 16, 16, 1
        $region76: #{multimodal_forward.1} parent=11 // pred_fallthru
          _
        // Predicated region
        $region77: #{multimodal_forward.1} parent=11 // pred_check
          %p790 = pneg %p453
        $region78: #{multimodal_forward.1} parent=11 // pred_check_branch
          %792 = sbr.rel (%p790) target = $region80
        $region79: #{multimodal_forward.1} parent=11 // pred_region
          %s794 = ssub.s32 128, 128
          %795 = vsyncadd [#allocation30], %s794
          %s796 = sshll.u32 [#allocation29], 4
          %s797 = int_to_ptr.vmem [resolvable:$true] %s796
          %802 = dma.hbm_to_vmem [thread:$0]  %s18, 128, %s797, [#allocation30], 64, 64, 4
        $region80: #{multimodal_forward.1} parent=11 // pred_fallthru
          _
        // Predicated region
        $region81: #{multimodal_forward.1} parent=11 // pred_check
          %p803 = pneg %p474
        $region82: #{multimodal_forward.1} parent=11 // pred_check_branch
          %805 = sbr.rel (%p803) target = $region84
        $region83: #{multimodal_forward.1} parent=11 // pred_region
          %s807 = ssub.s32 2048, 2048
          %808 = vsyncadd [#allocation30], %s807
          %s809 = sshll.u32 [#allocation31], 4
          %s810 = int_to_ptr.vmem [resolvable:$true] %s809
          %815 = dma.hbm_to_vmem [thread:$0]  %s19, 2048, %s810, [#allocation30], 128, 128, 8
        $region84: #{multimodal_forward.1} parent=11 // pred_fallthru
          _
        // Predicated region
        $region85: #{multimodal_forward.1} parent=11 // pred_check
          %p816 = pneg %p495
        $region86: #{multimodal_forward.1} parent=11 // pred_check_branch
          %818 = sbr.rel (%p816) target = $region88
        $region87: #{multimodal_forward.1} parent=11 // pred_region
          %s820 = ssub.s32 2048, 2048
          %821 = vsyncadd [#allocation33], %s820
          %s822 = sshll.u32 [#allocation32], 4
          %s823 = int_to_ptr.vmem [resolvable:$true] %s822
          %828 = dma.hbm_to_vmem [thread:$0]  %s20, 2048, %s823, [#allocation33], 128, 128, 8
        $region88: #{multimodal_forward.1} parent=11 // pred_fallthru
          _
        // Predicated region
        $region89: #{multimodal_forward.1} parent=11 // pred_check
          %p829 = pneg %p516
        $region90: #{multimodal_forward.1} parent=11 // pred_check_branch
          %831 = sbr.rel (%p829) target = $region92
        $region91: #{multimodal_forward.1} parent=11 // pred_region
          %s833 = ssub.s32 1024, 1024
          %834 = vsyncadd [#allocation33], %s833
          %s835 = sshll.u32 [#allocation34], 4
          %s836 = int_to_ptr.vmem [resolvable:$true] %s835
          %841 = dma.hbm_to_vmem [thread:$0]  %s21, 1024, %s836, [#allocation33], 128, 128, 8
        $region92: #{multimodal_forward.1} parent=11 // pred_fallthru
          _
        // Predicated region
        $region93: #{multimodal_forward.1} parent=11 // pred_check
          %p842 = pneg %p537
        $region94: #{multimodal_forward.1} parent=11 // pred_check_branch
          %844 = sbr.rel (%p842) target = $region96
        $region95: #{multimodal_forward.1} parent=11 // pred_region
          %s846 = ssub.s32 16, 16
          %847 = vsyncadd [#allocation36], %s846
          %s849 = sshll.u32 [#allocation35], 4
          %s850 = int_to_ptr.vmem [resolvable:$true] %s849
          %852 = dma.hbm_to_vmem [thread:$0]  %s22, 16, %s850, [#allocation36]
        $region96: #{multimodal_forward.1} parent=11 // pred_fallthru
          _
        // Predicated region
        $region97: #{multimodal_forward.1} parent=11 // pred_check
          %p853 = pneg %p558
        $region98: #{multimodal_forward.1} parent=11 // pred_check_branch
          %855 = sbr.rel (%p853) target = $region100
        $region99: #{multimodal_forward.1} parent=11 // pred_region
          _
        $region100: #{multimodal_forward.1} parent=11 // pred_fallthru
          _
        // Predicated region
        $region101: #{multimodal_forward.1} parent=11 // pred_check
          %p856 = pneg %p579
        $region102: #{multimodal_forward.1} parent=11 // pred_check_branch
          %858 = sbr.rel (%p856) target = $region104
        $region103: #{multimodal_forward.1} parent=11 // pred_region
          %s860 = ssub.s32 16, 16
          %861 = vsyncadd [#allocation36], %s860
          %s863 = sshll.u32 [#allocation37], 4
          %s864 = int_to_ptr.vmem [resolvable:$true] %s863
          %866 = dma.hbm_to_vmem [thread:$0]  %s24, 16, %s864, [#allocation36]
        $region104: #{multimodal_forward.1} parent=11 // pred_fallthru
          _
      $region12: #{multimodal_forward.1} parent=5 // pred_fallthru
        _
      %p867 = scmp.lt.s32.totalorder %s44, 2
      // Predicated region
      $region105: #{multimodal_forward.1} parent=5 // pred_check
        %p868 = pneg %p867
      $region106: #{multimodal_forward.1} parent=5 // pred_check_branch
        %870 = sbr.rel (%p868) target = $region108
      $region107: #{multimodal_forward.1} parent=5 // pred_region
        // Predicated region
        $region109: #{multimodal_forward.1} parent=107 // pred_check
          %p871 = pneg %p64
        $region110: #{multimodal_forward.1} parent=107 // pred_check_branch
          %873 = sbr.rel (%p871) target = $region112
        $region111: #{multimodal_forward.1} parent=107 // pred_region
          %p874 = scmp.lt.s32.totalorder %s44, 1
          %s875 = scalar_select %p874, %s44, 1
          %s876 = smul.addr %s875, 16
          %s877 = smul.addr %s876, 8
          %s878 = scalar_lea.vmem %s0, %s877
        $region112: #{multimodal_forward.1} parent=107 // pred_fallthru
          _
        // Predicated region
        $region113: #{multimodal_forward.1} parent=107 // pred_check
          %p879 = pneg %p258
        $region114: #{multimodal_forward.1} parent=107 // pred_check_branch
          %881 = sbr.rel (%p879) target = $region116
        $region115: #{multimodal_forward.1} parent=107 // pred_region
          %p882 = scmp.lt.s32.totalorder %s44, 1
          %s883 = scalar_select %p882, %s44, 1
          %s884 = smul.addr %s883, 8
          %s885 = scalar_lea.vmem %s9, %s884
        $region116: #{multimodal_forward.1} parent=107 // pred_fallthru
          _
      $region108: #{multimodal_forward.1} parent=5 // pred_fallthru
        _
      %p886 = scmp.le.s32.totalorder 1, %s44
      %p887 = scmp.lt.s32.totalorder %s44, 3
      %p888 = pnand %p886, %p887
      %p889 = pneg %p888
      // Predicated region
      $region117: #{multimodal_forward.1} parent=5 // pred_check
        _
      $region118: #{multimodal_forward.1} parent=5 // pred_check_branch
        %891 = sbr.rel (%p888) target = $region120
      $region119: #{multimodal_forward.1} parent=5 // pred_region
        %s892 = ssub.s32 %s44, 1
        // Predicated region
        $region121: #{multimodal_forward.1} parent=119 // pred_check
          %p893 = pneg %p91
        $region122: #{multimodal_forward.1} parent=119 // pred_check_branch
          %895 = sbr.rel (%p893) target = $region124
        $region123: #{multimodal_forward.1} parent=119 // pred_region
          %896 = dma.done [#allocation9], 2048
        $region124: #{multimodal_forward.1} parent=119 // pred_fallthru
          _
        // Predicated region
        $region125: #{multimodal_forward.1} parent=119 // pred_check
          %p897 = pneg %p112
        $region126: #{multimodal_forward.1} parent=119 // pred_check_branch
          %899 = sbr.rel (%p897) target = $region128
        $region127: #{multimodal_forward.1} parent=119 // pred_region
          %900 = dma.done [#allocation12], 32
        $region128: #{multimodal_forward.1} parent=119 // pred_fallthru
          _
        // Predicated region
        $region129: #{multimodal_forward.1} parent=119 // pred_check
          %p901 = pneg %p154
        $region130: #{multimodal_forward.1} parent=119 // pred_check_branch
          %903 = sbr.rel (%p901) target = $region132
        $region131: #{multimodal_forward.1} parent=119 // pred_region
          %904 = dma.done [#allocation12], 32
        $region132: #{multimodal_forward.1} parent=119 // pred_fallthru
          _
        // Predicated region
        $region133: #{multimodal_forward.1} parent=119 // pred_check
          %p905 = pneg %p196
        $region134: #{multimodal_forward.1} parent=119 // pred_check_branch
          %907 = sbr.rel (%p905) target = $region136
        $region135: #{multimodal_forward.1} parent=119 // pred_region
          %908 = dma.done [#allocation15], 32
        $region136: #{multimodal_forward.1} parent=119 // pred_fallthru
          _
        // Predicated region
        $region137: #{multimodal_forward.1} parent=119 // pred_check
          %p909 = pneg %p238
        $region138: #{multimodal_forward.1} parent=119 // pred_check_branch
          %911 = sbr.rel (%p909) target = $region140
        $region139: #{multimodal_forward.1} parent=119 // pred_region
          %912 = dma.done [#allocation15], 32
        $region140: #{multimodal_forward.1} parent=119 // pred_fallthru
          _
        // Predicated region
        $region141: #{multimodal_forward.1} parent=119 // pred_check
          %p913 = pneg %p285
        $region142: #{multimodal_forward.1} parent=119 // pred_check_branch
          %915 = sbr.rel (%p913) target = $region144
        $region143: #{multimodal_forward.1} parent=119 // pred_region
          %916 = dma.done [#allocation18], 12288
        $region144: #{multimodal_forward.1} parent=119 // pred_fallthru
          _
        // Predicated region
        $region145: #{multimodal_forward.1} parent=119 // pred_check
          %p917 = pneg %p306
        $region146: #{multimodal_forward.1} parent=119 // pred_check_branch
          %919 = sbr.rel (%p917) target = $region148
        $region147: #{multimodal_forward.1} parent=119 // pred_region
          %920 = dma.done [#allocation18], 96
        $region148: #{multimodal_forward.1} parent=119 // pred_fallthru
          _
        // Predicated region
        $region149: #{multimodal_forward.1} parent=119 // pred_check
          %p921 = pneg %p327
        $region150: #{multimodal_forward.1} parent=119 // pred_check_branch
          %923 = sbr.rel (%p921) target = $region152
        $region151: #{multimodal_forward.1} parent=119 // pred_region
          %924 = dma.done [#allocation21], 4096
        $region152: #{multimodal_forward.1} parent=119 // pred_fallthru
          _
        // Predicated region
        $region153: #{multimodal_forward.1} parent=119 // pred_check
          %p925 = pneg %p348
        $region154: #{multimodal_forward.1} parent=119 // pred_check_branch
          %927 = sbr.rel (%p925) target = $region156
        $region155: #{multimodal_forward.1} parent=119 // pred_region
          %928 = dma.done [#allocation21], 32
        $region156: #{multimodal_forward.1} parent=119 // pred_fallthru
          _
        // Predicated region
        $region157: #{multimodal_forward.1} parent=119 // pred_check
          %p929 = pneg %p369
        $region158: #{multimodal_forward.1} parent=119 // pred_check_branch
          %931 = sbr.rel (%p929) target = $region160
        $region159: #{multimodal_forward.1} parent=119 // pred_region
          %932 = dma.done [#allocation24], 4096
        $region160: #{multimodal_forward.1} parent=119 // pred_fallthru
          _
        // Predicated region
        $region161: #{multimodal_forward.1} parent=119 // pred_check
          %p933 = pneg %p390
        $region162: #{multimodal_forward.1} parent=119 // pred_check_branch
          %935 = sbr.rel (%p933) target = $region164
        $region163: #{multimodal_forward.1} parent=119 // pred_region
          %936 = dma.done [#allocation24], 32
        $region164: #{multimodal_forward.1} parent=119 // pred_fallthru
          _
        // Predicated region
        $region165: #{multimodal_forward.1} parent=119 // pred_check
          %p937 = pneg %p411
        $region166: #{multimodal_forward.1} parent=119 // pred_check_branch
          %939 = sbr.rel (%p937) target = $region168
        $region167: #{multimodal_forward.1} parent=119 // pred_region
          %940 = dma.done [#allocation27], 4096
        $region168: #{multimodal_forward.1} parent=119 // pred_fallthru
          _
        // Predicated region
        $region169: #{multimodal_forward.1} parent=119 // pred_check
          %p941 = pneg %p432
        $region170: #{multimodal_forward.1} parent=119 // pred_check_branch
          %943 = sbr.rel (%p941) target = $region172
        $region171: #{multimodal_forward.1} parent=119 // pred_region
          %944 = dma.done [#allocation27], 32
        $region172: #{multimodal_forward.1} parent=119 // pred_fallthru
          _
        // Predicated region
        $region173: #{multimodal_forward.1} parent=119 // pred_check
          %p945 = pneg %p453
        $region174: #{multimodal_forward.1} parent=119 // pred_check_branch
          %947 = sbr.rel (%p945) target = $region176
        $region175: #{multimodal_forward.1} parent=119 // pred_region
          %948 = dma.done [#allocation30], 128
        $region176: #{multimodal_forward.1} parent=119 // pred_fallthru
          _
        // Predicated region
        $region177: #{multimodal_forward.1} parent=119 // pred_check
          %p949 = pneg %p474
        $region178: #{multimodal_forward.1} parent=119 // pred_check_branch
          %951 = sbr.rel (%p949) target = $region180
        $region179: #{multimodal_forward.1} parent=119 // pred_region
          %952 = dma.done [#allocation30], 2048
        $region180: #{multimodal_forward.1} parent=119 // pred_fallthru
          _
        // Predicated region
        $region181: #{multimodal_forward.1} parent=119 // pred_check
          %p953 = pneg %p495
        $region182: #{multimodal_forward.1} parent=119 // pred_check_branch
          %955 = sbr.rel (%p953) target = $region184
        $region183: #{multimodal_forward.1} parent=119 // pred_region
          %956 = dma.done [#allocation33], 2048
        $region184: #{multimodal_forward.1} parent=119 // pred_fallthru
          _
        // Predicated region
        $region185: #{multimodal_forward.1} parent=119 // pred_check
          %p957 = pneg %p516
        $region186: #{multimodal_forward.1} parent=119 // pred_check_branch
          %959 = sbr.rel (%p957) target = $region188
        $region187: #{multimodal_forward.1} parent=119 // pred_region
          %960 = dma.done [#allocation33], 1024
        $region188: #{multimodal_forward.1} parent=119 // pred_fallthru
          _
        // Predicated region
        $region189: #{multimodal_forward.1} parent=119 // pred_check
          %p961 = pneg %p537
        $region190: #{multimodal_forward.1} parent=119 // pred_check_branch
          %963 = sbr.rel (%p961) target = $region192
        $region191: #{multimodal_forward.1} parent=119 // pred_region
          %964 = dma.done [#allocation36], 16
        $region192: #{multimodal_forward.1} parent=119 // pred_fallthru
          _
        // Predicated region
        $region193: #{multimodal_forward.1} parent=119 // pred_check
          %p965 = pneg %p579
        $region194: #{multimodal_forward.1} parent=119 // pred_check_branch
          %967 = sbr.rel (%p965) target = $region196
        $region195: #{multimodal_forward.1} parent=119 // pred_region
          %968 = dma.done [#allocation36], 16
        $region196: #{multimodal_forward.1} parent=119 // pred_fallthru
          _
        %p969 = scmp.lt.s32.totalorder %s49, 1
        %s970 = scalar_select %p969, %s49, 1
        %s971 = smul.addr %s970, 16
        %s972 = smul.addr %s971, 8
        %s973 = scalar_lea.vmem %s0, %s972
        %p974 = pneg %p70
        %p975 = pneg %p67
        %p976 = pneg %p91
        %p977 = pneg %p88
        %p978 = pneg %p112
        %p979 = pneg %p109
        %p980 = pneg %p133
        %p981 = pneg %p130
        %p982 = pneg %p154
        %p983 = pneg %p151
        %p984 = pneg %p175
        %p985 = pneg %p172
        %p986 = pneg %p196
        %p987 = pneg %p193
        %p988 = pneg %p217
        %p989 = pneg %p214
        %p990 = pneg %p238
        %p991 = pneg %p235
        %p992 = scmp.lt.s32.totalorder %s49, 1
        %s993 = scalar_select %p992, %s49, 1
        %s994 = smul.addr %s993, 8
        %s995 = scalar_lea.vmem %s9, %s994
        %p996 = pneg %p264
        %p997 = pneg %p261
        %p998 = pneg %p285
        %p999 = pneg %p282
        %p1000 = pneg %p306
        %p1001 = pneg %p303
        %p1002 = pneg %p327
        %p1003 = pneg %p324
        %p1004 = pneg %p348
        %p1005 = pneg %p345
        %p1006 = pneg %p369
        %p1007 = pneg %p366
        %p1008 = pneg %p390
        %p1009 = pneg %p387
        %p1010 = pneg %p411
        %p1011 = pneg %p408
        %p1012 = pneg %p432
        %p1013 = pneg %p429
        %p1014 = pneg %p453
        %p1015 = pneg %p450
        %p1016 = pneg %p474
        %p1017 = pneg %p471
        %p1018 = pneg %p495
        %p1019 = pneg %p492
        %p1020 = pneg %p516
        %p1021 = pneg %p513
        %p1022 = pneg %p537
        %p1023 = pneg %p534
        %p1024 = pneg %p558
        %p1025 = pneg %p555
        %p1026 = pneg %p579
        %p1027 = pneg %p576
        %p1028 = pneg %p605
        %p1029 = pneg %p602
        %s1030 = sand.u32 %s592, 1
        %s1031 = scalar_lea.sflag [#allocation10], %s1030
        %s1032 = sand.u32 %s592, 1
        %s1033 = scalar_lea.vmem [#allocation38], %s1032
        %p1034 = scmp.lt.s32.totalorder %s49, 1
        %s1035 = scalar_select %p1034, %s49, 1
        %s1036 = smul.addr %s1035, 16
        %s1037 = smul.addr %s1036, 8
        %s1038 = scalar_lea.vmem %s0, %s1037
        %p1039 = scmp.lt.s32.totalorder %s49, 1
        %s1040 = scalar_select %p1039, %s49, 1
        %s1041 = smul.addr %s1040, 8
        %s1042 = scalar_lea.vmem %s9, %s1041
        %v1043 = vld [vmem:[%s1038] sm:$0xff]
        %v1044 = vld [vmem:[%s1038 + $0x8] sm:$0xff]
        %v1045 = vld [vmem:[%s1038 + $0x10] sm:$0xff]
        %v1046 = vld [vmem:[%s1038 + $0x18] sm:$0xff]
        %v1047 = vld [vmem:[%s1038 + $0x20] sm:$0xff]
        %v1048 = vld [vmem:[%s1038 + $0x28] sm:$0xff]
        %v1049 = vld [vmem:[%s1038 + $0x30] sm:$0xff]
        %v1050 = vld [vmem:[%s1038 + $0x38] sm:$0xff]
        %v1051 = vld [vmem:[%s1038 + $0x40] sm:$0xff]
        %v1052 = vld [vmem:[%s1038 + $0x48] sm:$0xff]
        %v1053 = vld [vmem:[%s1038 + $0x50] sm:$0xff]
        %v1054 = vld [vmem:[%s1038 + $0x58] sm:$0xff]
        %v1055 = vld [vmem:[%s1038 + $0x60] sm:$0xff]
        %v1056 = vld [vmem:[%s1038 + $0x68] sm:$0xff]
        %v1057 = vld [vmem:[%s1038 + $0x70] sm:$0xff]
        %v1058 = vld [vmem:[%s1038 + $0x78] sm:$0xf]
        %v1059 = vld [vmem:[#allocation8] sm:$0xff]
        %v1060 = vld [vmem:[#allocation8 + $0x8] sm:$0xff]
        %v1061 = vld [vmem:[#allocation8 + $0x10] sm:$0xff]
        %v1062 = vld [vmem:[#allocation8 + $0x18] sm:$0xff]
        %v1063 = vld [vmem:[#allocation8 + $0x20] sm:$0xff]
        %v1064 = vld [vmem:[#allocation8 + $0x28] sm:$0xff]
        %v1065 = vld [vmem:[#allocation8 + $0x30] sm:$0xff]
        %v1066 = vld [vmem:[#allocation8 + $0x38] sm:$0xff]
        %v1067 = vld [vmem:[#allocation8 + $0x40] sm:$0xff]
        %v1068 = vld [vmem:[#allocation8 + $0x48] sm:$0xff]
        %v1069 = vld [vmem:[#allocation8 + $0x50] sm:$0xff]
        %v1070 = vld [vmem:[#allocation8 + $0x58] sm:$0xff]
        %v1071 = vld [vmem:[#allocation8 + $0x60] sm:$0xff]
        %v1072 = vld [vmem:[#allocation8 + $0x68] sm:$0xff]
        %v1073 = vld [vmem:[#allocation8 + $0x70] sm:$0xff]
        %v1074 = vld [vmem:[#allocation8 + $0x78] sm:$0xff]
        %1075 = vmatprep.subr.mxu0 0.0
        %1076 = vmatpush1.msra.mxu0 %v1059
        %1077 = vmatprep.subr.mxu0 0.0
        %1078 = vmatpush1.msra.mxu0 %v1060
        %1079 = vmatprep.subr.mxu0 0.0
        %1080 = vmatpush1.msra.mxu0 %v1061
        %1081 = vmatprep.subr.mxu0 0.0
        %1082 = vmatpush1.msra.mxu0 %v1062
        %1083 = vmatprep.subr.mxu0 0.0
        %1084 = vmatpush1.msra.mxu0 %v1063
        %1085 = vmatprep.subr.mxu0 0.0
        %1086 = vmatpush1.msra.mxu0 %v1064
        %1087 = vmatprep.subr.mxu0 0.0
        %1088 = vmatpush1.msra.mxu0 %v1065
        %1089 = vmatprep.subr.mxu0 0.0
        %1090 = vmatpush1.msra.mxu0 %v1066
        %1091 = vmatprep.subr.mxu0 0.0
        %1092 = vmatpush1.msra.mxu0 %v1067
        %1093 = vmatprep.subr.mxu0 0.0
        %1094 = vmatpush1.msra.mxu0 %v1068
        %1095 = vmatprep.subr.mxu0 0.0
        %1096 = vmatpush1.msra.mxu0 %v1069
        %1097 = vmatprep.subr.mxu0 0.0
        %1098 = vmatpush1.msra.mxu0 %v1070
        %1099 = vmatprep.subr.mxu0 0.0
        %1100 = vmatpush1.msra.mxu0 %v1071
        %1101 = vmatprep.subr.mxu0 0.0
        %1102 = vmatpush1.msra.mxu0 %v1072
        %1103 = vmatprep.subr.mxu0 0.0
        %1104 = vmatpush1.msra.mxu0 %v1073
        %1105 = vmatprep.subr.mxu0 0.0
        %1106 = vmatpush1.msra.mxu0 %v1074
        %1107 = vmatprep.subr.mxu0 0.0
        %1108 = vmatpush1.msra.mxu0 0.0
        %1109 = vmatprep.subr.mxu0 0.0
        %1110 = vmatpush1.msra.mxu0 0.0
        %1111 = vmatprep.subr.mxu0 0.0
        %1112 = vmatpush1.msra.mxu0 0.0
        %1113 = vmatprep.subr.mxu0 0.0
        %1114 = vmatpush1.msra.mxu0 0.0
        %1115 = vmatprep.subr.mxu0 0.0
        %1116 = vmatpush1.msra.mxu0 0.0
        %1117 = vmatprep.subr.mxu0 0.0
        %1118 = vmatpush1.msra.mxu0 0.0
        %1119 = vmatprep.subr.mxu0 0.0
        %1120 = vmatpush1.msra.mxu0 0.0
        %1121 = vmatprep.subr.mxu0 0.0
        %1122 = vmatpush1.msra.mxu0 0.0
        %1123 = vmatprep.subr.mxu0 0.0
        %1124 = vmatpush1.msra.mxu0 0.0
        %1125 = vmatprep.subr.mxu0 0.0
        %1126 = vmatpush1.msra.mxu0 0.0
        %1127 = vmatprep.subr.mxu0 0.0
        %1128 = vmatpush1.msra.mxu0 0.0
        %1129 = vmatprep.subr.mxu0 0.0
        %1130 = vmatpush1.msra.mxu0 0.0
        %1131 = vmatprep.subr.mxu0 0.0
        %1132 = vmatpush1.msra.mxu0 0.0
        %1133 = vmatprep.subr.mxu0 0.0
        %1134 = vmatpush1.msra.mxu0 0.0
        %1135 = vmatprep.subr.mxu0 0.0
        %1136 = vmatpush1.msra.mxu0 0.0
        %1137 = vmatprep.subr.mxu0 0.0
        %1138 = vmatpush1.msra.mxu0 0.0
        %1139 = vmatprep.mubr.f32.mxu0 0.0
        %1140 = vmatmul.mubr.f32.gmra.mrb[0].mxu0 %v1043
        %v1141 = vpop.f32.mrb[0].mxu0
        %v1142 = vadd.f32 0.0, %v1141
        %v1143 = vpop.f32.mrb[0].mxu0
        %1144 = vmatprep.mubr.f32.mxu0 0.0
        %1145 = vmatmul.mubr.f32.gmra.mrb[0].mxu0 %v1044
        %v1146 = vpop.f32.mrb[0].mxu0
        %v1147 = vadd.f32 0.0, %v1146
        %v1148 = vpop.f32.mrb[0].mxu0
        %1149 = vmatprep.mubr.f32.mxu0 0.0
        %1150 = vmatmul.mubr.f32.gmra.mrb[0].mxu0 %v1045
        %v1151 = vpop.f32.mrb[0].mxu0
        %v1152 = vadd.f32 0.0, %v1151
        %v1153 = vpop.f32.mrb[0].mxu0
        %1154 = vmatprep.mubr.f32.mxu0 0.0
        %1155 = vmatmul.mubr.f32.gmra.mrb[0].mxu0 %v1046
        %v1156 = vpop.f32.mrb[0].mxu0
        %v1157 = vadd.f32 0.0, %v1156
        %v1158 = vpop.f32.mrb[0].mxu0
        %1159 = vmatprep.mubr.f32.mxu0 0.0
        %1160 = vmatmul.mubr.f32.gmra.mrb[0].mxu0 %v1047
        %v1161 = vpop.f32.mrb[0].mxu0
        %v1162 = vadd.f32 0.0, %v1161
        %v1163 = vpop.f32.mrb[0].mxu0
        %1164 = vmatprep.mubr.f32.mxu0 0.0
        %1165 = vmatmul.mubr.f32.gmra.mrb[0].mxu0 %v1048
        %v1166 = vpop.f32.mrb[0].mxu0
        %v1167 = vadd.f32 0.0, %v1166
        %v1168 = vpop.f32.mrb[0].mxu0
        %1169 = vmatprep.mubr.f32.mxu0 0.0
        %1170 = vmatmul.mubr.f32.gmra.mrb[0].mxu0 %v1049
        %v1171 = vpop.f32.mrb[0].mxu0
        %v1172 = vadd.f32 0.0, %v1171
        %v1173 = vpop.f32.mrb[0].mxu0
        %1174 = vmatprep.mubr.f32.mxu0 0.0
        %1175 = vmatmul.mubr.f32.gmra.mrb[0].mxu0 %v1050
        %v1176 = vpop.f32.mrb[0].mxu0
        %v1177 = vadd.f32 0.0, %v1176
        %v1178 = vpop.f32.mrb[0].mxu0
        %1179 = vmatprep.mubr.f32.mxu0 0.0
        %1180 = vmatmul.mubr.f32.gmra.mrb[0].mxu0 %v1051
        %v1181 = vpop.f32.mrb[0].mxu0
        %v1182 = vadd.f32 0.0, %v1181
        %v1183 = vpop.f32.mrb[0].mxu0
        %1184 = vmatprep.mubr.f32.mxu0 0.0
        %1185 = vmatmul.mubr.f32.gmra.mrb[0].mxu0 %v1052
        %v1186 = vpop.f32.mrb[0].mxu0
        %v1187 = vadd.f32 0.0, %v1186
        %v1188 = vpop.f32.mrb[0].mxu0
        %1189 = vmatprep.mubr.f32.mxu0 0.0
        %1190 = vmatmul.mubr.f32.gmra.mrb[0].mxu0 %v1053
        %v1191 = vpop.f32.mrb[0].mxu0
        %v1192 = vadd.f32 0.0, %v1191
        %v1193 = vpop.f32.mrb[0].mxu0
        %1194 = vmatprep.mubr.f32.mxu0 0.0
        %1195 = vmatmul.mubr.f32.gmra.mrb[0].mxu0 %v1054
        %v1196 = vpop.f32.mrb[0].mxu0
        %v1197 = vadd.f32 0.0, %v1196
        %v1198 = vpop.f32.mrb[0].mxu0
        %1199 = vmatprep.mubr.f32.mxu0 0.0
        %1200 = vmatmul.mubr.f32.gmra.mrb[0].mxu0 %v1055
        %v1201 = vpop.f32.mrb[0].mxu0
        %v1202 = vadd.f32 0.0, %v1201
        %v1203 = vpop.f32.mrb[0].mxu0
        %1204 = vmatprep.mubr.f32.mxu0 0.0
        %1205 = vmatmul.mubr.f32.gmra.mrb[0].mxu0 %v1056
        %v1206 = vpop.f32.mrb[0].mxu0
        %v1207 = vadd.f32 0.0, %v1206
        %v1208 = vpop.f32.mrb[0].mxu0
        %1209 = vmatprep.mubr.f32.mxu0 0.0
        %1210 = vmatmul.mubr.f32.gmra.mrb[0].mxu0 %v1057
        %v1211 = vpop.f32.mrb[0].mxu0
        %v1212 = vadd.f32 0.0, %v1211
        %v1213 = vpop.f32.mrb[0].mxu0
        %1214 = vmatprep.mubr.f32.mxu0 0.0
        %1215 = vmatmul.mubr.f32.gmra.mrb[0].mxu0 %v1058
        %v1216 = vpop.f32.mrb[0].mxu0
        %v1217 = vadd.f32 0.0, %v1216
        %v1218 = vpop.f32.mrb[0].mxu0
        %1219 = vdwg.mxu0
        %v1220 = vld [vmem:[#allocation11] sm:$0x1]
        %v1221 = vlaneseq
        %v1222 = vshrl.u32 %v1221, 7
        %v1223 = vsub.s32 0, %v1222
        %v1224 = vrot.slane %v1220, %v1223
        %v1225 = vmul.f32 %v1142, %v1224
        %v1226 = vmul.f32 %v1147, %v1224
        %v1227 = vmul.f32 %v1152, %v1224
        %v1228 = vmul.f32 %v1157, %v1224
        %v1229 = vmul.f32 %v1162, %v1224
        %v1230 = vmul.f32 %v1167, %v1224
        %v1231 = vmul.f32 %v1172, %v1224
        %v1232 = vmul.f32 %v1177, %v1224
        %v1233 = vmul.f32 %v1182, %v1224
        %v1234 = vmul.f32 %v1187, %v1224
        %v1235 = vmul.f32 %v1192, %v1224
        %v1236 = vmul.f32 %v1197, %v1224
        %v1237 = vmul.f32 %v1202, %v1224
        %v1238 = vmul.f32 %v1207, %v1224
        %v1239 = vmul.f32 %v1212, %v1224
        %v1240 = vmul.f32 %v1217, %v1224
        %v1241 = vld [vmem:[#allocation11 + $0x1] sm:$0x1]
        %v1242 = vlaneseq
        %v1243 = vshrl.u32 %v1242, 7
        %v1244 = vsub.s32 0, %v1243
        %v1245 = vrot.slane %v1241, %v1244
        %v1246 = vadd.f32 %v1225, %v1245
        %v1247 = vadd.f32 %v1226, %v1245
        %v1248 = vadd.f32 %v1227, %v1245
        %v1249 = vadd.f32 %v1228, %v1245
        %v1250 = vadd.f32 %v1229, %v1245
        %v1251 = vadd.f32 %v1230, %v1245
        %v1252 = vadd.f32 %v1231, %v1245
        %v1253 = vadd.f32 %v1232, %v1245
        %v1254 = vadd.f32 %v1233, %v1245
        %v1255 = vadd.f32 %v1234, %v1245
        %v1256 = vadd.f32 %v1235, %v1245
        %v1257 = vadd.f32 %v1236, %v1245
        %v1258 = vadd.f32 %v1237, %v1245
        %v1259 = vadd.f32 %v1238, %v1245
        %v1260 = vadd.f32 %v1239, %v1245
        %v1261 = vadd.f32 %v1240, %v1245
        %v1262 = vmax.f32 %v1246, 0.0
        %v1263 = vmax.f32 %v1247, 0.0
        %v1264 = vmax.f32 %v1248, 0.0
        %v1265 = vmax.f32 %v1249, 0.0
        %v1266 = vmax.f32 %v1250, 0.0
        %v1267 = vmax.f32 %v1251, 0.0
        %v1268 = vmax.f32 %v1252, 0.0
        %v1269 = vmax.f32 %v1253, 0.0
        %v1270 = vmax.f32 %v1254, 0.0
        %v1271 = vmax.f32 %v1255, 0.0
        %v1272 = vmax.f32 %v1256, 0.0
        %v1273 = vmax.f32 %v1257, 0.0
        %v1274 = vmax.f32 %v1258, 0.0
        %v1275 = vmax.f32 %v1259, 0.0
        %v1276 = vmax.f32 %v1260, 0.0
        %v1277 = vmax.f32 %v1261, 0.0
        %1294 = vrot.lane.b32.xlu0 %v1262, 96
        %v1295 = vpop.permute.xlu0 %1294
        %1296 = vrot.lane.b32.xlu0 %v1263, 96
        %v1297 = vpop.permute.xlu0 %1296
        %1298 = vrot.lane.b32.xlu0 %v1264, 96
        %v1299 = vpop.permute.xlu0 %1298
        %1300 = vrot.lane.b32.xlu0 %v1265, 96
        %v1301 = vpop.permute.xlu0 %1300
        %1302 = vrot.lane.b32.xlu0 %v1266, 96
        %v1303 = vpop.permute.xlu0 %1302
        %1304 = vrot.lane.b32.xlu0 %v1267, 96
        %v1305 = vpop.permute.xlu0 %1304
        %1306 = vrot.lane.b32.xlu0 %v1268, 96
        %v1307 = vpop.permute.xlu0 %1306
        %1308 = vrot.lane.b32.xlu0 %v1269, 96
        %v1309 = vpop.permute.xlu0 %1308
        %1310 = vrot.lane.b32.xlu0 %v1270, 96
        %v1311 = vpop.permute.xlu0 %1310
        %1312 = vrot.lane.b32.xlu0 %v1271, 96
        %v1313 = vpop.permute.xlu0 %1312
        %1314 = vrot.lane.b32.xlu0 %v1272, 96
        %v1315 = vpop.permute.xlu0 %1314
        %1316 = vrot.lane.b32.xlu0 %v1273, 96
        %v1317 = vpop.permute.xlu0 %1316
        %1318 = vrot.lane.b32.xlu0 %v1274, 96
        %v1319 = vpop.permute.xlu0 %1318
        %1320 = vrot.lane.b32.xlu0 %v1275, 96
        %v1321 = vpop.permute.xlu0 %1320
        %1322 = vrot.lane.b32.xlu0 %v1276, 96
        %v1323 = vpop.permute.xlu0 %1322
        %1324 = vrot.lane.b32.xlu0 %v1277, 96
        %v1325 = vpop.permute.xlu0 %1324
        %v1342 = vmax.f32 %v1262, %v1295
        %v1343 = vmax.f32 %v1263, %v1297
        %v1344 = vmax.f32 %v1264, %v1299
        %v1345 = vmax.f32 %v1265, %v1301
        %v1346 = vmax.f32 %v1266, %v1303
        %v1347 = vmax.f32 %v1267, %v1305
        %v1348 = vmax.f32 %v1268, %v1307
        %v1349 = vmax.f32 %v1269, %v1309
        %v1350 = vmax.f32 %v1270, %v1311
        %v1351 = vmax.f32 %v1271, %v1313
        %v1352 = vmax.f32 %v1272, %v1315
        %v1353 = vmax.f32 %v1273, %v1317
        %v1354 = vmax.f32 %v1274, %v1319
        %v1355 = vmax.f32 %v1275, %v1321
        %v1356 = vmax.f32 %v1276, %v1323
        %v1357 = vmax.f32 %v1277, %v1325
        %1374 = vrot.lane.b32.xlu0 %v1342, 64
        %v1375 = vpop.permute.xlu0 %1374
        %1376 = vrot.lane.b32.xlu0 %v1343, 64
        %v1377 = vpop.permute.xlu0 %1376
        %1378 = vrot.lane.b32.xlu0 %v1344, 64
        %v1379 = vpop.permute.xlu0 %1378
        %1380 = vrot.lane.b32.xlu0 %v1345, 64
        %v1381 = vpop.permute.xlu0 %1380
        %1382 = vrot.lane.b32.xlu0 %v1346, 64
        %v1383 = vpop.permute.xlu0 %1382
        %1384 = vrot.lane.b32.xlu0 %v1347, 64
        %v1385 = vpop.permute.xlu0 %1384
        %1386 = vrot.lane.b32.xlu0 %v1348, 64
        %v1387 = vpop.permute.xlu0 %1386
        %1388 = vrot.lane.b32.xlu0 %v1349, 64
        %v1389 = vpop.permute.xlu0 %1388
        %1390 = vrot.lane.b32.xlu0 %v1350, 64
        %v1391 = vpop.permute.xlu0 %1390
        %1392 = vrot.lane.b32.xlu0 %v1351, 64
        %v1393 = vpop.permute.xlu0 %1392
        %1394 = vrot.lane.b32.xlu0 %v1352, 64
        %v1395 = vpop.permute.xlu0 %1394
        %1396 = vrot.lane.b32.xlu0 %v1353, 64
        %v1397 = vpop.permute.xlu0 %1396
        %1398 = vrot.lane.b32.xlu0 %v1354, 64
        %v1399 = vpop.permute.xlu0 %1398
        %1400 = vrot.lane.b32.xlu0 %v1355, 64
        %v1401 = vpop.permute.xlu0 %1400
        %1402 = vrot.lane.b32.xlu0 %v1356, 64
        %v1403 = vpop.permute.xlu0 %1402
        %1404 = vrot.lane.b32.xlu0 %v1357, 64
        %v1405 = vpop.permute.xlu0 %1404
        %v1422 = vmax.f32 %v1342, %v1375
        %v1423 = vmax.f32 %v1343, %v1377
        %v1424 = vmax.f32 %v1344, %v1379
        %v1425 = vmax.f32 %v1345, %v1381
        %v1426 = vmax.f32 %v1346, %v1383
        %v1427 = vmax.f32 %v1347, %v1385
        %v1428 = vmax.f32 %v1348, %v1387
        %v1429 = vmax.f32 %v1349, %v1389
        %v1430 = vmax.f32 %v1350, %v1391
        %v1431 = vmax.f32 %v1351, %v1393
        %v1432 = vmax.f32 %v1352, %v1395
        %v1433 = vmax.f32 %v1353, %v1397
        %v1434 = vmax.f32 %v1354, %v1399
        %v1435 = vmax.f32 %v1355, %v1401
        %v1436 = vmax.f32 %v1356, %v1403
        %v1437 = vmax.f32 %v1357, %v1405
        %vm1438 = vcmask 261120
        %1439 = vst.msk [vmem:[#allocation2] sm:$0xff] %vm1438, %v1422
        %1440 = vst.msk [vmem:[#allocation2 + $0x8] sm:$0xff] %vm1438, %v1423
        %1441 = vst.msk [vmem:[#allocation2 + $0x10] sm:$0xff] %vm1438, %v1424
        %1442 = vst.msk [vmem:[#allocation2 + $0x18] sm:$0xff] %vm1438, %v1425
        %1443 = vst.msk [vmem:[#allocation2 + $0x20] sm:$0xff] %vm1438, %v1426
        %1444 = vst.msk [vmem:[#allocation2 + $0x28] sm:$0xff] %vm1438, %v1427
        %1445 = vst.msk [vmem:[#allocation2 + $0x30] sm:$0xff] %vm1438, %v1428
        %1446 = vst.msk [vmem:[#allocation2 + $0x38] sm:$0xff] %vm1438, %v1429
        %1447 = vst.msk [vmem:[#allocation2 + $0x40] sm:$0xff] %vm1438, %v1430
        %1448 = vst.msk [vmem:[#allocation2 + $0x48] sm:$0xff] %vm1438, %v1431
        %1449 = vst.msk [vmem:[#allocation2 + $0x50] sm:$0xff] %vm1438, %v1432
        %1450 = vst.msk [vmem:[#allocation2 + $0x58] sm:$0xff] %vm1438, %v1433
        %1451 = vst.msk [vmem:[#allocation2 + $0x60] sm:$0xff] %vm1438, %v1434
        %1452 = vst.msk [vmem:[#allocation2 + $0x68] sm:$0xff] %vm1438, %v1435
        %1453 = vst.msk [vmem:[#allocation2 + $0x70] sm:$0xff] %vm1438, %v1436
        %vm1454 = vcmask 257024
        %1455 = vst.msk [vmem:[#allocation2 + $0x78] sm:$0xf] %vm1454, %v1437
        %v1456 = vld [vmem:[#allocation2] sm:$0xff]
        %v1457 = vld [vmem:[#allocation2 + $0x8] sm:$0xff]
        %v1458 = vld [vmem:[#allocation2 + $0x10] sm:$0xff]
        %v1459 = vld [vmem:[#allocation2 + $0x18] sm:$0xff]
        %v1460 = vld [vmem:[#allocation2 + $0x20] sm:$0xff]
        %v1461 = vld [vmem:[#allocation2 + $0x28] sm:$0xff]
        %v1462 = vld [vmem:[#allocation2 + $0x30] sm:$0xff]
        %v1463 = vld [vmem:[#allocation2 + $0x38] sm:$0xff]
        %v1464 = vld [vmem:[#allocation2 + $0x40] sm:$0xff]
        %v1465 = vld [vmem:[#allocation2 + $0x48] sm:$0xff]
        %v1466 = vld [vmem:[#allocation2 + $0x50] sm:$0xff]
        %v1467 = vld [vmem:[#allocation2 + $0x58] sm:$0xff]
        %v1468 = vld [vmem:[#allocation2 + $0x60] sm:$0xff]
        %v1469 = vld [vmem:[#allocation2 + $0x68] sm:$0xff]
        %v1470 = vld [vmem:[#allocation2 + $0x70] sm:$0xff]
        %v1471 = vld [vmem:[#allocation2 + $0x78] sm:$0x3]
        %v1472 = vld [vmem:[%s3] sm:$0xff]
        %v1473 = vld [vmem:[%s3 + $0x8] sm:$0xff]
        %v1474 = vld [vmem:[%s3 + $0x10] sm:$0xff]
        %v1475 = vld [vmem:[%s3 + $0x18] sm:$0xff]
        %v1476 = vld [vmem:[#allocation2 + $0x1] sm:$0xff]
        %v1477 = vld [vmem:[#allocation2 + $0x9] sm:$0xff]
        %v1478 = vld [vmem:[#allocation2 + $0x11] sm:$0xff]
        %v1479 = vld [vmem:[#allocation2 + $0x19] sm:$0xff]
        %v1480 = vld [vmem:[#allocation2 + $0x21] sm:$0xff]
        %v1481 = vld [vmem:[#allocation2 + $0x29] sm:$0xff]
        %v1482 = vld [vmem:[#allocation2 + $0x31] sm:$0xff]
        %v1483 = vld [vmem:[#allocation2 + $0x39] sm:$0xff]
        %v1484 = vld [vmem:[#allocation2 + $0x41] sm:$0xff]
        %v1485 = vld [vmem:[#allocation2 + $0x49] sm:$0xff]
        %v1486 = vld [vmem:[#allocation2 + $0x51] sm:$0xff]
        %v1487 = vld [vmem:[#allocation2 + $0x59] sm:$0xff]
        %v1488 = vld [vmem:[#allocation2 + $0x61] sm:$0xff]
        %v1489 = vld [vmem:[#allocation2 + $0x69] sm:$0xff]
        %v1490 = vld [vmem:[#allocation2 + $0x71] sm:$0xff]
        %v1491 = vld [vmem:[#allocation2 + $0x79] sm:$0x3]
        %v1492 = vld [vmem:[%s3 + $0x20] sm:$0xff]
        %v1493 = vld [vmem:[%s3 + $0x28] sm:$0xff]
        %v1494 = vld [vmem:[%s3 + $0x30] sm:$0xff]
        %v1495 = vld [vmem:[%s3 + $0x38] sm:$0xff]
        %v1497 = vsel %vm1438, %v1476, 0
        %v1500 = vsel %vm1438, %v1477, 0
        %v1503 = vsel %vm1438, %v1478, 0
        %v1506 = vsel %vm1438, %v1479, 0
        %v1509 = vsel %vm1438, %v1480, 0
        %v1512 = vsel %vm1438, %v1481, 0
        %v1515 = vsel %vm1438, %v1482, 0
        %v1518 = vsel %vm1438, %v1483, 0
        %v1521 = vsel %vm1438, %v1484, 0
        %v1524 = vsel %vm1438, %v1485, 0
        %v1527 = vsel %vm1438, %v1486, 0
        %v1530 = vsel %vm1438, %v1487, 0
        %v1533 = vsel %vm1438, %v1488, 0
        %v1536 = vsel %vm1438, %v1489, 0
        %v1539 = vsel %vm1438, %v1490, 0
        %v1542 = vsel %vm1438, %v1491, 0
        %1544 = vmatprep.subr.mxu0 0.0
        %1545 = vmatpush1.msra.mxu0 %v1492
        %1546 = vmatprep.subr.mxu0 0.0
        %1547 = vmatpush1.msra.mxu0 %v1493
        %1548 = vmatprep.subr.mxu0 0.0
        %1549 = vmatpush1.msra.mxu0 %v1494
        %1550 = vmatprep.subr.mxu0 0.0
        %1551 = vmatpush1.msra.mxu0 %v1495
        %1552 = vmatprep.subr.mxu0 0.0
        %1553 = vmatpush1.msra.mxu0 0.0
        %1554 = vmatprep.subr.mxu0 0.0
        %1555 = vmatpush1.msra.mxu0 0.0
        %1556 = vmatprep.subr.mxu0 0.0
        %1557 = vmatpush1.msra.mxu0 0.0
        %1558 = vmatprep.subr.mxu0 0.0
        %1559 = vmatpush1.msra.mxu0 0.0
        %1560 = vmatprep.subr.mxu0 0.0
        %1561 = vmatpush1.msra.mxu0 0.0
        %1562 = vmatprep.subr.mxu0 0.0
        %1563 = vmatpush1.msra.mxu0 0.0
        %1564 = vmatprep.subr.mxu0 0.0
        %1565 = vmatpush1.msra.mxu0 0.0
        %1566 = vmatprep.subr.mxu0 0.0
        %1567 = vmatpush1.msra.mxu0 0.0
        %1568 = vmatprep.subr.mxu0 0.0
        %1569 = vmatpush1.msra.mxu0 0.0
        %1570 = vmatprep.subr.mxu0 0.0
        %1571 = vmatpush1.msra.mxu0 0.0
        %1572 = vmatprep.subr.mxu0 0.0
        %1573 = vmatpush1.msra.mxu0 0.0
        %1574 = vmatprep.subr.mxu0 0.0
        %1575 = vmatpush1.msra.mxu0 0.0
        %1576 = vmatprep.subr.mxu0 0.0
        %1577 = vmatpush1.msra.mxu0 0.0
        %1578 = vmatprep.subr.mxu0 0.0
        %1579 = vmatpush1.msra.mxu0 0.0
        %1580 = vmatprep.subr.mxu0 0.0
        %1581 = vmatpush1.msra.mxu0 0.0
        %1582 = vmatprep.subr.mxu0 0.0
        %1583 = vmatpush1.msra.mxu0 0.0
        %1584 = vmatprep.subr.mxu0 0.0
        %1585 = vmatpush1.msra.mxu0 0.0
        %1586 = vmatprep.subr.mxu0 0.0
        %1587 = vmatpush1.msra.mxu0 0.0
        %1588 = vmatprep.subr.mxu0 0.0
        %1589 = vmatpush1.msra.mxu0 0.0
        %1590 = vmatprep.subr.mxu0 0.0
        %1591 = vmatpush1.msra.mxu0 0.0
        %1592 = vmatprep.subr.mxu0 0.0
        %1593 = vmatpush1.msra.mxu0 0.0
        %1594 = vmatprep.subr.mxu0 0.0
        %1595 = vmatpush1.msra.mxu0 0.0
        %1596 = vmatprep.subr.mxu0 0.0
        %1597 = vmatpush1.msra.mxu0 0.0
        %1598 = vmatprep.subr.mxu0 0.0
        %1599 = vmatpush1.msra.mxu0 0.0
        %1600 = vmatprep.subr.mxu0 0.0
        %1601 = vmatpush1.msra.mxu0 0.0
        %1602 = vmatprep.subr.mxu0 0.0
        %1603 = vmatpush1.msra.mxu0 0.0
        %1604 = vmatprep.subr.mxu0 0.0
        %1605 = vmatpush1.msra.mxu0 0.0
        %1606 = vmatprep.subr.mxu0 0.0
        %1607 = vmatpush1.msra.mxu0 0.0
        %1608 = vmatprep.mubr.f32.mxu0 0.0
        %1609 = vmatmul.mubr.f32.gmra.mrb[0].mxu0 %v1497
        %v1610 = vpop.f32.mrb[0].mxu0
        %v1611 = vadd.f32 0.0, %v1610
        %v1612 = vpop.f32.mrb[0].mxu0
        %1613 = vmatprep.mubr.f32.mxu0 0.0
        %1614 = vmatmul.mubr.f32.gmra.mrb[0].mxu0 %v1500
        %v1615 = vpop.f32.mrb[0].mxu0
        %v1616 = vadd.f32 0.0, %v1615
        %v1617 = vpop.f32.mrb[0].mxu0
        %1618 = vmatprep.mubr.f32.mxu0 0.0
        %1619 = vmatmul.mubr.f32.gmra.mrb[0].mxu0 %v1503
        %v1620 = vpop.f32.mrb[0].mxu0
        %v1621 = vadd.f32 0.0, %v1620
        %v1622 = vpop.f32.mrb[0].mxu0
        %1623 = vmatprep.mubr.f32.mxu0 0.0
        %1624 = vmatmul.mubr.f32.gmra.mrb[0].mxu0 %v1506
        %v1625 = vpop.f32.mrb[0].mxu0
        %v1626 = vadd.f32 0.0, %v1625
        %v1627 = vpop.f32.mrb[0].mxu0
        %1628 = vmatprep.mubr.f32.mxu0 0.0
        %1629 = vmatmul.mubr.f32.gmra.mrb[0].mxu0 %v1509
        %v1630 = vpop.f32.mrb[0].mxu0
        %v1631 = vadd.f32 0.0, %v1630
        %v1632 = vpop.f32.mrb[0].mxu0
        %1633 = vmatprep.mubr.f32.mxu0 0.0
        %1634 = vmatmul.mubr.f32.gmra.mrb[0].mxu0 %v1512
        %v1635 = vpop.f32.mrb[0].mxu0
        %v1636 = vadd.f32 0.0, %v1635
        %v1637 = vpop.f32.mrb[0].mxu0
        %1638 = vmatprep.mubr.f32.mxu0 0.0
        %1639 = vmatmul.mubr.f32.gmra.mrb[0].mxu0 %v1515
        %v1640 = vpop.f32.mrb[0].mxu0
        %v1641 = vadd.f32 0.0, %v1640
        %v1642 = vpop.f32.mrb[0].mxu0
        %1643 = vmatprep.mubr.f32.mxu0 0.0
        %1644 = vmatmul.mubr.f32.gmra.mrb[0].mxu0 %v1518
        %v1645 = vpop.f32.mrb[0].mxu0
        %v1646 = vadd.f32 0.0, %v1645
        %v1647 = vpop.f32.mrb[0].mxu0
        %1648 = vmatprep.mubr.f32.mxu0 0.0
        %1649 = vmatmul.mubr.f32.gmra.mrb[0].mxu0 %v1521
        %v1650 = vpop.f32.mrb[0].mxu0
        %v1651 = vadd.f32 0.0, %v1650
        %v1652 = vpop.f32.mrb[0].mxu0
        %1653 = vmatprep.mubr.f32.mxu0 0.0
        %1654 = vmatmul.mubr.f32.gmra.mrb[0].mxu0 %v1524
        %v1655 = vpop.f32.mrb[0].mxu0
        %v1656 = vadd.f32 0.0, %v1655
        %v1657 = vpop.f32.mrb[0].mxu0
        %1658 = vmatprep.mubr.f32.mxu0 0.0
        %1659 = vmatmul.mubr.f32.gmra.mrb[0].mxu0 %v1527
        %v1660 = vpop.f32.mrb[0].mxu0
        %v1661 = vadd.f32 0.0, %v1660
        %v1662 = vpop.f32.mrb[0].mxu0
        %1663 = vmatprep.mubr.f32.mxu0 0.0
        %1664 = vmatmul.mubr.f32.gmra.mrb[0].mxu0 %v1530
        %v1665 = vpop.f32.mrb[0].mxu0
        %v1666 = vadd.f32 0.0, %v1665
        %v1667 = vpop.f32.mrb[0].mxu0
        %1668 = vmatprep.mubr.f32.mxu0 0.0
        %1669 = vmatmul.mubr.f32.gmra.mrb[0].mxu0 %v1533
        %v1670 = vpop.f32.mrb[0].mxu0
        %v1671 = vadd.f32 0.0, %v1670
        %v1672 = vpop.f32.mrb[0].mxu0
        %1673 = vmatprep.mubr.f32.mxu0 0.0
        %1674 = vmatmul.mubr.f32.gmra.mrb[0].mxu0 %v1536
        %v1675 = vpop.f32.mrb[0].mxu0
        %v1676 = vadd.f32 0.0, %v1675
        %v1677 = vpop.f32.mrb[0].mxu0
        %1678 = vmatprep.mubr.f32.mxu0 0.0
        %1679 = vmatmul.mubr.f32.gmra.mrb[0].mxu0 %v1539
        %v1680 = vpop.f32.mrb[0].mxu0
        %v1681 = vadd.f32 0.0, %v1680
        %v1682 = vpop.f32.mrb[0].mxu0
        %1683 = vmatprep.mubr.f32.mxu0 0.0
        %1684 = vmatmul.mubr.f32.gmra.mrb[0].mxu0 %v1542
        %v1685 = vpop.f32.mrb[0].mxu0
        %v1686 = vadd.f32 0.0, %v1685
        %v1687 = vpop.f32.mrb[0].mxu0
        %1688 = vdwg.mxu0
        %v1690 = vsel %vm1438, %v1456, 0
        %v1693 = vsel %vm1438, %v1457, 0
        %v1696 = vsel %vm1438, %v1458, 0
        %v1699 = vsel %vm1438, %v1459, 0
        %v1702 = vsel %vm1438, %v1460, 0
        %v1705 = vsel %vm1438, %v1461, 0
        %v1708 = vsel %vm1438, %v1462, 0
        %v1711 = vsel %vm1438, %v1463, 0
        %v1714 = vsel %vm1438, %v1464, 0
        %v1717 = vsel %vm1438, %v1465, 0
        %v1720 = vsel %vm1438, %v1466, 0
        %v1723 = vsel %vm1438, %v1467, 0
        %v1726 = vsel %vm1438, %v1468, 0
        %v1729 = vsel %vm1438, %v1469, 0
        %v1732 = vsel %vm1438, %v1470, 0
        %v1735 = vsel %vm1438, %v1471, 0
        %1737 = vmatprep.subr.mxu0 0.0
        %1738 = vmatpush1.msra.mxu0 %v1472
        %1739 = vmatprep.subr.mxu0 0.0
        %1740 = vmatpush1.msra.mxu0 %v1473
        %1741 = vmatprep.subr.mxu0 0.0
        %1742 = vmatpush1.msra.mxu0 %v1474
        %1743 = vmatprep.subr.mxu0 0.0
        %1744 = vmatpush1.msra.mxu0 %v1475
        %1745 = vmatprep.subr.mxu0 0.0
        %1746 = vmatpush1.msra.mxu0 0.0
        %1747 = vmatprep.subr.mxu0 0.0
        %1748 = vmatpush1.msra.mxu0 0.0
        %1749 = vmatprep.subr.mxu0 0.0
        %1750 = vmatpush1.msra.mxu0 0.0
        %1751 = vmatprep.subr.mxu0 0.0
        %1752 = vmatpush1.msra.mxu0 0.0
        %1753 = vmatprep.subr.mxu0 0.0
        %1754 = vmatpush1.msra.mxu0 0.0
        %1755 = vmatprep.subr.mxu0 0.0
        %1756 = vmatpush1.msra.mxu0 0.0
        %1757 = vmatprep.subr.mxu0 0.0
        %1758 = vmatpush1.msra.mxu0 0.0
        %1759 = vmatprep.subr.mxu0 0.0
        %1760 = vmatpush1.msra.mxu0 0.0
        %1761 = vmatprep.subr.mxu0 0.0
        %1762 = vmatpush1.msra.mxu0 0.0
        %1763 = vmatprep.subr.mxu0 0.0
        %1764 = vmatpush1.msra.mxu0 0.0
        %1765 = vmatprep.subr.mxu0 0.0
        %1766 = vmatpush1.msra.mxu0 0.0
        %1767 = vmatprep.subr.mxu0 0.0
        %1768 = vmatpush1.msra.mxu0 0.0
        %1769 = vmatprep.subr.mxu0 0.0
        %1770 = vmatpush1.msra.mxu0 0.0
        %1771 = vmatprep.subr.mxu0 0.0
        %1772 = vmatpush1.msra.mxu0 0.0
        %1773 = vmatprep.subr.mxu0 0.0
        %1774 = vmatpush1.msra.mxu0 0.0
        %1775 = vmatprep.subr.mxu0 0.0
        %1776 = vmatpush1.msra.mxu0 0.0
        %1777 = vmatprep.subr.mxu0 0.0
        %1778 = vmatpush1.msra.mxu0 0.0
        %1779 = vmatprep.subr.mxu0 0.0
        %1780 = vmatpush1.msra.mxu0 0.0
        %1781 = vmatprep.subr.mxu0 0.0
        %1782 = vmatpush1.msra.mxu0 0.0
        %1783 = vmatprep.subr.mxu0 0.0
        %1784 = vmatpush1.msra.mxu0 0.0
        %1785 = vmatprep.subr.mxu0 0.0
        %1786 = vmatpush1.msra.mxu0 0.0
        %1787 = vmatprep.subr.mxu0 0.0
        %1788 = vmatpush1.msra.mxu0 0.0
        %1789 = vmatprep.subr.mxu0 0.0
        %1790 = vmatpush1.msra.mxu0 0.0
        %1791 = vmatprep.subr.mxu0 0.0
        %1792 = vmatpush1.msra.mxu0 0.0
        %1793 = vmatprep.subr.mxu0 0.0
        %1794 = vmatpush1.msra.mxu0 0.0
        %1795 = vmatprep.subr.mxu0 0.0
        %1796 = vmatpush1.msra.mxu0 0.0
        %1797 = vmatprep.subr.mxu0 0.0
        %1798 = vmatpush1.msra.mxu0 0.0
        %1799 = vmatprep.subr.mxu0 0.0
        %1800 = vmatpush1.msra.mxu0 0.0
        %1801 = vmatprep.mubr.f32.mxu0 0.0
        %1802 = vmatmul.mubr.f32.gmra.mrb[0].mxu0 %v1690
        %v1803 = vpop.f32.mrb[0].mxu0
        %v1804 = vadd.f32 %v1611, %v1803
        %v1805 = vpop.f32.mrb[0].mxu0
        %1806 = vmatprep.mubr.f32.mxu0 0.0
        %1807 = vmatmul.mubr.f32.gmra.mrb[0].mxu0 %v1693
        %v1808 = vpop.f32.mrb[0].mxu0
        %v1809 = vadd.f32 %v1616, %v1808
        %v1810 = vpop.f32.mrb[0].mxu0
        %1811 = vmatprep.mubr.f32.mxu0 0.0
        %1812 = vmatmul.mubr.f32.gmra.mrb[0].mxu0 %v1696
        %v1813 = vpop.f32.mrb[0].mxu0
        %v1814 = vadd.f32 %v1621, %v1813
        %v1815 = vpop.f32.mrb[0].mxu0
        %1816 = vmatprep.mubr.f32.mxu0 0.0
        %1817 = vmatmul.mubr.f32.gmra.mrb[0].mxu0 %v1699
        %v1818 = vpop.f32.mrb[0].mxu0
        %v1819 = vadd.f32 %v1626, %v1818
        %v1820 = vpop.f32.mrb[0].mxu0
        %1821 = vmatprep.mubr.f32.mxu0 0.0
        %1822 = vmatmul.mubr.f32.gmra.mrb[0].mxu0 %v1702
        %v1823 = vpop.f32.mrb[0].mxu0
        %v1824 = vadd.f32 %v1631, %v1823
        %v1825 = vpop.f32.mrb[0].mxu0
        %1826 = vmatprep.mubr.f32.mxu0 0.0
        %1827 = vmatmul.mubr.f32.gmra.mrb[0].mxu0 %v1705
        %v1828 = vpop.f32.mrb[0].mxu0
        %v1829 = vadd.f32 %v1636, %v1828
        %v1830 = vpop.f32.mrb[0].mxu0
        %1831 = vmatprep.mubr.f32.mxu0 0.0
        %1832 = vmatmul.mubr.f32.gmra.mrb[0].mxu0 %v1708
        %v1833 = vpop.f32.mrb[0].mxu0
        %v1834 = vadd.f32 %v1641, %v1833
        %v1835 = vpop.f32.mrb[0].mxu0
        %1836 = vmatprep.mubr.f32.mxu0 0.0
        %1837 = vmatmul.mubr.f32.gmra.mrb[0].mxu0 %v1711
        %v1838 = vpop.f32.mrb[0].mxu0
        %v1839 = vadd.f32 %v1646, %v1838
        %v1840 = vpop.f32.mrb[0].mxu0
        %1841 = vmatprep.mubr.f32.mxu0 0.0
        %1842 = vmatmul.mubr.f32.gmra.mrb[0].mxu0 %v1714
        %v1843 = vpop.f32.mrb[0].mxu0
        %v1844 = vadd.f32 %v1651, %v1843
        %v1845 = vpop.f32.mrb[0].mxu0
        %1846 = vmatprep.mubr.f32.mxu0 0.0
        %1847 = vmatmul.mubr.f32.gmra.mrb[0].mxu0 %v1717
        %v1848 = vpop.f32.mrb[0].mxu0
        %v1849 = vadd.f32 %v1656, %v1848
        %v1850 = vpop.f32.mrb[0].mxu0
        %1851 = vmatprep.mubr.f32.mxu0 0.0
        %1852 = vmatmul.mubr.f32.gmra.mrb[0].mxu0 %v1720
        %v1853 = vpop.f32.mrb[0].mxu0
        %v1854 = vadd.f32 %v1661, %v1853
        %v1855 = vpop.f32.mrb[0].mxu0
        %1856 = vmatprep.mubr.f32.mxu0 0.0
        %1857 = vmatmul.mubr.f32.gmra.mrb[0].mxu0 %v1723
        %v1858 = vpop.f32.mrb[0].mxu0
        %v1859 = vadd.f32 %v1666, %v1858
        %v1860 = vpop.f32.mrb[0].mxu0
        %1861 = vmatprep.mubr.f32.mxu0 0.0
        %1862 = vmatmul.mubr.f32.gmra.mrb[0].mxu0 %v1726
        %v1863 = vpop.f32.mrb[0].mxu0
        %v1864 = vadd.f32 %v1671, %v1863
        %v1865 = vpop.f32.mrb[0].mxu0
        %1866 = vmatprep.mubr.f32.mxu0 0.0
        %1867 = vmatmul.mubr.f32.gmra.mrb[0].mxu0 %v1729
        %v1868 = vpop.f32.mrb[0].mxu0
        %v1869 = vadd.f32 %v1676, %v1868
        %v1870 = vpop.f32.mrb[0].mxu0
        %1871 = vmatprep.mubr.f32.mxu0 0.0
        %1872 = vmatmul.mubr.f32.gmra.mrb[0].mxu0 %v1732
        %v1873 = vpop.f32.mrb[0].mxu0
        %v1874 = vadd.f32 %v1681, %v1873
        %v1875 = vpop.f32.mrb[0].mxu0
        %1876 = vmatprep.mubr.f32.mxu0 0.0
        %1877 = vmatmul.mubr.f32.gmra.mrb[0].mxu0 %v1735
        %v1878 = vpop.f32.mrb[0].mxu0
        %v1879 = vadd.f32 %v1686, %v1878
        %v1880 = vpop.f32.mrb[0].mxu0
        %1881 = vdwg.mxu0
        %v1882 = vld [vmem:[#allocation2 + $0x2] sm:$0xff]
        %v1883 = vld [vmem:[#allocation2 + $0xa] sm:$0xff]
        %v1884 = vld [vmem:[#allocation2 + $0x12] sm:$0xff]
        %v1885 = vld [vmem:[#allocation2 + $0x1a] sm:$0xff]
        %v1886 = vld [vmem:[#allocation2 + $0x22] sm:$0xff]
        %v1887 = vld [vmem:[#allocation2 + $0x2a] sm:$0xff]
        %v1888 = vld [vmem:[#allocation2 + $0x32] sm:$0xff]
        %v1889 = vld [vmem:[#allocation2 + $0x3a] sm:$0xff]
        %v1890 = vld [vmem:[#allocation2 + $0x42] sm:$0xff]
        %v1891 = vld [vmem:[#allocation2 + $0x4a] sm:$0xff]
        %v1892 = vld [vmem:[#allocation2 + $0x52] sm:$0xff]
        %v1893 = vld [vmem:[#allocation2 + $0x5a] sm:$0xff]
        %v1894 = vld [vmem:[#allocation2 + $0x62] sm:$0xff]
        %v1895 = vld [vmem:[#allocation2 + $0x6a] sm:$0xff]
        %v1896 = vld [vmem:[#allocation2 + $0x72] sm:$0xff]
        %v1897 = vld [vmem:[#allocation2 + $0x7a] sm:$0x3]
        %v1898 = vld [vmem:[%s3 + $0x40] sm:$0xff]
        %v1899 = vld [vmem:[%s3 + $0x48] sm:$0xff]
        %v1900 = vld [vmem:[%s3 + $0x50] sm:$0xff]
        %v1901 = vld [vmem:[%s3 + $0x58] sm:$0xff]
        %v1903 = vsel %vm1438, %v1882, 0
        %v1906 = vsel %vm1438, %v1883, 0
        %v1909 = vsel %vm1438, %v1884, 0
        %v1912 = vsel %vm1438, %v1885, 0
        %v1915 = vsel %vm1438, %v1886, 0
        %v1918 = vsel %vm1438, %v1887, 0
        %v1921 = vsel %vm1438, %v1888, 0
        %v1924 = vsel %vm1438, %v1889, 0
        %v1927 = vsel %vm1438, %v1890, 0
        %v1930 = vsel %vm1438, %v1891, 0
        %v1933 = vsel %vm1438, %v1892, 0
        %v1936 = vsel %vm1438, %v1893, 0
        %v1939 = vsel %vm1438, %v1894, 0
        %v1942 = vsel %vm1438, %v1895, 0
        %v1945 = vsel %vm1438, %v1896, 0
        %v1948 = vsel %vm1438, %v1897, 0
        %1950 = vmatprep.subr.mxu0 0.0
        %1951 = vmatpush1.msra.mxu0 %v1898
        %1952 = vmatprep.subr.mxu0 0.0
        %1953 = vmatpush1.msra.mxu0 %v1899
        %1954 = vmatprep.subr.mxu0 0.0
        %1955 = vmatpush1.msra.mxu0 %v1900
        %1956 = vmatprep.subr.mxu0 0.0
        %1957 = vmatpush1.msra.mxu0 %v1901
        %1958 = vmatprep.subr.mxu0 0.0
        %1959 = vmatpush1.msra.mxu0 0.0
        %1960 = vmatprep.subr.mxu0 0.0
        %1961 = vmatpush1.msra.mxu0 0.0
        %1962 = vmatprep.subr.mxu0 0.0
        %1963 = vmatpush1.msra.mxu0 0.0
        %1964 = vmatprep.subr.mxu0 0.0
        %1965 = vmatpush1.msra.mxu0 0.0
        %1966 = vmatprep.subr.mxu0 0.0
        %1967 = vmatpush1.msra.mxu0 0.0
        %1968 = vmatprep.subr.mxu0 0.0
        %1969 = vmatpush1.msra.mxu0 0.0
        %1970 = vmatprep.subr.mxu0 0.0
        %1971 = vmatpush1.msra.mxu0 0.0
        %1972 = vmatprep.subr.mxu0 0.0
        %1973 = vmatpush1.msra.mxu0 0.0
        %1974 = vmatprep.subr.mxu0 0.0
        %1975 = vmatpush1.msra.mxu0 0.0
        %1976 = vmatprep.subr.mxu0 0.0
        %1977 = vmatpush1.msra.mxu0 0.0
        %1978 = vmatprep.subr.mxu0 0.0
        %1979 = vmatpush1.msra.mxu0 0.0
        %1980 = vmatprep.subr.mxu0 0.0
        %1981 = vmatpush1.msra.mxu0 0.0
        %1982 = vmatprep.subr.mxu0 0.0
        %1983 = vmatpush1.msra.mxu0 0.0
        %1984 = vmatprep.subr.mxu0 0.0
        %1985 = vmatpush1.msra.mxu0 0.0
        %1986 = vmatprep.subr.mxu0 0.0
        %1987 = vmatpush1.msra.mxu0 0.0
        %1988 = vmatprep.subr.mxu0 0.0
        %1989 = vmatpush1.msra.mxu0 0.0
        %1990 = vmatprep.subr.mxu0 0.0
        %1991 = vmatpush1.msra.mxu0 0.0
        %1992 = vmatprep.subr.mxu0 0.0
        %1993 = vmatpush1.msra.mxu0 0.0
        %1994 = vmatprep.subr.mxu0 0.0
        %1995 = vmatpush1.msra.mxu0 0.0
        %1996 = vmatprep.subr.mxu0 0.0
        %1997 = vmatpush1.msra.mxu0 0.0
        %1998 = vmatprep.subr.mxu0 0.0
        %1999 = vmatpush1.msra.mxu0 0.0
        %2000 = vmatprep.subr.mxu0 0.0
        %2001 = vmatpush1.msra.mxu0 0.0
        %2002 = vmatprep.subr.mxu0 0.0
        %2003 = vmatpush1.msra.mxu0 0.0
        %2004 = vmatprep.subr.mxu0 0.0
        %2005 = vmatpush1.msra.mxu0 0.0
        %2006 = vmatprep.subr.mxu0 0.0
        %2007 = vmatpush1.msra.mxu0 0.0
        %2008 = vmatprep.subr.mxu0 0.0
        %2009 = vmatpush1.msra.mxu0 0.0
        %2010 = vmatprep.subr.mxu0 0.0
        %2011 = vmatpush1.msra.mxu0 0.0
        %2012 = vmatprep.subr.mxu0 0.0
        %2013 = vmatpush1.msra.mxu0 0.0
        %2014 = vmatprep.mubr.f32.mxu0 0.0
        %2015 = vmatmul.mubr.f32.gmra.mrb[0].mxu0 %v1903
        %v2016 = vpop.f32.mrb[0].mxu0
        %v2017 = vadd.f32 0.0, %v2016
        %v2018 = vpop.f32.mrb[0].mxu0
        %2019 = vmatprep.mubr.f32.mxu0 0.0
        %2020 = vmatmul.mubr.f32.gmra.mrb[0].mxu0 %v1906
        %v2021 = vpop.f32.mrb[0].mxu0
        %v2022 = vadd.f32 0.0, %v2021
        %v2023 = vpop.f32.mrb[0].mxu0
        %2024 = vmatprep.mubr.f32.mxu0 0.0
        %2025 = vmatmul.mubr.f32.gmra.mrb[0].mxu0 %v1909
        %v2026 = vpop.f32.mrb[0].mxu0
        %v2027 = vadd.f32 0.0, %v2026
        %v2028 = vpop.f32.mrb[0].mxu0
        %2029 = vmatprep.mubr.f32.mxu0 0.0
        %2030 = vmatmul.mubr.f32.gmra.mrb[0].mxu0 %v1912
        %v2031 = vpop.f32.mrb[0].mxu0
        %v2032 = vadd.f32 0.0, %v2031
        %v2033 = vpop.f32.mrb[0].mxu0
        %2034 = vmatprep.mubr.f32.mxu0 0.0
        %2035 = vmatmul.mubr.f32.gmra.mrb[0].mxu0 %v1915
        %v2036 = vpop.f32.mrb[0].mxu0
        %v2037 = vadd.f32 0.0, %v2036
        %v2038 = vpop.f32.mrb[0].mxu0
        %2039 = vmatprep.mubr.f32.mxu0 0.0
        %2040 = vmatmul.mubr.f32.gmra.mrb[0].mxu0 %v1918
        %v2041 = vpop.f32.mrb[0].mxu0
        %v2042 = vadd.f32 0.0, %v2041
        %v2043 = vpop.f32.mrb[0].mxu0
        %2044 = vmatprep.mubr.f32.mxu0 0.0
        %2045 = vmatmul.mubr.f32.gmra.mrb[0].mxu0 %v1921
        %v2046 = vpop.f32.mrb[0].mxu0
        %v2047 = vadd.f32 0.0, %v2046
        %v2048 = vpop.f32.mrb[0].mxu0
        %2049 = vmatprep.mubr.f32.mxu0 0.0
        %2050 = vmatmul.mubr.f32.gmra.mrb[0].mxu0 %v1924
        %v2051 = vpop.f32.mrb[0].mxu0
        %v2052 = vadd.f32 0.0, %v2051
        %v2053 = vpop.f32.mrb[0].mxu0
        %2054 = vmatprep.mubr.f32.mxu0 0.0
        %2055 = vmatmul.mubr.f32.gmra.mrb[0].mxu0 %v1927
        %v2056 = vpop.f32.mrb[0].mxu0
        %v2057 = vadd.f32 0.0, %v2056
        %v2058 = vpop.f32.mrb[0].mxu0
        %2059 = vmatprep.mubr.f32.mxu0 0.0
        %2060 = vmatmul.mubr.f32.gmra.mrb[0].mxu0 %v1930
        %v2061 = vpop.f32.mrb[0].mxu0
        %v2062 = vadd.f32 0.0, %v2061
        %v2063 = vpop.f32.mrb[0].mxu0
        %2064 = vmatprep.mubr.f32.mxu0 0.0
        %2065 = vmatmul.mubr.f32.gmra.mrb[0].mxu0 %v1933
        %v2066 = vpop.f32.mrb[0].mxu0
        %v2067 = vadd.f32 0.0, %v2066
        %v2068 = vpop.f32.mrb[0].mxu0
        %2069 = vmatprep.mubr.f32.mxu0 0.0
        %2070 = vmatmul.mubr.f32.gmra.mrb[0].mxu0 %v1936
        %v2071 = vpop.f32.mrb[0].mxu0
        %v2072 = vadd.f32 0.0, %v2071
        %v2073 = vpop.f32.mrb[0].mxu0
        %2074 = vmatprep.mubr.f32.mxu0 0.0
        %2075 = vmatmul.mubr.f32.gmra.mrb[0].mxu0 %v1939
        %v2076 = vpop.f32.mrb[0].mxu0
        %v2077 = vadd.f32 0.0, %v2076
        %v2078 = vpop.f32.mrb[0].mxu0
        %2079 = vmatprep.mubr.f32.mxu0 0.0
        %2080 = vmatmul.mubr.f32.gmra.mrb[0].mxu0 %v1942
        %v2081 = vpop.f32.mrb[0].mxu0
        %v2082 = vadd.f32 0.0, %v2081
        %v2083 = vpop.f32.mrb[0].mxu0
        %2084 = vmatprep.mubr.f32.mxu0 0.0
        %2085 = vmatmul.mubr.f32.gmra.mrb[0].mxu0 %v1945
        %v2086 = vpop.f32.mrb[0].mxu0
        %v2087 = vadd.f32 0.0, %v2086
        %v2088 = vpop.f32.mrb[0].mxu0
        %2089 = vmatprep.mubr.f32.mxu0 0.0
        %2090 = vmatmul.mubr.f32.gmra.mrb[0].mxu0 %v1948
        %v2091 = vpop.f32.mrb[0].mxu0
        %v2092 = vadd.f32 0.0, %v2091
        %v2093 = vpop.f32.mrb[0].mxu0
        %2094 = vdwg.mxu0
        %v2095 = vadd.f32 %v1804, %v2017
        %v2096 = vadd.f32 %v1809, %v2022
        %v2097 = vadd.f32 %v1814, %v2027
        %v2098 = vadd.f32 %v1819, %v2032
        %v2099 = vadd.f32 %v1824, %v2037
        %v2100 = vadd.f32 %v1829, %v2042
        %v2101 = vadd.f32 %v1834, %v2047
        %v2102 = vadd.f32 %v1839, %v2052
        %v2103 = vadd.f32 %v1844, %v2057
        %v2104 = vadd.f32 %v1849, %v2062
        %v2105 = vadd.f32 %v1854, %v2067
        %v2106 = vadd.f32 %v1859, %v2072
        %v2107 = vadd.f32 %v1864, %v2077
        %v2108 = vadd.f32 %v1869, %v2082
        %v2109 = vadd.f32 %v1874, %v2087
        %v2110 = vadd.f32 %v1879, %v2092
        %v2111 = vld [vmem:[#allocation13] sm:$0x1]
        %v2112 = vlaneseq
        %v2113 = vshrl.u32 %v2112, 7
        %v2114 = vsub.s32 0, %v2113
        %v2115 = vrot.slane %v2111, %v2114
        %v2116 = vmul.f32 %v2095, %v2115
        %v2117 = vmul.f32 %v2096, %v2115
        %v2118 = vmul.f32 %v2097, %v2115
        %v2119 = vmul.f32 %v2098, %v2115
        %v2120 = vmul.f32 %v2099, %v2115
        %v2121 = vmul.f32 %v2100, %v2115
        %v2122 = vmul.f32 %v2101, %v2115
        %v2123 = vmul.f32 %v2102, %v2115
        %v2124 = vmul.f32 %v2103, %v2115
        %v2125 = vmul.f32 %v2104, %v2115
        %v2126 = vmul.f32 %v2105, %v2115
        %v2127 = vmul.f32 %v2106, %v2115
        %v2128 = vmul.f32 %v2107, %v2115
        %v2129 = vmul.f32 %v2108, %v2115
        %v2130 = vmul.f32 %v2109, %v2115
        %v2131 = vmul.f32 %v2110, %v2115
        %v2132 = vld [vmem:[#allocation13 + $0x1] sm:$0x1]
        %v2133 = vlaneseq
        %v2134 = vshrl.u32 %v2133, 7
        %v2135 = vsub.s32 0, %v2134
        %v2136 = vrot.slane %v2132, %v2135
        %v2137 = vadd.f32 %v2116, %v2136
        %v2138 = vadd.f32 %v2117, %v2136
        %v2139 = vadd.f32 %v2118, %v2136
        %v2140 = vadd.f32 %v2119, %v2136
        %v2141 = vadd.f32 %v2120, %v2136
        %v2142 = vadd.f32 %v2121, %v2136
        %v2143 = vadd.f32 %v2122, %v2136
        %v2144 = vadd.f32 %v2123, %v2136
        %v2145 = vadd.f32 %v2124, %v2136
        %v2146 = vadd.f32 %v2125, %v2136
        %v2147 = vadd.f32 %v2126, %v2136
        %v2148 = vadd.f32 %v2127, %v2136
        %v2149 = vadd.f32 %v2128, %v2136
        %v2150 = vadd.f32 %v2129, %v2136
        %v2151 = vadd.f32 %v2130, %v2136
        %v2152 = vadd.f32 %v2131, %v2136
        %v2153 = vmax.f32 %v2137, 0.0
        %v2154 = vmax.f32 %v2138, 0.0
        %v2155 = vmax.f32 %v2139, 0.0
        %v2156 = vmax.f32 %v2140, 0.0
        %v2157 = vmax.f32 %v2141, 0.0
        %v2158 = vmax.f32 %v2142, 0.0
        %v2159 = vmax.f32 %v2143, 0.0
        %v2160 = vmax.f32 %v2144, 0.0
        %v2161 = vmax.f32 %v2145, 0.0
        %v2162 = vmax.f32 %v2146, 0.0
        %v2163 = vmax.f32 %v2147, 0.0
        %v2164 = vmax.f32 %v2148, 0.0
        %v2165 = vmax.f32 %v2149, 0.0
        %v2166 = vmax.f32 %v2150, 0.0
        %v2167 = vmax.f32 %v2151, 0.0
        %v2168 = vmax.f32 %v2152, 0.0
        %2169 = vst.msk [vmem:[#allocation3] sm:$0xff] %vm1438, %v2153
        %2170 = vst.msk [vmem:[#allocation3 + $0x8] sm:$0xff] %vm1438, %v2154
        %2171 = vst.msk [vmem:[#allocation3 + $0x10] sm:$0xff] %vm1438, %v2155
        %2172 = vst.msk [vmem:[#allocation3 + $0x18] sm:$0xff] %vm1438, %v2156
        %2173 = vst.msk [vmem:[#allocation3 + $0x20] sm:$0xff] %vm1438, %v2157
        %2174 = vst.msk [vmem:[#allocation3 + $0x28] sm:$0xff] %vm1438, %v2158
        %2175 = vst.msk [vmem:[#allocation3 + $0x30] sm:$0xff] %vm1438, %v2159
        %2176 = vst.msk [vmem:[#allocation3 + $0x38] sm:$0xff] %vm1438, %v2160
        %2177 = vst.msk [vmem:[#allocation3 + $0x40] sm:$0xff] %vm1438, %v2161
        %2178 = vst.msk [vmem:[#allocation3 + $0x48] sm:$0xff] %vm1438, %v2162
        %2179 = vst.msk [vmem:[#allocation3 + $0x50] sm:$0xff] %vm1438, %v2163
        %2180 = vst.msk [vmem:[#allocation3 + $0x58] sm:$0xff] %vm1438, %v2164
        %2181 = vst.msk [vmem:[#allocation3 + $0x60] sm:$0xff] %vm1438, %v2165
        %2182 = vst.msk [vmem:[#allocation3 + $0x68] sm:$0xff] %vm1438, %v2166
        %2183 = vst.msk [vmem:[#allocation3 + $0x70] sm:$0xff] %vm1438, %v2167
        %vm2184 = vcmask 254976
        %2185 = vst.msk [vmem:[#allocation3 + $0x78] sm:$0x3] %vm2184, %v2168
        %v2186 = vld [vmem:[#allocation3] ss:$4 sm:$0xff]
        %s2187 = scalar_lea.vmem [#allocation3], 32
        %v2188 = vld [vmem:[%s2187] ss:$4 sm:$0xff]
        %s2189 = scalar_lea.vmem [#allocation3], 64
        %v2190 = vld [vmem:[%s2189] ss:$4 sm:$0xff]
        %s2191 = scalar_lea.vmem [#allocation3], 96
        %v2192 = vld [vmem:[%s2191] ss:$4 sm:$0x3f]
        %s2193 = scalar_lea.vmem [#allocation3], 1
        %v2194 = vld [vmem:[%s2193] ss:$4 sm:$0xff]
        %s2195 = scalar_lea.vmem [#allocation3], 33
        %v2196 = vld [vmem:[%s2195] ss:$4 sm:$0xff]
        %s2197 = scalar_lea.vmem [#allocation3], 65
        %v2198 = vld [vmem:[%s2197] ss:$4 sm:$0xff]
        %s2199 = scalar_lea.vmem [#allocation3], 97
        %v2200 = vld [vmem:[%s2199] ss:$4 sm:$0x3f]
        %v2201 = vmax.f32 %v2186, %v2194
        %v2202 = vmax.f32 %v2188, %v2196
        %v2203 = vmax.f32 %v2190, %v2198
        %v2204 = vmax.f32 %v2192, %v2200
        %s2205 = scalar_lea.vmem [#allocation3], 2
        %v2206 = vld [vmem:[%s2205] ss:$4 sm:$0xff]
        %s2207 = scalar_lea.vmem [#allocation3], 34
        %v2208 = vld [vmem:[%s2207] ss:$4 sm:$0xff]
        %s2209 = scalar_lea.vmem [#allocation3], 66
        %v2210 = vld [vmem:[%s2209] ss:$4 sm:$0xff]
        %s2211 = scalar_lea.vmem [#allocation3], 98
        %v2212 = vld [vmem:[%s2211] ss:$4 sm:$0x3f]
        %v2213 = vmax.f32 %v2201, %v2206
        %v2214 = vmax.f32 %v2202, %v2208
        %v2215 = vmax.f32 %v2203, %v2210
        %v2216 = vmax.f32 %v2204, %v2212
        %s2217 = scalar_lea.vmem [#allocation3], 3
        %v2218 = vld [vmem:[%s2217] ss:$4 sm:$0xff]
        %s2219 = scalar_lea.vmem [#allocation3], 35
        %v2220 = vld [vmem:[%s2219] ss:$4 sm:$0xff]
        %s2221 = scalar_lea.vmem [#allocation3], 67
        %v2222 = vld [vmem:[%s2221] ss:$4 sm:$0xff]
        %s2223 = scalar_lea.vmem [#allocation3], 99
        %v2224 = vld [vmem:[%s2223] ss:$4 sm:$0x3f]
        %v2225 = vmax.f32 %v2213, %v2218
        %v2226 = vmax.f32 %v2214, %v2220
        %v2227 = vmax.f32 %v2215, %v2222
        %v2228 = vmax.f32 %v2216, %v2224
        %2229 = vst.msk [vmem:[#allocation4] sm:$0xff] %vm1438, %v2225
        %2230 = vst.msk [vmem:[#allocation4 + $0x8] sm:$0xff] %vm1438, %v2226
        %2231 = vst.msk [vmem:[#allocation4 + $0x10] sm:$0xff] %vm1438, %v2227
        %vm2232 = vcmask 259072
        %2233 = vst.msk [vmem:[#allocation4 + $0x18] sm:$0x3f] %vm2232, %v2228
        %v2234 = vld [vmem:[#allocation4] sm:$0xff]
        %v2235 = vld [vmem:[#allocation4 + $0x8] sm:$0xff]
        %v2236 = vld [vmem:[#allocation4 + $0x10] sm:$0xff]
        %v2237 = vld [vmem:[#allocation4 + $0x18] sm:$0xf]
        %v2238 = vld [vmem:[%s5] sm:$0xff]
        %v2239 = vld [vmem:[%s5 + $0x8] sm:$0xff]
        %v2240 = vld [vmem:[%s5 + $0x10] sm:$0xff]
        %v2241 = vld [vmem:[%s5 + $0x18] sm:$0xff]
        %v2242 = vld [vmem:[#allocation4 + $0x1] sm:$0xff]
        %v2243 = vld [vmem:[#allocation4 + $0x9] sm:$0xff]
        %v2244 = vld [vmem:[#allocation4 + $0x11] sm:$0xff]
        %v2245 = vld [vmem:[#allocation4 + $0x19] sm:$0xf]
        %v2246 = vld [vmem:[%s5 + $0x20] sm:$0xff]
        %v2247 = vld [vmem:[%s5 + $0x28] sm:$0xff]
        %v2248 = vld [vmem:[%s5 + $0x30] sm:$0xff]
        %v2249 = vld [vmem:[%s5 + $0x38] sm:$0xff]
        %v2251 = vsel %vm1438, %v2242, 0
        %v2254 = vsel %vm1438, %v2243, 0
        %v2257 = vsel %vm1438, %v2244, 0
        %v2260 = vsel %vm1438, %v2245, 0
        %2262 = vmatprep.subr.mxu0 0.0
        %2263 = vmatpush1.msra.mxu0 %v2246
        %2264 = vmatprep.subr.mxu0 0.0
        %2265 = vmatpush1.msra.mxu0 %v2247
        %2266 = vmatprep.subr.mxu0 0.0
        %2267 = vmatpush1.msra.mxu0 %v2248
        %2268 = vmatprep.subr.mxu0 0.0
        %2269 = vmatpush1.msra.mxu0 %v2249
        %2270 = vmatprep.subr.mxu0 0.0
        %2271 = vmatpush1.msra.mxu0 0.0
        %2272 = vmatprep.subr.mxu0 0.0
        %2273 = vmatpush1.msra.mxu0 0.0
        %2274 = vmatprep.subr.mxu0 0.0
        %2275 = vmatpush1.msra.mxu0 0.0
        %2276 = vmatprep.subr.mxu0 0.0
        %2277 = vmatpush1.msra.mxu0 0.0
        %2278 = vmatprep.subr.mxu0 0.0
        %2279 = vmatpush1.msra.mxu0 0.0
        %2280 = vmatprep.subr.mxu0 0.0
        %2281 = vmatpush1.msra.mxu0 0.0
        %2282 = vmatprep.subr.mxu0 0.0
        %2283 = vmatpush1.msra.mxu0 0.0
        %2284 = vmatprep.subr.mxu0 0.0
        %2285 = vmatpush1.msra.mxu0 0.0
        %2286 = vmatprep.subr.mxu0 0.0
        %2287 = vmatpush1.msra.mxu0 0.0
        %2288 = vmatprep.subr.mxu0 0.0
        %2289 = vmatpush1.msra.mxu0 0.0
        %2290 = vmatprep.subr.mxu0 0.0
        %2291 = vmatpush1.msra.mxu0 0.0
        %2292 = vmatprep.subr.mxu0 0.0
        %2293 = vmatpush1.msra.mxu0 0.0
        %2294 = vmatprep.subr.mxu0 0.0
        %2295 = vmatpush1.msra.mxu0 0.0
        %2296 = vmatprep.subr.mxu0 0.0
        %2297 = vmatpush1.msra.mxu0 0.0
        %2298 = vmatprep.subr.mxu0 0.0
        %2299 = vmatpush1.msra.mxu0 0.0
        %2300 = vmatprep.subr.mxu0 0.0
        %2301 = vmatpush1.msra.mxu0 0.0
        %2302 = vmatprep.subr.mxu0 0.0
        %2303 = vmatpush1.msra.mxu0 0.0
        %2304 = vmatprep.subr.mxu0 0.0
        %2305 = vmatpush1.msra.mxu0 0.0
        %2306 = vmatprep.subr.mxu0 0.0
        %2307 = vmatpush1.msra.mxu0 0.0
        %2308 = vmatprep.subr.mxu0 0.0
        %2309 = vmatpush1.msra.mxu0 0.0
        %2310 = vmatprep.subr.mxu0 0.0
        %2311 = vmatpush1.msra.mxu0 0.0
        %2312 = vmatprep.subr.mxu0 0.0
        %2313 = vmatpush1.msra.mxu0 0.0
        %2314 = vmatprep.subr.mxu0 0.0
        %2315 = vmatpush1.msra.mxu0 0.0
        %2316 = vmatprep.subr.mxu0 0.0
        %2317 = vmatpush1.msra.mxu0 0.0
        %2318 = vmatprep.subr.mxu0 0.0
        %2319 = vmatpush1.msra.mxu0 0.0
        %2320 = vmatprep.subr.mxu0 0.0
        %2321 = vmatpush1.msra.mxu0 0.0
        %2322 = vmatprep.subr.mxu0 0.0
        %2323 = vmatpush1.msra.mxu0 0.0
        %2324 = vmatprep.subr.mxu0 0.0
        %2325 = vmatpush1.msra.mxu0 0.0
        %2326 = vmatprep.mubr.f32.mxu0 0.0
        %2327 = vmatmul.mubr.f32.gmra.mrb[0].mxu0 %v2251
        %v2328 = vpop.f32.mrb[0].mxu0
        %v2329 = vadd.f32 0.0, %v2328
        %v2330 = vpop.f32.mrb[0].mxu0
        %2331 = vmatprep.mubr.f32.mxu0 0.0
        %2332 = vmatmul.mubr.f32.gmra.mrb[0].mxu0 %v2254
        %v2333 = vpop.f32.mrb[0].mxu0
        %v2334 = vadd.f32 0.0, %v2333
        %v2335 = vpop.f32.mrb[0].mxu0
        %2336 = vmatprep.mubr.f32.mxu0 0.0
        %2337 = vmatmul.mubr.f32.gmra.mrb[0].mxu0 %v2257
        %v2338 = vpop.f32.mrb[0].mxu0
        %v2339 = vadd.f32 0.0, %v2338
        %v2340 = vpop.f32.mrb[0].mxu0
        %2341 = vmatprep.mubr.f32.mxu0 0.0
        %2342 = vmatmul.mubr.f32.gmra.mrb[0].mxu0 %v2260
        %v2343 = vpop.f32.mrb[0].mxu0
        %v2344 = vadd.f32 0.0, %v2343
        %v2345 = vpop.f32.mrb[0].mxu0
        %2346 = vdwg.mxu0
        %v2348 = vsel %vm1438, %v2234, 0
        %v2351 = vsel %vm1438, %v2235, 0
        %v2354 = vsel %vm1438, %v2236, 0
        %v2357 = vsel %vm1438, %v2237, 0
        %2359 = vmatprep.subr.mxu0 0.0
        %2360 = vmatpush1.msra.mxu0 %v2238
        %2361 = vmatprep.subr.mxu0 0.0
        %2362 = vmatpush1.msra.mxu0 %v2239
        %2363 = vmatprep.subr.mxu0 0.0
        %2364 = vmatpush1.msra.mxu0 %v2240
        %2365 = vmatprep.subr.mxu0 0.0
        %2366 = vmatpush1.msra.mxu0 %v2241
        %2367 = vmatprep.subr.mxu0 0.0
        %2368 = vmatpush1.msra.mxu0 0.0
        %2369 = vmatprep.subr.mxu0 0.0
        %2370 = vmatpush1.msra.mxu0 0.0
        %2371 = vmatprep.subr.mxu0 0.0
        %2372 = vmatpush1.msra.mxu0 0.0
        %2373 = vmatprep.subr.mxu0 0.0
        %2374 = vmatpush1.msra.mxu0 0.0
        %2375 = vmatprep.subr.mxu0 0.0
        %2376 = vmatpush1.msra.mxu0 0.0
        %2377 = vmatprep.subr.mxu0 0.0
        %2378 = vmatpush1.msra.mxu0 0.0
        %2379 = vmatprep.subr.mxu0 0.0
        %2380 = vmatpush1.msra.mxu0 0.0
        %2381 = vmatprep.subr.mxu0 0.0
        %2382 = vmatpush1.msra.mxu0 0.0
        %2383 = vmatprep.subr.mxu0 0.0
        %2384 = vmatpush1.msra.mxu0 0.0
        %2385 = vmatprep.subr.mxu0 0.0
        %2386 = vmatpush1.msra.mxu0 0.0
        %2387 = vmatprep.subr.mxu0 0.0
        %2388 = vmatpush1.msra.mxu0 0.0
        %2389 = vmatprep.subr.mxu0 0.0
        %2390 = vmatpush1.msra.mxu0 0.0
        %2391 = vmatprep.subr.mxu0 0.0
        %2392 = vmatpush1.msra.mxu0 0.0
        %2393 = vmatprep.subr.mxu0 0.0
        %2394 = vmatpush1.msra.mxu0 0.0
        %2395 = vmatprep.subr.mxu0 0.0
        %2396 = vmatpush1.msra.mxu0 0.0
        %2397 = vmatprep.subr.mxu0 0.0
        %2398 = vmatpush1.msra.mxu0 0.0
        %2399 = vmatprep.subr.mxu0 0.0
        %2400 = vmatpush1.msra.mxu0 0.0
        %2401 = vmatprep.subr.mxu0 0.0
        %2402 = vmatpush1.msra.mxu0 0.0
        %2403 = vmatprep.subr.mxu0 0.0
        %2404 = vmatpush1.msra.mxu0 0.0
        %2405 = vmatprep.subr.mxu0 0.0
        %2406 = vmatpush1.msra.mxu0 0.0
        %2407 = vmatprep.subr.mxu0 0.0
        %2408 = vmatpush1.msra.mxu0 0.0
        %2409 = vmatprep.subr.mxu0 0.0
        %2410 = vmatpush1.msra.mxu0 0.0
        %2411 = vmatprep.subr.mxu0 0.0
        %2412 = vmatpush1.msra.mxu0 0.0
        %2413 = vmatprep.subr.mxu0 0.0
        %2414 = vmatpush1.msra.mxu0 0.0
        %2415 = vmatprep.subr.mxu0 0.0
        %2416 = vmatpush1.msra.mxu0 0.0
        %2417 = vmatprep.subr.mxu0 0.0
        %2418 = vmatpush1.msra.mxu0 0.0
        %2419 = vmatprep.subr.mxu0 0.0
        %2420 = vmatpush1.msra.mxu0 0.0
        %2421 = vmatprep.subr.mxu0 0.0
        %2422 = vmatpush1.msra.mxu0 0.0
        %2423 = vmatprep.mubr.f32.mxu0 0.0
        %2424 = vmatmul.mubr.f32.gmra.mrb[0].mxu0 %v2348
        %v2425 = vpop.f32.mrb[0].mxu0
        %v2426 = vadd.f32 %v2329, %v2425
        %v2427 = vpop.f32.mrb[0].mxu0
        %2428 = vmatprep.mubr.f32.mxu0 0.0
        %2429 = vmatmul.mubr.f32.gmra.mrb[0].mxu0 %v2351
        %v2430 = vpop.f32.mrb[0].mxu0
        %v2431 = vadd.f32 %v2334, %v2430
        %v2432 = vpop.f32.mrb[0].mxu0
        %2433 = vmatprep.mubr.f32.mxu0 0.0
        %2434 = vmatmul.mubr.f32.gmra.mrb[0].mxu0 %v2354
        %v2435 = vpop.f32.mrb[0].mxu0
        %v2436 = vadd.f32 %v2339, %v2435
        %v2437 = vpop.f32.mrb[0].mxu0
        %2438 = vmatprep.mubr.f32.mxu0 0.0
        %2439 = vmatmul.mubr.f32.gmra.mrb[0].mxu0 %v2357
        %v2440 = vpop.f32.mrb[0].mxu0
        %v2441 = vadd.f32 %v2344, %v2440
        %v2442 = vpop.f32.mrb[0].mxu0
        %2443 = vdwg.mxu0
        %v2444 = vld [vmem:[#allocation4 + $0x2] sm:$0xff]
        %v2445 = vld [vmem:[#allocation4 + $0xa] sm:$0xff]
        %v2446 = vld [vmem:[#allocation4 + $0x12] sm:$0xff]
        %v2447 = vld [vmem:[#allocation4 + $0x1a] sm:$0xf]
        %v2448 = vld [vmem:[%s5 + $0x40] sm:$0xff]
        %v2449 = vld [vmem:[%s5 + $0x48] sm:$0xff]
        %v2450 = vld [vmem:[%s5 + $0x50] sm:$0xff]
        %v2451 = vld [vmem:[%s5 + $0x58] sm:$0xff]
        %v2453 = vsel %vm1438, %v2444, 0
        %v2456 = vsel %vm1438, %v2445, 0
        %v2459 = vsel %vm1438, %v2446, 0
        %v2462 = vsel %vm1438, %v2447, 0
        %2464 = vmatprep.subr.mxu0 0.0
        %2465 = vmatpush1.msra.mxu0 %v2448
        %2466 = vmatprep.subr.mxu0 0.0
        %2467 = vmatpush1.msra.mxu0 %v2449
        %2468 = vmatprep.subr.mxu0 0.0
        %2469 = vmatpush1.msra.mxu0 %v2450
        %2470 = vmatprep.subr.mxu0 0.0
        %2471 = vmatpush1.msra.mxu0 %v2451
        %2472 = vmatprep.subr.mxu0 0.0
        %2473 = vmatpush1.msra.mxu0 0.0
        %2474 = vmatprep.subr.mxu0 0.0
        %2475 = vmatpush1.msra.mxu0 0.0
        %2476 = vmatprep.subr.mxu0 0.0
        %2477 = vmatpush1.msra.mxu0 0.0
        %2478 = vmatprep.subr.mxu0 0.0
        %2479 = vmatpush1.msra.mxu0 0.0
        %2480 = vmatprep.subr.mxu0 0.0
        %2481 = vmatpush1.msra.mxu0 0.0
        %2482 = vmatprep.subr.mxu0 0.0
        %2483 = vmatpush1.msra.mxu0 0.0
        %2484 = vmatprep.subr.mxu0 0.0
        %2485 = vmatpush1.msra.mxu0 0.0
        %2486 = vmatprep.subr.mxu0 0.0
        %2487 = vmatpush1.msra.mxu0 0.0
        %2488 = vmatprep.subr.mxu0 0.0
        %2489 = vmatpush1.msra.mxu0 0.0
        %2490 = vmatprep.subr.mxu0 0.0
        %2491 = vmatpush1.msra.mxu0 0.0
        %2492 = vmatprep.subr.mxu0 0.0
        %2493 = vmatpush1.msra.mxu0 0.0
        %2494 = vmatprep.subr.mxu0 0.0
        %2495 = vmatpush1.msra.mxu0 0.0
        %2496 = vmatprep.subr.mxu0 0.0
        %2497 = vmatpush1.msra.mxu0 0.0
        %2498 = vmatprep.subr.mxu0 0.0
        %2499 = vmatpush1.msra.mxu0 0.0
        %2500 = vmatprep.subr.mxu0 0.0
        %2501 = vmatpush1.msra.mxu0 0.0
        %2502 = vmatprep.subr.mxu0 0.0
        %2503 = vmatpush1.msra.mxu0 0.0
        %2504 = vmatprep.subr.mxu0 0.0
        %2505 = vmatpush1.msra.mxu0 0.0
        %2506 = vmatprep.subr.mxu0 0.0
        %2507 = vmatpush1.msra.mxu0 0.0
        %2508 = vmatprep.subr.mxu0 0.0
        %2509 = vmatpush1.msra.mxu0 0.0
        %2510 = vmatprep.subr.mxu0 0.0
        %2511 = vmatpush1.msra.mxu0 0.0
        %2512 = vmatprep.subr.mxu0 0.0
        %2513 = vmatpush1.msra.mxu0 0.0
        %2514 = vmatprep.subr.mxu0 0.0
        %2515 = vmatpush1.msra.mxu0 0.0
        %2516 = vmatprep.subr.mxu0 0.0
        %2517 = vmatpush1.msra.mxu0 0.0
        %2518 = vmatprep.subr.mxu0 0.0
        %2519 = vmatpush1.msra.mxu0 0.0
        %2520 = vmatprep.subr.mxu0 0.0
        %2521 = vmatpush1.msra.mxu0 0.0
        %2522 = vmatprep.subr.mxu0 0.0
        %2523 = vmatpush1.msra.mxu0 0.0
        %2524 = vmatprep.subr.mxu0 0.0
        %2525 = vmatpush1.msra.mxu0 0.0
        %2526 = vmatprep.subr.mxu0 0.0
        %2527 = vmatpush1.msra.mxu0 0.0
        %2528 = vmatprep.mubr.f32.mxu0 0.0
        %2529 = vmatmul.mubr.f32.gmra.mrb[0].mxu0 %v2453
        %v2530 = vpop.f32.mrb[0].mxu0
        %v2531 = vadd.f32 0.0, %v2530
        %v2532 = vpop.f32.mrb[0].mxu0
        %2533 = vmatprep.mubr.f32.mxu0 0.0
        %2534 = vmatmul.mubr.f32.gmra.mrb[0].mxu0 %v2456
        %v2535 = vpop.f32.mrb[0].mxu0
        %v2536 = vadd.f32 0.0, %v2535
        %v2537 = vpop.f32.mrb[0].mxu0
        %2538 = vmatprep.mubr.f32.mxu0 0.0
        %2539 = vmatmul.mubr.f32.gmra.mrb[0].mxu0 %v2459
        %v2540 = vpop.f32.mrb[0].mxu0
        %v2541 = vadd.f32 0.0, %v2540
        %v2542 = vpop.f32.mrb[0].mxu0
        %2543 = vmatprep.mubr.f32.mxu0 0.0
        %2544 = vmatmul.mubr.f32.gmra.mrb[0].mxu0 %v2462
        %v2545 = vpop.f32.mrb[0].mxu0
        %v2546 = vadd.f32 0.0, %v2545
        %v2547 = vpop.f32.mrb[0].mxu0
        %2548 = vdwg.mxu0
        %v2549 = vadd.f32 %v2426, %v2531
        %v2550 = vadd.f32 %v2431, %v2536
        %v2551 = vadd.f32 %v2436, %v2541
        %v2552 = vadd.f32 %v2441, %v2546
        %v2553 = vld [vmem:[#allocation14] sm:$0x1]
        %v2554 = vlaneseq
        %v2555 = vshrl.u32 %v2554, 7
        %v2556 = vsub.s32 0, %v2555
        %v2557 = vrot.slane %v2553, %v2556
        %v2558 = vmul.f32 %v2549, %v2557
        %v2559 = vmul.f32 %v2550, %v2557
        %v2560 = vmul.f32 %v2551, %v2557
        %v2561 = vmul.f32 %v2552, %v2557
        %v2562 = vld [vmem:[#allocation14 + $0x1] sm:$0x1]
        %v2563 = vlaneseq
        %v2564 = vshrl.u32 %v2563, 7
        %v2565 = vsub.s32 0, %v2564
        %v2566 = vrot.slane %v2562, %v2565
        %v2567 = vadd.f32 %v2558, %v2566
        %v2568 = vadd.f32 %v2559, %v2566
        %v2569 = vadd.f32 %v2560, %v2566
        %v2570 = vadd.f32 %v2561, %v2566
        %v2571 = vmax.f32 %v2567, 0.0
        %v2572 = vmax.f32 %v2568, 0.0
        %v2573 = vmax.f32 %v2569, 0.0
        %v2574 = vmax.f32 %v2570, 0.0
        %vm2575 = vcmask 523264
        %2576 = vst.msk [vmem:[#allocation5] sm:$0xff] %vm2575, %v2571
        %2577 = vst.msk [vmem:[#allocation5 + $0x8] sm:$0xff] %vm2575, %v2572
        %2578 = vst.msk [vmem:[#allocation5 + $0x10] sm:$0xff] %vm2575, %v2573
        %vm2579 = vcmask 519168
        %2580 = vst.msk [vmem:[#allocation5 + $0x18] sm:$0xf] %vm2579, %v2574
        %v2581 = vld [vmem:[#allocation5] ss:$4 sm:$0x7f]
        %s2582 = scalar_lea.vmem [#allocation5], 1
        %v2583 = vld [vmem:[%s2582] ss:$4 sm:$0x7f]
        %v2584 = vmax.f32 %v2581, %v2583
        %s2585 = scalar_lea.vmem [#allocation5], 2
        %v2586 = vld [vmem:[%s2585] ss:$4 sm:$0x7f]
        %v2587 = vmax.f32 %v2584, %v2586
        %s2588 = scalar_lea.vmem [#allocation5], 3
        %v2589 = vld [vmem:[%s2588] ss:$4 sm:$0x7f]
        %v2590 = vmax.f32 %v2587, %v2589
        %vm2591 = vcmask 522240
        %2592 = vst.msk [vmem:[#allocation6] sm:$0x7f] %vm2591, %v2590
        %v2593 = vld [vmem:[#allocation6] sm:$0x1f]
        %v2594 = vld [vmem:[%s7] sm:$0xff]
        %v2595 = vld [vmem:[%s7 + $0x8] sm:$0xff]
        %v2596 = vld [vmem:[%s7 + $0x10] sm:$0xff]
        %v2597 = vld [vmem:[%s7 + $0x18] sm:$0xff]
        %v2598 = vld [vmem:[%s7 + $0x20] sm:$0xff]
        %v2599 = vld [vmem:[%s7 + $0x28] sm:$0xff]
        %v2600 = vld [vmem:[%s7 + $0x30] sm:$0xff]
        %v2601 = vld [vmem:[%s7 + $0x38] sm:$0xff]
        %v2602 = vld [vmem:[#allocation6 + $0x1] sm:$0x1f]
        %v2603 = vld [vmem:[%s7 + $0x40] sm:$0xff]
        %v2604 = vld [vmem:[%s7 + $0x48] sm:$0xff]
        %v2605 = vld [vmem:[%s7 + $0x50] sm:$0xff]
        %v2606 = vld [vmem:[%s7 + $0x58] sm:$0xff]
        %v2607 = vld [vmem:[%s7 + $0x60] sm:$0xff]
        %v2608 = vld [vmem:[%s7 + $0x68] sm:$0xff]
        %v2609 = vld [vmem:[%s7 + $0x70] sm:$0xff]
        %v2610 = vld [vmem:[%s7 + $0x78] sm:$0xff]
        %v2612 = vsel %vm2575, %v2602, 0
        %2614 = vmatprep.subr.mxu0 0.0
        %2615 = vmatpush1.msra.mxu0 %v2603
        %2616 = vmatprep.subr.mxu0 0.0
        %2617 = vmatpush1.msra.mxu0 %v2604
        %2618 = vmatprep.subr.mxu0 0.0
        %2619 = vmatpush1.msra.mxu0 %v2605
        %2620 = vmatprep.subr.mxu0 0.0
        %2621 = vmatpush1.msra.mxu0 %v2606
        %2622 = vmatprep.subr.mxu0 0.0
        %2623 = vmatpush1.msra.mxu0 %v2607
        %2624 = vmatprep.subr.mxu0 0.0
        %2625 = vmatpush1.msra.mxu0 %v2608
        %2626 = vmatprep.subr.mxu0 0.0
        %2627 = vmatpush1.msra.mxu0 %v2609
        %2628 = vmatprep.subr.mxu0 0.0
        %2629 = vmatpush1.msra.mxu0 %v2610
        %2630 = vmatprep.subr.mxu0 0.0
        %2631 = vmatpush1.msra.mxu0 0.0
        %2632 = vmatprep.subr.mxu0 0.0
        %2633 = vmatpush1.msra.mxu0 0.0
        %2634 = vmatprep.subr.mxu0 0.0
        %2635 = vmatpush1.msra.mxu0 0.0
        %2636 = vmatprep.subr.mxu0 0.0
        %2637 = vmatpush1.msra.mxu0 0.0
        %2638 = vmatprep.subr.mxu0 0.0
        %2639 = vmatpush1.msra.mxu0 0.0
        %2640 = vmatprep.subr.mxu0 0.0
        %2641 = vmatpush1.msra.mxu0 0.0
        %2642 = vmatprep.subr.mxu0 0.0
        %2643 = vmatpush1.msra.mxu0 0.0
        %2644 = vmatprep.subr.mxu0 0.0
        %2645 = vmatpush1.msra.mxu0 0.0
        %2646 = vmatprep.subr.mxu0 0.0
        %2647 = vmatpush1.msra.mxu0 0.0
        %2648 = vmatprep.subr.mxu0 0.0
        %2649 = vmatpush1.msra.mxu0 0.0
        %2650 = vmatprep.subr.mxu0 0.0
        %2651 = vmatpush1.msra.mxu0 0.0
        %2652 = vmatprep.subr.mxu0 0.0
        %2653 = vmatpush1.msra.mxu0 0.0
        %2654 = vmatprep.subr.mxu0 0.0
        %2655 = vmatpush1.msra.mxu0 0.0
        %2656 = vmatprep.subr.mxu0 0.0
        %2657 = vmatpush1.msra.mxu0 0.0
        %2658 = vmatprep.subr.mxu0 0.0
        %2659 = vmatpush1.msra.mxu0 0.0
        %2660 = vmatprep.subr.mxu0 0.0
        %2661 = vmatpush1.msra.mxu0 0.0
        %2662 = vmatprep.subr.mxu0 0.0
        %2663 = vmatpush1.msra.mxu0 0.0
        %2664 = vmatprep.subr.mxu0 0.0
        %2665 = vmatpush1.msra.mxu0 0.0
        %2666 = vmatprep.subr.mxu0 0.0
        %2667 = vmatpush1.msra.mxu0 0.0
        %2668 = vmatprep.subr.mxu0 0.0
        %2669 = vmatpush1.msra.mxu0 0.0
        %2670 = vmatprep.subr.mxu0 0.0
        %2671 = vmatpush1.msra.mxu0 0.0
        %2672 = vmatprep.subr.mxu0 0.0
        %2673 = vmatpush1.msra.mxu0 0.0
        %2674 = vmatprep.subr.mxu0 0.0
        %2675 = vmatpush1.msra.mxu0 0.0
        %2676 = vmatprep.subr.mxu0 0.0
        %2677 = vmatpush1.msra.mxu0 0.0
        %2678 = vmatprep.mubr.f32.mxu0 0.0
        %2679 = vmatmul.mubr.f32.gmra.mrb[0].mxu0 %v2612
        %v2680 = vpop.f32.mrb[0].mxu0
        %v2681 = vadd.f32 0.0, %v2680
        %v2682 = vpop.f32.mrb[0].mxu0
        %2683 = vdwg.mxu0
        %v2685 = vsel %vm2575, %v2593, 0
        %2687 = vmatprep.subr.mxu0 0.0
        %2688 = vmatpush1.msra.mxu0 %v2594
        %2689 = vmatprep.subr.mxu0 0.0
        %2690 = vmatpush1.msra.mxu0 %v2595
        %2691 = vmatprep.subr.mxu0 0.0
        %2692 = vmatpush1.msra.mxu0 %v2596
        %2693 = vmatprep.subr.mxu0 0.0
        %2694 = vmatpush1.msra.mxu0 %v2597
        %2695 = vmatprep.subr.mxu0 0.0
        %2696 = vmatpush1.msra.mxu0 %v2598
        %2697 = vmatprep.subr.mxu0 0.0
        %2698 = vmatpush1.msra.mxu0 %v2599
        %2699 = vmatprep.subr.mxu0 0.0
        %2700 = vmatpush1.msra.mxu0 %v2600
        %2701 = vmatprep.subr.mxu0 0.0
        %2702 = vmatpush1.msra.mxu0 %v2601
        %2703 = vmatprep.subr.mxu0 0.0
        %2704 = vmatpush1.msra.mxu0 0.0
        %2705 = vmatprep.subr.mxu0 0.0
        %2706 = vmatpush1.msra.mxu0 0.0
        %2707 = vmatprep.subr.mxu0 0.0
        %2708 = vmatpush1.msra.mxu0 0.0
        %2709 = vmatprep.subr.mxu0 0.0
        %2710 = vmatpush1.msra.mxu0 0.0
        %2711 = vmatprep.subr.mxu0 0.0
        %2712 = vmatpush1.msra.mxu0 0.0
        %2713 = vmatprep.subr.mxu0 0.0
        %2714 = vmatpush1.msra.mxu0 0.0
        %2715 = vmatprep.subr.mxu0 0.0
        %2716 = vmatpush1.msra.mxu0 0.0
        %2717 = vmatprep.subr.mxu0 0.0
        %2718 = vmatpush1.msra.mxu0 0.0
        %2719 = vmatprep.subr.mxu0 0.0
        %2720 = vmatpush1.msra.mxu0 0.0
        %2721 = vmatprep.subr.mxu0 0.0
        %2722 = vmatpush1.msra.mxu0 0.0
        %2723 = vmatprep.subr.mxu0 0.0
        %2724 = vmatpush1.msra.mxu0 0.0
        %2725 = vmatprep.subr.mxu0 0.0
        %2726 = vmatpush1.msra.mxu0 0.0
        %2727 = vmatprep.subr.mxu0 0.0
        %2728 = vmatpush1.msra.mxu0 0.0
        %2729 = vmatprep.subr.mxu0 0.0
        %2730 = vmatpush1.msra.mxu0 0.0
        %2731 = vmatprep.subr.mxu0 0.0
        %2732 = vmatpush1.msra.mxu0 0.0
        %2733 = vmatprep.subr.mxu0 0.0
        %2734 = vmatpush1.msra.mxu0 0.0
        %2735 = vmatprep.subr.mxu0 0.0
        %2736 = vmatpush1.msra.mxu0 0.0
        %2737 = vmatprep.subr.mxu0 0.0
        %2738 = vmatpush1.msra.mxu0 0.0
        %2739 = vmatprep.subr.mxu0 0.0
        %2740 = vmatpush1.msra.mxu0 0.0
        %2741 = vmatprep.subr.mxu0 0.0
        %2742 = vmatpush1.msra.mxu0 0.0
        %2743 = vmatprep.subr.mxu0 0.0
        %2744 = vmatpush1.msra.mxu0 0.0
        %2745 = vmatprep.subr.mxu0 0.0
        %2746 = vmatpush1.msra.mxu0 0.0
        %2747 = vmatprep.subr.mxu0 0.0
        %2748 = vmatpush1.msra.mxu0 0.0
        %2749 = vmatprep.subr.mxu0 0.0
        %2750 = vmatpush1.msra.mxu0 0.0
        %2751 = vmatprep.mubr.f32.mxu0 0.0
        %2752 = vmatmul.mubr.f32.gmra.mrb[0].mxu0 %v2685
        %v2753 = vpop.f32.mrb[0].mxu0
        %v2754 = vadd.f32 %v2681, %v2753
        %v2755 = vpop.f32.mrb[0].mxu0
        %2756 = vdwg.mxu0
        %v2757 = vld [vmem:[#allocation6 + $0x2] sm:$0x1f]
        %v2758 = vld [vmem:[%s7 + $0x80] sm:$0xff]
        %v2759 = vld [vmem:[%s7 + $0x88] sm:$0xff]
        %v2760 = vld [vmem:[%s7 + $0x90] sm:$0xff]
        %v2761 = vld [vmem:[%s7 + $0x98] sm:$0xff]
        %v2762 = vld [vmem:[%s7 + $0xa0] sm:$0xff]
        %v2763 = vld [vmem:[%s7 + $0xa8] sm:$0xff]
        %v2764 = vld [vmem:[%s7 + $0xb0] sm:$0xff]
        %v2765 = vld [vmem:[%s7 + $0xb8] sm:$0xff]
        %v2767 = vsel %vm2575, %v2757, 0
        %2769 = vmatprep.subr.mxu0 0.0
        %2770 = vmatpush1.msra.mxu0 %v2758
        %2771 = vmatprep.subr.mxu0 0.0
        %2772 = vmatpush1.msra.mxu0 %v2759
        %2773 = vmatprep.subr.mxu0 0.0
        %2774 = vmatpush1.msra.mxu0 %v2760
        %2775 = vmatprep.subr.mxu0 0.0
        %2776 = vmatpush1.msra.mxu0 %v2761
        %2777 = vmatprep.subr.mxu0 0.0
        %2778 = vmatpush1.msra.mxu0 %v2762
        %2779 = vmatprep.subr.mxu0 0.0
        %2780 = vmatpush1.msra.mxu0 %v2763
        %2781 = vmatprep.subr.mxu0 0.0
        %2782 = vmatpush1.msra.mxu0 %v2764
        %2783 = vmatprep.subr.mxu0 0.0
        %2784 = vmatpush1.msra.mxu0 %v2765
        %2785 = vmatprep.subr.mxu0 0.0
        %2786 = vmatpush1.msra.mxu0 0.0
        %2787 = vmatprep.subr.mxu0 0.0
        %2788 = vmatpush1.msra.mxu0 0.0
        %2789 = vmatprep.subr.mxu0 0.0
        %2790 = vmatpush1.msra.mxu0 0.0
        %2791 = vmatprep.subr.mxu0 0.0
        %2792 = vmatpush1.msra.mxu0 0.0
        %2793 = vmatprep.subr.mxu0 0.0
        %2794 = vmatpush1.msra.mxu0 0.0
        %2795 = vmatprep.subr.mxu0 0.0
        %2796 = vmatpush1.msra.mxu0 0.0
        %2797 = vmatprep.subr.mxu0 0.0
        %2798 = vmatpush1.msra.mxu0 0.0
        %2799 = vmatprep.subr.mxu0 0.0
        %2800 = vmatpush1.msra.mxu0 0.0
        %2801 = vmatprep.subr.mxu0 0.0
        %2802 = vmatpush1.msra.mxu0 0.0
        %2803 = vmatprep.subr.mxu0 0.0
        %2804 = vmatpush1.msra.mxu0 0.0
        %2805 = vmatprep.subr.mxu0 0.0
        %2806 = vmatpush1.msra.mxu0 0.0
        %2807 = vmatprep.subr.mxu0 0.0
        %2808 = vmatpush1.msra.mxu0 0.0
        %2809 = vmatprep.subr.mxu0 0.0
        %2810 = vmatpush1.msra.mxu0 0.0
        %2811 = vmatprep.subr.mxu0 0.0
        %2812 = vmatpush1.msra.mxu0 0.0
        %2813 = vmatprep.subr.mxu0 0.0
        %2814 = vmatpush1.msra.mxu0 0.0
        %2815 = vmatprep.subr.mxu0 0.0
        %2816 = vmatpush1.msra.mxu0 0.0
        %2817 = vmatprep.subr.mxu0 0.0
        %2818 = vmatpush1.msra.mxu0 0.0
        %2819 = vmatprep.subr.mxu0 0.0
        %2820 = vmatpush1.msra.mxu0 0.0
        %2821 = vmatprep.subr.mxu0 0.0
        %2822 = vmatpush1.msra.mxu0 0.0
        %2823 = vmatprep.subr.mxu0 0.0
        %2824 = vmatpush1.msra.mxu0 0.0
        %2825 = vmatprep.subr.mxu0 0.0
        %2826 = vmatpush1.msra.mxu0 0.0
        %2827 = vmatprep.subr.mxu0 0.0
        %2828 = vmatpush1.msra.mxu0 0.0
        %2829 = vmatprep.subr.mxu0 0.0
        %2830 = vmatpush1.msra.mxu0 0.0
        %2831 = vmatprep.subr.mxu0 0.0
        %2832 = vmatpush1.msra.mxu0 0.0
        %2833 = vmatprep.mubr.f32.mxu0 0.0
        %2834 = vmatmul.mubr.f32.gmra.mrb[0].mxu0 %v2767
        %v2835 = vpop.f32.mrb[0].mxu0
        %v2836 = vadd.f32 0.0, %v2835
        %v2837 = vpop.f32.mrb[0].mxu0
        %2838 = vdwg.mxu0
        %v2839 = vadd.f32 %v2754, %v2836
        %v2840 = vld [vmem:[#allocation16] sm:$0x1]
        %v2841 = vlaneseq
        %v2842 = vshrl.u32 %v2841, 7
        %v2843 = vsub.s32 0, %v2842
        %v2844 = vrot.slane %v2840, %v2843
        %v2845 = vmul.f32 %v2839, %v2844
        %v2846 = vld [vmem:[#allocation16 + $0x1] sm:$0x1]
        %v2847 = vlaneseq
        %v2848 = vshrl.u32 %v2847, 7
        %v2849 = vsub.s32 0, %v2848
        %v2850 = vrot.slane %v2846, %v2849
        %v2851 = vadd.f32 %v2845, %v2850
        %v2852 = vmax.f32 %v2851, 0.0
        %vm2853 = vcmask 520192
        %2854 = vst.msk [vmem:[#allocation7] sm:$0x1f] %vm2853, %v2852
        %v2855 = vld [vmem:[#allocation7] ss:$4 sm:$0x1]
        %s2856 = scalar_lea.vmem [#allocation7], 1
        %v2857 = vld [vmem:[%s2856] ss:$4 sm:$0x1]
        %v2858 = vmax.f32 %v2855, %v2857
        %s2859 = scalar_lea.vmem [#allocation7], 2
        %v2860 = vld [vmem:[%s2859] ss:$4 sm:$0x1]
        %v2861 = vmax.f32 %v2858, %v2860
        %s2862 = scalar_lea.vmem [#allocation7], 3
        %v2863 = vld [vmem:[%s2862] ss:$4 sm:$0x1]
        %v2864 = vmax.f32 %v2861, %v2863
        %v2865 = vadd.f32 %v2864, 0.0
        %v2866 = vlaneseq
        %v2867 = vshrl.u32 %v2866, 7
        %v2868 = vlaneseq
        %v2869 = vand.u32 %v2868, 127
        %vm2870 = vcmp.le.s32.totalorder %v2869, %v2867
        %v2871 = vld [vmem:[%s1042] sm:$0xff]
        %v2872 = vld [vmem:[#allocation17] sm:$0xff]
        %v2873 = vld [vmem:[#allocation17 + $0x8] sm:$0xff]
        %v2874 = vld [vmem:[#allocation17 + $0x10] sm:$0xff]
        %v2875 = vld [vmem:[#allocation17 + $0x18] sm:$0xff]
        %v2876 = vld [vmem:[#allocation17 + $0x20] sm:$0xff]
        %v2877 = vld [vmem:[#allocation17 + $0x28] sm:$0xff]
        %v2878 = vld [vmem:[#allocation17 + $0x30] sm:$0xff]
        %v2879 = vld [vmem:[#allocation17 + $0x38] sm:$0xff]
        %v2880 = vld [vmem:[#allocation17 + $0x40] sm:$0xff]
        %v2881 = vld [vmem:[#allocation17 + $0x48] sm:$0xff]
        %v2882 = vld [vmem:[#allocation17 + $0x50] sm:$0xff]
        %v2883 = vld [vmem:[#allocation17 + $0x58] sm:$0xff]
        %v2884 = vld [vmem:[#allocation17 + $0x60] sm:$0xff]
        %v2885 = vld [vmem:[#allocation17 + $0x68] sm:$0xff]
        %v2886 = vld [vmem:[#allocation17 + $0x70] sm:$0xff]
        %v2887 = vld [vmem:[#allocation17 + $0x78] sm:$0xff]
        %v2888 = vld [vmem:[#allocation17 + $0x80] sm:$0xff]
        %v2889 = vld [vmem:[#allocation17 + $0x88] sm:$0xff]
        %v2890 = vld [vmem:[#allocation17 + $0x90] sm:$0xff]
        %v2891 = vld [vmem:[#allocation17 + $0x98] sm:$0xff]
        %v2892 = vld [vmem:[#allocation17 + $0xa0] sm:$0xff]
        %v2893 = vld [vmem:[#allocation17 + $0xa8] sm:$0xff]
        %v2894 = vld [vmem:[#allocation17 + $0xb0] sm:$0xff]
        %v2895 = vld [vmem:[#allocation17 + $0xb8] sm:$0xff]
        %v2896 = vld [vmem:[#allocation17 + $0xc0] sm:$0xff]
        %v2897 = vld [vmem:[#allocation17 + $0xc8] sm:$0xff]
        %v2898 = vld [vmem:[#allocation17 + $0xd0] sm:$0xff]
        %v2899 = vld [vmem:[#allocation17 + $0xd8] sm:$0xff]
        %v2900 = vld [vmem:[#allocation17 + $0xe0] sm:$0xff]
        %v2901 = vld [vmem:[#allocation17 + $0xe8] sm:$0xff]
        %v2902 = vld [vmem:[#allocation17 + $0xf0] sm:$0xff]
        %v2903 = vld [vmem:[#allocation17 + $0xf8] sm:$0xff]
        %v2904 = vld [vmem:[#allocation17 + $0x100] sm:$0xff]
        %v2905 = vld [vmem:[#allocation17 + $0x108] sm:$0xff]
        %v2906 = vld [vmem:[#allocation17 + $0x110] sm:$0xff]
        %v2907 = vld [vmem:[#allocation17 + $0x118] sm:$0xff]
        %v2908 = vld [vmem:[#allocation17 + $0x120] sm:$0xff]
        %v2909 = vld [vmem:[#allocation17 + $0x128] sm:$0xff]
        %v2910 = vld [vmem:[#allocation17 + $0x130] sm:$0xff]
        %v2911 = vld [vmem:[#allocation17 + $0x138] sm:$0xff]
        %v2912 = vld [vmem:[#allocation17 + $0x140] sm:$0xff]
        %v2913 = vld [vmem:[#allocation17 + $0x148] sm:$0xff]
        %v2914 = vld [vmem:[#allocation17 + $0x150] sm:$0xff]
        %v2915 = vld [vmem:[#allocation17 + $0x158] sm:$0xff]
        %v2916 = vld [vmem:[#allocation17 + $0x160] sm:$0xff]
        %v2917 = vld [vmem:[#allocation17 + $0x168] sm:$0xff]
        %v2918 = vld [vmem:[#allocation17 + $0x170] sm:$0xff]
        %v2919 = vld [vmem:[#allocation17 + $0x178] sm:$0xff]
        %v2920 = vld [vmem:[#allocation19] sm:$0x7]
        %v2922 = vlaneseq
        %v2923 = vshrl.u32 %v2922, 7
        %v2924 = vsub.s32 0, %v2923
        %v2925 = vrot.slane %v2920, %v2924
        %v2926 = vlaneseq
        %v2927 = vshrl.u32 %v2926, 7
        %v2928 = vsub.s32 1, %v2927
        %v2929 = vrot.slane %v2920, %v2928
        %v2930 = vlaneseq
        %v2931 = vshrl.u32 %v2930, 7
        %v2932 = vsub.s32 2, %v2931
        %v2933 = vrot.slane %v2920, %v2932
        %2937 = vmatprep.subr.mxu0 %v2873
        %2938 = vmatpush1.msra.mxu0 %v2872
        %2939 = vmatprep.subr.mxu0 %v2876
        %2940 = vmatpush1.msra.mxu0 %v2875
        %2941 = vmatprep.subr.mxu0 %v2879
        %2942 = vmatpush1.msra.mxu0 %v2878
        %2943 = vmatprep.subr.mxu0 %v2882
        %2944 = vmatpush1.msra.mxu0 %v2881
        %2945 = vmatprep.subr.mxu0 %v2885
        %2946 = vmatpush1.msra.mxu0 %v2884
        %2947 = vmatprep.subr.mxu0 %v2888
        %2948 = vmatpush1.msra.mxu0 %v2887
        %2949 = vmatprep.subr.mxu0 %v2891
        %2950 = vmatpush1.msra.mxu0 %v2890
        %2951 = vmatprep.subr.mxu0 %v2894
        %2952 = vmatpush1.msra.mxu0 %v2893
        %2953 = vmatprep.subr.mxu0 %v2897
        %2954 = vmatpush1.msra.mxu0 %v2896
        %2955 = vmatprep.subr.mxu0 %v2900
        %2956 = vmatpush1.msra.mxu0 %v2899
        %2957 = vmatprep.subr.mxu0 %v2903
        %2958 = vmatpush1.msra.mxu0 %v2902
        %2959 = vmatprep.subr.mxu0 %v2906
        %2960 = vmatpush1.msra.mxu0 %v2905
        %2961 = vmatprep.subr.mxu0 %v2909
        %2962 = vmatpush1.msra.mxu0 %v2908
        %2963 = vmatprep.subr.mxu0 %v2912
        %2964 = vmatpush1.msra.mxu0 %v2911
        %2965 = vmatprep.subr.mxu0 %v2915
        %2966 = vmatpush1.msra.mxu0 %v2914
        %2967 = vmatprep.subr.mxu0 %v2918
        %2968 = vmatpush1.msra.mxu0 %v2917
        %2969 = vmatprep.subr.mxu0 0.0
        %2970 = vmatpush1.msra.mxu0 0.0
        %2971 = vmatprep.subr.mxu0 0.0
        %2972 = vmatpush1.msra.mxu0 0.0
        %2973 = vmatprep.subr.mxu0 0.0
        %2974 = vmatpush1.msra.mxu0 0.0
        %2975 = vmatprep.subr.mxu0 0.0
        %2976 = vmatpush1.msra.mxu0 0.0
        %2977 = vmatprep.subr.mxu0 0.0
        %2978 = vmatpush1.msra.mxu0 0.0
        %2979 = vmatprep.subr.mxu0 0.0
        %2980 = vmatpush1.msra.mxu0 0.0
        %2981 = vmatprep.subr.mxu0 0.0
        %2982 = vmatpush1.msra.mxu0 0.0
        %2983 = vmatprep.subr.mxu0 0.0
        %2984 = vmatpush1.msra.mxu0 0.0
        %2985 = vmatprep.subr.mxu0 0.0
        %2986 = vmatpush1.msra.mxu0 0.0
        %2987 = vmatprep.subr.mxu0 0.0
        %2988 = vmatpush1.msra.mxu0 0.0
        %2989 = vmatprep.subr.mxu0 0.0
        %2990 = vmatpush1.msra.mxu0 0.0
        %2991 = vmatprep.subr.mxu0 0.0
        %2992 = vmatpush1.msra.mxu0 0.0
        %2993 = vmatprep.subr.mxu0 0.0
        %2994 = vmatpush1.msra.mxu0 0.0
        %2995 = vmatprep.subr.mxu0 0.0
        %2996 = vmatpush1.msra.mxu0 0.0
        %2997 = vmatprep.subr.mxu0 0.0
        %2998 = vmatpush1.msra.mxu0 0.0
        %2999 = vmatprep.subr.mxu0 0.0
        %3000 = vmatpush1.msra.mxu0 0.0
        %3001 = vmatprep.mubr.f32.mxu0 0.0
        %3002 = vmatmul.mubr.f32.gmra.mrb[0].mxu0 %v2871
        %v3003 = vpop.f32.mrb[0].mxu0
        %v3004 = vadd.f32 %v2925, %v3003
        %v3005 = vpop.f32.mrb[0].mxu0
        %v3006 = vadd.f32 %v2929, %v3005
        %3007 = vdwg.mxu0
        %3008 = vmatprep.subr.mxu0 0.0
        %3009 = vmatpush1.msra.mxu0 %v2874
        %3010 = vmatprep.subr.mxu0 0.0
        %3011 = vmatpush1.msra.mxu0 %v2877
        %3012 = vmatprep.subr.mxu0 0.0
        %3013 = vmatpush1.msra.mxu0 %v2880
        %3014 = vmatprep.subr.mxu0 0.0
        %3015 = vmatpush1.msra.mxu0 %v2883
        %3016 = vmatprep.subr.mxu0 0.0
        %3017 = vmatpush1.msra.mxu0 %v2886
        %3018 = vmatprep.subr.mxu0 0.0
        %3019 = vmatpush1.msra.mxu0 %v2889
        %3020 = vmatprep.subr.mxu0 0.0
        %3021 = vmatpush1.msra.mxu0 %v2892
        %3022 = vmatprep.subr.mxu0 0.0
        %3023 = vmatpush1.msra.mxu0 %v2895
        %3024 = vmatprep.subr.mxu0 0.0
        %3025 = vmatpush1.msra.mxu0 %v2898
        %3026 = vmatprep.subr.mxu0 0.0
        %3027 = vmatpush1.msra.mxu0 %v2901
        %3028 = vmatprep.subr.mxu0 0.0
        %3029 = vmatpush1.msra.mxu0 %v2904
        %3030 = vmatprep.subr.mxu0 0.0
        %3031 = vmatpush1.msra.mxu0 %v2907
        %3032 = vmatprep.subr.mxu0 0.0
        %3033 = vmatpush1.msra.mxu0 %v2910
        %3034 = vmatprep.subr.mxu0 0.0
        %3035 = vmatpush1.msra.mxu0 %v2913
        %3036 = vmatprep.subr.mxu0 0.0
        %3037 = vmatpush1.msra.mxu0 %v2916
        %3038 = vmatprep.subr.mxu0 0.0
        %3039 = vmatpush1.msra.mxu0 %v2919
        %3040 = vmatprep.subr.mxu0 0.0
        %3041 = vmatpush1.msra.mxu0 0.0
        %3042 = vmatprep.subr.mxu0 0.0
        %3043 = vmatpush1.msra.mxu0 0.0
        %3044 = vmatprep.subr.mxu0 0.0
        %3045 = vmatpush1.msra.mxu0 0.0
        %3046 = vmatprep.subr.mxu0 0.0
        %3047 = vmatpush1.msra.mxu0 0.0
        %3048 = vmatprep.subr.mxu0 0.0
        %3049 = vmatpush1.msra.mxu0 0.0
        %3050 = vmatprep.subr.mxu0 0.0
        %3051 = vmatpush1.msra.mxu0 0.0
        %3052 = vmatprep.subr.mxu0 0.0
        %3053 = vmatpush1.msra.mxu0 0.0
        %3054 = vmatprep.subr.mxu0 0.0
        %3055 = vmatpush1.msra.mxu0 0.0
        %3056 = vmatprep.subr.mxu0 0.0
        %3057 = vmatpush1.msra.mxu0 0.0
        %3058 = vmatprep.subr.mxu0 0.0
        %3059 = vmatpush1.msra.mxu0 0.0
        %3060 = vmatprep.subr.mxu0 0.0
        %3061 = vmatpush1.msra.mxu0 0.0
        %3062 = vmatprep.subr.mxu0 0.0
        %3063 = vmatpush1.msra.mxu0 0.0
        %3064 = vmatprep.subr.mxu0 0.0
        %3065 = vmatpush1.msra.mxu0 0.0
        %3066 = vmatprep.subr.mxu0 0.0
        %3067 = vmatpush1.msra.mxu0 0.0
        %3068 = vmatprep.subr.mxu0 0.0
        %3069 = vmatpush1.msra.mxu0 0.0
        %3070 = vmatprep.subr.mxu0 0.0
        %3071 = vmatpush1.msra.mxu0 0.0
        %3072 = vmatprep.mubr.f32.mxu0 0.0
        %3073 = vmatmul.mubr.f32.gmra.mrb[0].mxu0 %v2871
        %v3074 = vpop.f32.mrb[0].mxu0
        %v3075 = vadd.f32 %v2933, %v3074
        %v3076 = vpop.f32.mrb[0].mxu0
        %3077 = vdwg.mxu0
        %3078 = vmatprep.subr.mxu0 0.0
        %3079 = vmatpush1.xpose.msra.mxu0 %v3006
        %3080 = vmatprep.subr.mxu0 0.0
        %3081 = vmatpush1.xpose.msra.mxu0 0.0
        %3082 = vmatprep.subr.mxu0 0.0
        %3083 = vmatpush1.xpose.msra.mxu0 0.0
        %3084 = vmatprep.subr.mxu0 0.0
        %3085 = vmatpush1.xpose.msra.mxu0 0.0
        %3086 = vmatprep.subr.mxu0 0.0
        %3087 = vmatpush1.xpose.msra.mxu0 0.0
        %3088 = vmatprep.subr.mxu0 0.0
        %3089 = vmatpush1.xpose.msra.mxu0 0.0
        %3090 = vmatprep.subr.mxu0 0.0
        %3091 = vmatpush1.xpose.msra.mxu0 0.0
        %3092 = vmatprep.subr.mxu0 0.0
        %3093 = vmatpush1.xpose.msra.mxu0 0.0
        %3094 = vmatprep.subr.mxu0 0.0
        %3095 = vmatpush1.xpose.msra.mxu0 0.0
        %3096 = vmatprep.subr.mxu0 0.0
        %3097 = vmatpush1.xpose.msra.mxu0 0.0
        %3098 = vmatprep.subr.mxu0 0.0
        %3099 = vmatpush1.xpose.msra.mxu0 0.0
        %3100 = vmatprep.subr.mxu0 0.0
        %3101 = vmatpush1.xpose.msra.mxu0 0.0
        %3102 = vmatprep.subr.mxu0 0.0
        %3103 = vmatpush1.xpose.msra.mxu0 0.0
        %3104 = vmatprep.subr.mxu0 0.0
        %3105 = vmatpush1.xpose.msra.mxu0 0.0
        %3106 = vmatprep.subr.mxu0 0.0
        %3107 = vmatpush1.xpose.msra.mxu0 0.0
        %3108 = vmatprep.subr.mxu0 0.0
        %3109 = vmatpush1.xpose.msra.mxu0 0.0
        %3110 = vmatprep.subr.mxu0 0.0
        %3111 = vmatpush1.xpose.msra.mxu0 0.0
        %3112 = vmatprep.subr.mxu0 0.0
        %3113 = vmatpush1.xpose.msra.mxu0 0.0
        %3114 = vmatprep.subr.mxu0 0.0
        %3115 = vmatpush1.xpose.msra.mxu0 0.0
        %3116 = vmatprep.subr.mxu0 0.0
        %3117 = vmatpush1.xpose.msra.mxu0 0.0
        %3118 = vmatprep.subr.mxu0 0.0
        %3119 = vmatpush1.xpose.msra.mxu0 0.0
        %3120 = vmatprep.subr.mxu0 0.0
        %3121 = vmatpush1.xpose.msra.mxu0 0.0
        %3122 = vmatprep.subr.mxu0 0.0
        %3123 = vmatpush1.xpose.msra.mxu0 0.0
        %3124 = vmatprep.subr.mxu0 0.0
        %3125 = vmatpush1.xpose.msra.mxu0 0.0
        %3126 = vmatprep.subr.mxu0 0.0
        %3127 = vmatpush1.xpose.msra.mxu0 0.0
        %3128 = vmatprep.subr.mxu0 0.0
        %3129 = vmatpush1.xpose.msra.mxu0 0.0
        %3130 = vmatprep.subr.mxu0 0.0
        %3131 = vmatpush1.xpose.msra.mxu0 0.0
        %3132 = vmatprep.subr.mxu0 0.0
        %3133 = vmatpush1.xpose.msra.mxu0 0.0
        %3134 = vmatprep.subr.mxu0 0.0
        %3135 = vmatpush1.xpose.msra.mxu0 0.0
        %3136 = vmatprep.subr.mxu0 0.0
        %3137 = vmatpush1.xpose.msra.mxu0 0.0
        %3138 = vmatprep.subr.mxu0 0.0
        %3139 = vmatpush1.xpose.msra.mxu0 0.0
        %3140 = vmatprep.subr.mxu0 0.0
        %3141 = vmatpush1.xpose.msra.mxu0 0.0
        %3142 = vmatprep.mubr.f32.mxu0 0.0
        %3143 = vmatmul.mubr.f32.gmra.mrb[0].mxu0 %v3004
        %v3144 = vpop.f32.mrb[0].mxu0
        %v3145 = vadd.f32 0.0, %v3144
        %v3146 = vpop.f32.mrb[0].mxu0
        %3147 = vdwg.mxu0
        %v3148 = vmul.f32 %v3145, 0.1
        %v3149 = vsel %vm2870, %v3148, -1e+30
        %vm3150 = vcmask 64512
        %v3151 = vsel %vm3150, %v3149, -inf
        %3152 = vmax.xlane.f32.xlu0 %v3151
        %v3153 = vpop.xlane.xlu0 %3152
        %v3154 = vsub.f32 %v3149, %v3153
        %v3155 = vmul.f32 %v3154, 1.442695
        %v3156 = vpow.pop %v3155
        %v3157 = vsel %vm3150, %v3156, 0.0
        %3158 = vadd.xlane.f32.xlu0 %v3157
        %v3159 = vpop.xlane.xlu0 %3158
        %v3160 = vrcp.pop %v3159
        %v3161 = vmul.f32 %v3156, %v3160
        %v3163 = vsel %vm3150, %v3161, 0
        %3165 = vmatprep.subr.mxu0 0.0
        %3166 = vmatpush1.msra.mxu0 %v3075
        %3167 = vmatprep.subr.mxu0 0.0
        %3168 = vmatpush1.msra.mxu0 0.0
        %3169 = vmatprep.subr.mxu0 0.0
        %3170 = vmatpush1.msra.mxu0 0.0
        %3171 = vmatprep.subr.mxu0 0.0
        %3172 = vmatpush1.msra.mxu0 0.0
        %3173 = vmatprep.subr.mxu0 0.0
        %3174 = vmatpush1.msra.mxu0 0.0
        %3175 = vmatprep.subr.mxu0 0.0
        %3176 = vmatpush1.msra.mxu0 0.0
        %3177 = vmatprep.subr.mxu0 0.0
        %3178 = vmatpush1.msra.mxu0 0.0
        %3179 = vmatprep.subr.mxu0 0.0
        %3180 = vmatpush1.msra.mxu0 0.0
        %3181 = vmatprep.subr.mxu0 0.0
        %3182 = vmatpush1.msra.mxu0 0.0
        %3183 = vmatprep.subr.mxu0 0.0
        %3184 = vmatpush1.msra.mxu0 0.0
        %3185 = vmatprep.subr.mxu0 0.0
        %3186 = vmatpush1.msra.mxu0 0.0
        %3187 = vmatprep.subr.mxu0 0.0
        %3188 = vmatpush1.msra.mxu0 0.0
        %3189 = vmatprep.subr.mxu0 0.0
        %3190 = vmatpush1.msra.mxu0 0.0
        %3191 = vmatprep.subr.mxu0 0.0
        %3192 = vmatpush1.msra.mxu0 0.0
        %3193 = vmatprep.subr.mxu0 0.0
        %3194 = vmatpush1.msra.mxu0 0.0
        %3195 = vmatprep.subr.mxu0 0.0
        %3196 = vmatpush1.msra.mxu0 0.0
        %3197 = vmatprep.subr.mxu0 0.0
        %3198 = vmatpush1.msra.mxu0 0.0
        %3199 = vmatprep.subr.mxu0 0.0
        %3200 = vmatpush1.msra.mxu0 0.0
        %3201 = vmatprep.subr.mxu0 0.0
        %3202 = vmatpush1.msra.mxu0 0.0
        %3203 = vmatprep.subr.mxu0 0.0
        %3204 = vmatpush1.msra.mxu0 0.0
        %3205 = vmatprep.subr.mxu0 0.0
        %3206 = vmatpush1.msra.mxu0 0.0
        %3207 = vmatprep.subr.mxu0 0.0
        %3208 = vmatpush1.msra.mxu0 0.0
        %3209 = vmatprep.subr.mxu0 0.0
        %3210 = vmatpush1.msra.mxu0 0.0
        %3211 = vmatprep.subr.mxu0 0.0
        %3212 = vmatpush1.msra.mxu0 0.0
        %3213 = vmatprep.subr.mxu0 0.0
        %3214 = vmatpush1.msra.mxu0 0.0
        %3215 = vmatprep.subr.mxu0 0.0
        %3216 = vmatpush1.msra.mxu0 0.0
        %3217 = vmatprep.subr.mxu0 0.0
        %3218 = vmatpush1.msra.mxu0 0.0
        %3219 = vmatprep.subr.mxu0 0.0
        %3220 = vmatpush1.msra.mxu0 0.0
        %3221 = vmatprep.subr.mxu0 0.0
        %3222 = vmatpush1.msra.mxu0 0.0
        %3223 = vmatprep.subr.mxu0 0.0
        %3224 = vmatpush1.msra.mxu0 0.0
        %3225 = vmatprep.subr.mxu0 0.0
        %3226 = vmatpush1.msra.mxu0 0.0
        %3227 = vmatprep.subr.mxu0 0.0
        %3228 = vmatpush1.msra.mxu0 0.0
        %3229 = vmatprep.mubr.f32.mxu0 0.0
        %3230 = vmatmul.mubr.f32.gmra.mrb[0].mxu0 %v3163
        %v3231 = vpop.f32.mrb[0].mxu0
        %v3232 = vadd.f32 0.0, %v3231
        %v3233 = vpop.f32.mrb[0].mxu0
        %3234 = vdwg.mxu0
        %v3235 = vld [vmem:[#allocation20] sm:$0xff]
        %v3236 = vld [vmem:[#allocation20 + $0x8] sm:$0xff]
        %v3237 = vld [vmem:[#allocation20 + $0x10] sm:$0xff]
        %v3238 = vld [vmem:[#allocation20 + $0x18] sm:$0xff]
        %v3239 = vld [vmem:[#allocation20 + $0x20] sm:$0xff]
        %v3240 = vld [vmem:[#allocation20 + $0x28] sm:$0xff]
        %v3241 = vld [vmem:[#allocation20 + $0x30] sm:$0xff]
        %v3242 = vld [vmem:[#allocation20 + $0x38] sm:$0xff]
        %v3243 = vld [vmem:[#allocation20 + $0x40] sm:$0xff]
        %v3244 = vld [vmem:[#allocation20 + $0x48] sm:$0xff]
        %v3245 = vld [vmem:[#allocation20 + $0x50] sm:$0xff]
        %v3246 = vld [vmem:[#allocation20 + $0x58] sm:$0xff]
        %v3247 = vld [vmem:[#allocation20 + $0x60] sm:$0xff]
        %v3248 = vld [vmem:[#allocation20 + $0x68] sm:$0xff]
        %v3249 = vld [vmem:[#allocation20 + $0x70] sm:$0xff]
        %v3250 = vld [vmem:[#allocation20 + $0x78] sm:$0xff]
        %v3251 = vld [vmem:[#allocation22] sm:$0x1]
        %v3253 = vlaneseq
        %v3254 = vshrl.u32 %v3253, 7
        %v3255 = vsub.s32 0, %v3254
        %v3256 = vrot.slane %v3251, %v3255
        %3258 = vmatprep.subr.mxu0 0.0
        %3259 = vmatpush1.msra.mxu0 %v3235
        %3260 = vmatprep.subr.mxu0 0.0
        %3261 = vmatpush1.msra.mxu0 %v3236
        %3262 = vmatprep.subr.mxu0 0.0
        %3263 = vmatpush1.msra.mxu0 %v3237
        %3264 = vmatprep.subr.mxu0 0.0
        %3265 = vmatpush1.msra.mxu0 %v3238
        %3266 = vmatprep.subr.mxu0 0.0
        %3267 = vmatpush1.msra.mxu0 %v3239
        %3268 = vmatprep.subr.mxu0 0.0
        %3269 = vmatpush1.msra.mxu0 %v3240
        %3270 = vmatprep.subr.mxu0 0.0
        %3271 = vmatpush1.msra.mxu0 %v3241
        %3272 = vmatprep.subr.mxu0 0.0
        %3273 = vmatpush1.msra.mxu0 %v3242
        %3274 = vmatprep.subr.mxu0 0.0
        %3275 = vmatpush1.msra.mxu0 %v3243
        %3276 = vmatprep.subr.mxu0 0.0
        %3277 = vmatpush1.msra.mxu0 %v3244
        %3278 = vmatprep.subr.mxu0 0.0
        %3279 = vmatpush1.msra.mxu0 %v3245
        %3280 = vmatprep.subr.mxu0 0.0
        %3281 = vmatpush1.msra.mxu0 %v3246
        %3282 = vmatprep.subr.mxu0 0.0
        %3283 = vmatpush1.msra.mxu0 %v3247
        %3284 = vmatprep.subr.mxu0 0.0
        %3285 = vmatpush1.msra.mxu0 %v3248
        %3286 = vmatprep.subr.mxu0 0.0
        %3287 = vmatpush1.msra.mxu0 %v3249
        %3288 = vmatprep.subr.mxu0 0.0
        %3289 = vmatpush1.msra.mxu0 %v3250
        %3290 = vmatprep.subr.mxu0 0.0
        %3291 = vmatpush1.msra.mxu0 0.0
        %3292 = vmatprep.subr.mxu0 0.0
        %3293 = vmatpush1.msra.mxu0 0.0
        %3294 = vmatprep.subr.mxu0 0.0
        %3295 = vmatpush1.msra.mxu0 0.0
        %3296 = vmatprep.subr.mxu0 0.0
        %3297 = vmatpush1.msra.mxu0 0.0
        %3298 = vmatprep.subr.mxu0 0.0
        %3299 = vmatpush1.msra.mxu0 0.0
        %3300 = vmatprep.subr.mxu0 0.0
        %3301 = vmatpush1.msra.mxu0 0.0
        %3302 = vmatprep.subr.mxu0 0.0
        %3303 = vmatpush1.msra.mxu0 0.0
        %3304 = vmatprep.subr.mxu0 0.0
        %3305 = vmatpush1.msra.mxu0 0.0
        %3306 = vmatprep.subr.mxu0 0.0
        %3307 = vmatpush1.msra.mxu0 0.0
        %3308 = vmatprep.subr.mxu0 0.0
        %3309 = vmatpush1.msra.mxu0 0.0
        %3310 = vmatprep.subr.mxu0 0.0
        %3311 = vmatpush1.msra.mxu0 0.0
        %3312 = vmatprep.subr.mxu0 0.0
        %3313 = vmatpush1.msra.mxu0 0.0
        %3314 = vmatprep.subr.mxu0 0.0
        %3315 = vmatpush1.msra.mxu0 0.0
        %3316 = vmatprep.subr.mxu0 0.0
        %3317 = vmatpush1.msra.mxu0 0.0
        %3318 = vmatprep.subr.mxu0 0.0
        %3319 = vmatpush1.msra.mxu0 0.0
        %3320 = vmatprep.subr.mxu0 0.0
        %3321 = vmatpush1.msra.mxu0 0.0
        %3322 = vmatprep.mubr.f32.mxu0 0.0
        %3323 = vmatmul.mubr.f32.gmra.mrb[0].mxu0 %v3232
        %v3324 = vpop.f32.mrb[0].mxu0
        %v3325 = vadd.f32 %v3256, %v3324
        %v3326 = vpop.f32.mrb[0].mxu0
        %3327 = vdwg.mxu0
        %v3328 = vadd.f32 %v2871, %v3325
        %v3329 = vld [vmem:[#allocation29] sm:$0x1]
        %v3330 = vld [vmem:[#allocation29 + $0x1] sm:$0x1]
        %3331 = vadd.xlane.f32.xlu0 %v3328
        %v3332 = vpop.xlane.xlu0 %3331
        %v3333 = vmul.f32 %v3332, 0.01
        %v3334 = vmul.f32 %v3328, %v3328
        %3335 = vadd.xlane.f32.xlu0 %v3334
        %v3336 = vpop.xlane.xlu0 %3335
        %v3337 = vmul.f32 %v3336, 0.01
        %v3338 = vmul.f32 %v3333, %v3333
        %v3339 = vsub.f32 %v3337, %v3338
        %v3340 = vsub.f32 %v3328, %v3333
        %v3341 = vadd.f32 %v3339, 1e-05
        %v3342 = vrsqrt.pop %v3341
        %v3343 = vmul.f32 %v3340, %v3342
        %v3344 = vlaneseq
        %v3345 = vshrl.u32 %v3344, 7
        %v3346 = vsub.s32 0, %v3345
        %v3347 = vrot.slane %v3329, %v3346
        %v3348 = vmul.f32 %v3343, %v3347
        %v3349 = vlaneseq
        %v3350 = vshrl.u32 %v3349, 7
        %v3351 = vsub.s32 0, %v3350
        %v3352 = vrot.slane %v3330, %v3351
        %v3353 = vadd.f32 %v3348, %v3352
        %v3354 = vld [vmem:[#allocation23] sm:$0xff]
        %v3355 = vld [vmem:[#allocation23 + $0x8] sm:$0xff]
        %v3356 = vld [vmem:[#allocation23 + $0x10] sm:$0xff]
        %v3357 = vld [vmem:[#allocation23 + $0x18] sm:$0xff]
        %v3358 = vld [vmem:[#allocation23 + $0x20] sm:$0xff]
        %v3359 = vld [vmem:[#allocation23 + $0x28] sm:$0xff]
        %v3360 = vld [vmem:[#allocation23 + $0x30] sm:$0xff]
        %v3361 = vld [vmem:[#allocation23 + $0x38] sm:$0xff]
        %v3362 = vld [vmem:[#allocation23 + $0x40] sm:$0xff]
        %v3363 = vld [vmem:[#allocation23 + $0x48] sm:$0xff]
        %v3364 = vld [vmem:[#allocation23 + $0x50] sm:$0xff]
        %v3365 = vld [vmem:[#allocation23 + $0x58] sm:$0xff]
        %v3366 = vld [vmem:[#allocation23 + $0x60] sm:$0xff]
        %v3367 = vld [vmem:[#allocation23 + $0x68] sm:$0xff]
        %v3368 = vld [vmem:[#allocation23 + $0x70] sm:$0xff]
        %v3369 = vld [vmem:[#allocation23 + $0x78] sm:$0xff]
        %v3370 = vld [vmem:[#allocation25] sm:$0x1]
        %v3372 = vlaneseq
        %v3373 = vshrl.u32 %v3372, 7
        %v3374 = vsub.s32 0, %v3373
        %v3375 = vrot.slane %v3370, %v3374
        %3377 = vmatprep.subr.mxu0 0.0
        %3378 = vmatpush1.msra.mxu0 %v3354
        %3379 = vmatprep.subr.mxu0 0.0
        %3380 = vmatpush1.msra.mxu0 %v3355
        %3381 = vmatprep.subr.mxu0 0.0
        %3382 = vmatpush1.msra.mxu0 %v3356
        %3383 = vmatprep.subr.mxu0 0.0
        %3384 = vmatpush1.msra.mxu0 %v3357
        %3385 = vmatprep.subr.mxu0 0.0
        %3386 = vmatpush1.msra.mxu0 %v3358
        %3387 = vmatprep.subr.mxu0 0.0
        %3388 = vmatpush1.msra.mxu0 %v3359
        %3389 = vmatprep.subr.mxu0 0.0
        %3390 = vmatpush1.msra.mxu0 %v3360
        %3391 = vmatprep.subr.mxu0 0.0
        %3392 = vmatpush1.msra.mxu0 %v3361
        %3393 = vmatprep.subr.mxu0 0.0
        %3394 = vmatpush1.msra.mxu0 %v3362
        %3395 = vmatprep.subr.mxu0 0.0
        %3396 = vmatpush1.msra.mxu0 %v3363
        %3397 = vmatprep.subr.mxu0 0.0
        %3398 = vmatpush1.msra.mxu0 %v3364
        %3399 = vmatprep.subr.mxu0 0.0
        %3400 = vmatpush1.msra.mxu0 %v3365
        %3401 = vmatprep.subr.mxu0 0.0
        %3402 = vmatpush1.msra.mxu0 %v3366
        %3403 = vmatprep.subr.mxu0 0.0
        %3404 = vmatpush1.msra.mxu0 %v3367
        %3405 = vmatprep.subr.mxu0 0.0
        %3406 = vmatpush1.msra.mxu0 %v3368
        %3407 = vmatprep.subr.mxu0 0.0
        %3408 = vmatpush1.msra.mxu0 %v3369
        %3409 = vmatprep.subr.mxu0 0.0
        %3410 = vmatpush1.msra.mxu0 0.0
        %3411 = vmatprep.subr.mxu0 0.0
        %3412 = vmatpush1.msra.mxu0 0.0
        %3413 = vmatprep.subr.mxu0 0.0
        %3414 = vmatpush1.msra.mxu0 0.0
        %3415 = vmatprep.subr.mxu0 0.0
        %3416 = vmatpush1.msra.mxu0 0.0
        %3417 = vmatprep.subr.mxu0 0.0
        %3418 = vmatpush1.msra.mxu0 0.0
        %3419 = vmatprep.subr.mxu0 0.0
        %3420 = vmatpush1.msra.mxu0 0.0
        %3421 = vmatprep.subr.mxu0 0.0
        %3422 = vmatpush1.msra.mxu0 0.0
        %3423 = vmatprep.subr.mxu0 0.0
        %3424 = vmatpush1.msra.mxu0 0.0
        %3425 = vmatprep.subr.mxu0 0.0
        %3426 = vmatpush1.msra.mxu0 0.0
        %3427 = vmatprep.subr.mxu0 0.0
        %3428 = vmatpush1.msra.mxu0 0.0
        %3429 = vmatprep.subr.mxu0 0.0
        %3430 = vmatpush1.msra.mxu0 0.0
        %3431 = vmatprep.subr.mxu0 0.0
        %3432 = vmatpush1.msra.mxu0 0.0
        %3433 = vmatprep.subr.mxu0 0.0
        %3434 = vmatpush1.msra.mxu0 0.0
        %3435 = vmatprep.subr.mxu0 0.0
        %3436 = vmatpush1.msra.mxu0 0.0
        %3437 = vmatprep.subr.mxu0 0.0
        %3438 = vmatpush1.msra.mxu0 0.0
        %3439 = vmatprep.subr.mxu0 0.0
        %3440 = vmatpush1.msra.mxu0 0.0
        %3441 = vmatprep.mubr.f32.mxu0 0.0
        %3442 = vmatmul.mubr.f32.gmra.mrb[0].mxu0 %v3353
        %v3443 = vpop.f32.mrb[0].mxu0
        %v3444 = vadd.f32 %v3375, %v3443
        %v3445 = vpop.f32.mrb[0].mxu0
        %3446 = vdwg.mxu0
        %v3447 = vmax.f32 %v3444, 0.0
        %v3448 = vld [vmem:[#allocation26] sm:$0xff]
        %v3449 = vld [vmem:[#allocation26 + $0x8] sm:$0xff]
        %v3450 = vld [vmem:[#allocation26 + $0x10] sm:$0xff]
        %v3451 = vld [vmem:[#allocation26 + $0x18] sm:$0xff]
        %v3452 = vld [vmem:[#allocation26 + $0x20] sm:$0xff]
        %v3453 = vld [vmem:[#allocation26 + $0x28] sm:$0xff]
        %v3454 = vld [vmem:[#allocation26 + $0x30] sm:$0xff]
        %v3455 = vld [vmem:[#allocation26 + $0x38] sm:$0xff]
        %v3456 = vld [vmem:[#allocation26 + $0x40] sm:$0xff]
        %v3457 = vld [vmem:[#allocation26 + $0x48] sm:$0xff]
        %v3458 = vld [vmem:[#allocation26 + $0x50] sm:$0xff]
        %v3459 = vld [vmem:[#allocation26 + $0x58] sm:$0xff]
        %v3460 = vld [vmem:[#allocation26 + $0x60] sm:$0xff]
        %v3461 = vld [vmem:[#allocation26 + $0x68] sm:$0xff]
        %v3462 = vld [vmem:[#allocation26 + $0x70] sm:$0xff]
        %v3463 = vld [vmem:[#allocation26 + $0x78] sm:$0xff]
        %v3464 = vld [vmem:[#allocation28] sm:$0x1]
        %v3466 = vlaneseq
        %v3467 = vshrl.u32 %v3466, 7
        %v3468 = vsub.s32 0, %v3467
        %v3469 = vrot.slane %v3464, %v3468
        %3471 = vmatprep.subr.mxu0 0.0
        %3472 = vmatpush1.msra.mxu0 %v3448
        %3473 = vmatprep.subr.mxu0 0.0
        %3474 = vmatpush1.msra.mxu0 %v3449
        %3475 = vmatprep.subr.mxu0 0.0
        %3476 = vmatpush1.msra.mxu0 %v3450
        %3477 = vmatprep.subr.mxu0 0.0
        %3478 = vmatpush1.msra.mxu0 %v3451
        %3479 = vmatprep.subr.mxu0 0.0
        %3480 = vmatpush1.msra.mxu0 %v3452
        %3481 = vmatprep.subr.mxu0 0.0
        %3482 = vmatpush1.msra.mxu0 %v3453
        %3483 = vmatprep.subr.mxu0 0.0
        %3484 = vmatpush1.msra.mxu0 %v3454
        %3485 = vmatprep.subr.mxu0 0.0
        %3486 = vmatpush1.msra.mxu0 %v3455
        %3487 = vmatprep.subr.mxu0 0.0
        %3488 = vmatpush1.msra.mxu0 %v3456
        %3489 = vmatprep.subr.mxu0 0.0
        %3490 = vmatpush1.msra.mxu0 %v3457
        %3491 = vmatprep.subr.mxu0 0.0
        %3492 = vmatpush1.msra.mxu0 %v3458
        %3493 = vmatprep.subr.mxu0 0.0
        %3494 = vmatpush1.msra.mxu0 %v3459
        %3495 = vmatprep.subr.mxu0 0.0
        %3496 = vmatpush1.msra.mxu0 %v3460
        %3497 = vmatprep.subr.mxu0 0.0
        %3498 = vmatpush1.msra.mxu0 %v3461
        %3499 = vmatprep.subr.mxu0 0.0
        %3500 = vmatpush1.msra.mxu0 %v3462
        %3501 = vmatprep.subr.mxu0 0.0
        %3502 = vmatpush1.msra.mxu0 %v3463
        %3503 = vmatprep.subr.mxu0 0.0
        %3504 = vmatpush1.msra.mxu0 0.0
        %3505 = vmatprep.subr.mxu0 0.0
        %3506 = vmatpush1.msra.mxu0 0.0
        %3507 = vmatprep.subr.mxu0 0.0
        %3508 = vmatpush1.msra.mxu0 0.0
        %3509 = vmatprep.subr.mxu0 0.0
        %3510 = vmatpush1.msra.mxu0 0.0
        %3511 = vmatprep.subr.mxu0 0.0
        %3512 = vmatpush1.msra.mxu0 0.0
        %3513 = vmatprep.subr.mxu0 0.0
        %3514 = vmatpush1.msra.mxu0 0.0
        %3515 = vmatprep.subr.mxu0 0.0
        %3516 = vmatpush1.msra.mxu0 0.0
        %3517 = vmatprep.subr.mxu0 0.0
        %3518 = vmatpush1.msra.mxu0 0.0
        %3519 = vmatprep.subr.mxu0 0.0
        %3520 = vmatpush1.msra.mxu0 0.0
        %3521 = vmatprep.subr.mxu0 0.0
        %3522 = vmatpush1.msra.mxu0 0.0
        %3523 = vmatprep.subr.mxu0 0.0
        %3524 = vmatpush1.msra.mxu0 0.0
        %3525 = vmatprep.subr.mxu0 0.0
        %3526 = vmatpush1.msra.mxu0 0.0
        %3527 = vmatprep.subr.mxu0 0.0
        %3528 = vmatpush1.msra.mxu0 0.0
        %3529 = vmatprep.subr.mxu0 0.0
        %3530 = vmatpush1.msra.mxu0 0.0
        %3531 = vmatprep.subr.mxu0 0.0
        %3532 = vmatpush1.msra.mxu0 0.0
        %3533 = vmatprep.subr.mxu0 0.0
        %3534 = vmatpush1.msra.mxu0 0.0
        %3535 = vmatprep.mubr.f32.mxu0 0.0
        %3536 = vmatmul.mubr.f32.gmra.mrb[0].mxu0 %v3447
        %v3537 = vpop.f32.mrb[0].mxu0
        %v3538 = vadd.f32 %v3469, %v3537
        %v3539 = vpop.f32.mrb[0].mxu0
        %3540 = vdwg.mxu0
        %v3541 = vadd.f32 %v3353, %v3538
        %v3542 = vld [vmem:[#allocation29 + $0x2] sm:$0x1]
        %v3543 = vld [vmem:[#allocation29 + $0x3] sm:$0x1]
        %3544 = vadd.xlane.f32.xlu0 %v3541
        %v3545 = vpop.xlane.xlu0 %3544
        %v3546 = vmul.f32 %v3545, 0.01
        %v3547 = vmul.f32 %v3541, %v3541
        %3548 = vadd.xlane.f32.xlu0 %v3547
        %v3549 = vpop.xlane.xlu0 %3548
        %v3550 = vmul.f32 %v3549, 0.01
        %v3551 = vmul.f32 %v3546, %v3546
        %v3552 = vsub.f32 %v3550, %v3551
        %v3553 = vsub.f32 %v3541, %v3546
        %v3554 = vadd.f32 %v3552, 1e-05
        %v3555 = vrsqrt.pop %v3554
        %v3556 = vmul.f32 %v3553, %v3555
        %v3557 = vlaneseq
        %v3558 = vshrl.u32 %v3557, 7
        %v3559 = vsub.s32 0, %v3558
        %v3560 = vrot.slane %v3542, %v3559
        %v3561 = vmul.f32 %v3556, %v3560
        %v3562 = vlaneseq
        %v3563 = vshrl.u32 %v3562, 7
        %v3564 = vsub.s32 0, %v3563
        %v3565 = vrot.slane %v3543, %v3564
        %v3566 = vadd.f32 %v3561, %v3565
        %s3567 = scalar_lea.vmem [#allocation17], 384
        %v3568 = vld [vmem:[%s3567] sm:$0xff]
        %v3569 = vld [vmem:[%s3567 + $0x8] sm:$0xff]
        %v3570 = vld [vmem:[%s3567 + $0x10] sm:$0xff]
        %v3571 = vld [vmem:[%s3567 + $0x18] sm:$0xff]
        %v3572 = vld [vmem:[%s3567 + $0x20] sm:$0xff]
        %v3573 = vld [vmem:[%s3567 + $0x28] sm:$0xff]
        %v3574 = vld [vmem:[%s3567 + $0x30] sm:$0xff]
        %v3575 = vld [vmem:[%s3567 + $0x38] sm:$0xff]
        %v3576 = vld [vmem:[%s3567 + $0x40] sm:$0xff]
        %v3577 = vld [vmem:[%s3567 + $0x48] sm:$0xff]
        %v3578 = vld [vmem:[%s3567 + $0x50] sm:$0xff]
        %v3579 = vld [vmem:[%s3567 + $0x58] sm:$0xff]
        %v3580 = vld [vmem:[%s3567 + $0x60] sm:$0xff]
        %v3581 = vld [vmem:[%s3567 + $0x68] sm:$0xff]
        %v3582 = vld [vmem:[%s3567 + $0x70] sm:$0xff]
        %v3583 = vld [vmem:[%s3567 + $0x78] sm:$0xff]
        %v3584 = vld [vmem:[%s3567 + $0x80] sm:$0xff]
        %v3585 = vld [vmem:[%s3567 + $0x88] sm:$0xff]
        %v3586 = vld [vmem:[%s3567 + $0x90] sm:$0xff]
        %v3587 = vld [vmem:[%s3567 + $0x98] sm:$0xff]
        %v3588 = vld [vmem:[%s3567 + $0xa0] sm:$0xff]
        %v3589 = vld [vmem:[%s3567 + $0xa8] sm:$0xff]
        %v3590 = vld [vmem:[%s3567 + $0xb0] sm:$0xff]
        %v3591 = vld [vmem:[%s3567 + $0xb8] sm:$0xff]
        %v3592 = vld [vmem:[%s3567 + $0xc0] sm:$0xff]
        %v3593 = vld [vmem:[%s3567 + $0xc8] sm:$0xff]
        %v3594 = vld [vmem:[%s3567 + $0xd0] sm:$0xff]
        %v3595 = vld [vmem:[%s3567 + $0xd8] sm:$0xff]
        %v3596 = vld [vmem:[%s3567 + $0xe0] sm:$0xff]
        %v3597 = vld [vmem:[%s3567 + $0xe8] sm:$0xff]
        %v3598 = vld [vmem:[%s3567 + $0xf0] sm:$0xff]
        %v3599 = vld [vmem:[%s3567 + $0xf8] sm:$0xff]
        %v3600 = vld [vmem:[%s3567 + $0x100] sm:$0xff]
        %v3601 = vld [vmem:[%s3567 + $0x108] sm:$0xff]
        %v3602 = vld [vmem:[%s3567 + $0x110] sm:$0xff]
        %v3603 = vld [vmem:[%s3567 + $0x118] sm:$0xff]
        %v3604 = vld [vmem:[%s3567 + $0x120] sm:$0xff]
        %v3605 = vld [vmem:[%s3567 + $0x128] sm:$0xff]
        %v3606 = vld [vmem:[%s3567 + $0x130] sm:$0xff]
        %v3607 = vld [vmem:[%s3567 + $0x138] sm:$0xff]
        %v3608 = vld [vmem:[%s3567 + $0x140] sm:$0xff]
        %v3609 = vld [vmem:[%s3567 + $0x148] sm:$0xff]
        %v3610 = vld [vmem:[%s3567 + $0x150] sm:$0xff]
        %v3611 = vld [vmem:[%s3567 + $0x158] sm:$0xff]
        %v3612 = vld [vmem:[%s3567 + $0x160] sm:$0xff]
        %v3613 = vld [vmem:[%s3567 + $0x168] sm:$0xff]
        %v3614 = vld [vmem:[%s3567 + $0x170] sm:$0xff]
        %v3615 = vld [vmem:[%s3567 + $0x178] sm:$0xff]
        %s3616 = scalar_lea.vmem [#allocation19], 3
        %v3617 = vld [vmem:[%s3616] sm:$0x7]
        %v3619 = vlaneseq
        %v3620 = vshrl.u32 %v3619, 7
        %v3621 = vsub.s32 0, %v3620
        %v3622 = vrot.slane %v3617, %v3621
        %v3623 = vlaneseq
        %v3624 = vshrl.u32 %v3623, 7
        %v3625 = vsub.s32 1, %v3624
        %v3626 = vrot.slane %v3617, %v3625
        %v3627 = vlaneseq
        %v3628 = vshrl.u32 %v3627, 7
        %v3629 = vsub.s32 2, %v3628
        %v3630 = vrot.slane %v3617, %v3629
        %3634 = vmatprep.subr.mxu0 %v3569
        %3635 = vmatpush1.msra.mxu0 %v3568
        %3636 = vmatprep.subr.mxu0 %v3572
        %3637 = vmatpush1.msra.mxu0 %v3571
        %3638 = vmatprep.subr.mxu0 %v3575
        %3639 = vmatpush1.msra.mxu0 %v3574
        %3640 = vmatprep.subr.mxu0 %v3578
        %3641 = vmatpush1.msra.mxu0 %v3577
        %3642 = vmatprep.subr.mxu0 %v3581
        %3643 = vmatpush1.msra.mxu0 %v3580
        %3644 = vmatprep.subr.mxu0 %v3584
        %3645 = vmatpush1.msra.mxu0 %v3583
        %3646 = vmatprep.subr.mxu0 %v3587
        %3647 = vmatpush1.msra.mxu0 %v3586
        %3648 = vmatprep.subr.mxu0 %v3590
        %3649 = vmatpush1.msra.mxu0 %v3589
        %3650 = vmatprep.subr.mxu0 %v3593
        %3651 = vmatpush1.msra.mxu0 %v3592
        %3652 = vmatprep.subr.mxu0 %v3596
        %3653 = vmatpush1.msra.mxu0 %v3595
        %3654 = vmatprep.subr.mxu0 %v3599
        %3655 = vmatpush1.msra.mxu0 %v3598
        %3656 = vmatprep.subr.mxu0 %v3602
        %3657 = vmatpush1.msra.mxu0 %v3601
        %3658 = vmatprep.subr.mxu0 %v3605
        %3659 = vmatpush1.msra.mxu0 %v3604
        %3660 = vmatprep.subr.mxu0 %v3608
        %3661 = vmatpush1.msra.mxu0 %v3607
        %3662 = vmatprep.subr.mxu0 %v3611
        %3663 = vmatpush1.msra.mxu0 %v3610
        %3664 = vmatprep.subr.mxu0 %v3614
        %3665 = vmatpush1.msra.mxu0 %v3613
        %3666 = vmatprep.subr.mxu0 0.0
        %3667 = vmatpush1.msra.mxu0 0.0
        %3668 = vmatprep.subr.mxu0 0.0
        %3669 = vmatpush1.msra.mxu0 0.0
        %3670 = vmatprep.subr.mxu0 0.0
        %3671 = vmatpush1.msra.mxu0 0.0
        %3672 = vmatprep.subr.mxu0 0.0
        %3673 = vmatpush1.msra.mxu0 0.0
        %3674 = vmatprep.subr.mxu0 0.0
        %3675 = vmatpush1.msra.mxu0 0.0
        %3676 = vmatprep.subr.mxu0 0.0
        %3677 = vmatpush1.msra.mxu0 0.0
        %3678 = vmatprep.subr.mxu0 0.0
        %3679 = vmatpush1.msra.mxu0 0.0
        %3680 = vmatprep.subr.mxu0 0.0
        %3681 = vmatpush1.msra.mxu0 0.0
        %3682 = vmatprep.subr.mxu0 0.0
        %3683 = vmatpush1.msra.mxu0 0.0
        %3684 = vmatprep.subr.mxu0 0.0
        %3685 = vmatpush1.msra.mxu0 0.0
        %3686 = vmatprep.subr.mxu0 0.0
        %3687 = vmatpush1.msra.mxu0 0.0
        %3688 = vmatprep.subr.mxu0 0.0
        %3689 = vmatpush1.msra.mxu0 0.0
        %3690 = vmatprep.subr.mxu0 0.0
        %3691 = vmatpush1.msra.mxu0 0.0
        %3692 = vmatprep.subr.mxu0 0.0
        %3693 = vmatpush1.msra.mxu0 0.0
        %3694 = vmatprep.subr.mxu0 0.0
        %3695 = vmatpush1.msra.mxu0 0.0
        %3696 = vmatprep.subr.mxu0 0.0
        %3697 = vmatpush1.msra.mxu0 0.0
        %3698 = vmatprep.mubr.f32.mxu0 0.0
        %3699 = vmatmul.mubr.f32.gmra.mrb[0].mxu0 %v3566
        %v3700 = vpop.f32.mrb[0].mxu0
        %v3701 = vadd.f32 %v3622, %v3700
        %v3702 = vpop.f32.mrb[0].mxu0
        %v3703 = vadd.f32 %v3626, %v3702
        %3704 = vdwg.mxu0
        %3705 = vmatprep.subr.mxu0 0.0
        %3706 = vmatpush1.msra.mxu0 %v3570
        %3707 = vmatprep.subr.mxu0 0.0
        %3708 = vmatpush1.msra.mxu0 %v3573
        %3709 = vmatprep.subr.mxu0 0.0
        %3710 = vmatpush1.msra.mxu0 %v3576
        %3711 = vmatprep.subr.mxu0 0.0
        %3712 = vmatpush1.msra.mxu0 %v3579
        %3713 = vmatprep.subr.mxu0 0.0
        %3714 = vmatpush1.msra.mxu0 %v3582
        %3715 = vmatprep.subr.mxu0 0.0
        %3716 = vmatpush1.msra.mxu0 %v3585
        %3717 = vmatprep.subr.mxu0 0.0
        %3718 = vmatpush1.msra.mxu0 %v3588
        %3719 = vmatprep.subr.mxu0 0.0
        %3720 = vmatpush1.msra.mxu0 %v3591
        %3721 = vmatprep.subr.mxu0 0.0
        %3722 = vmatpush1.msra.mxu0 %v3594
        %3723 = vmatprep.subr.mxu0 0.0
        %3724 = vmatpush1.msra.mxu0 %v3597
        %3725 = vmatprep.subr.mxu0 0.0
        %3726 = vmatpush1.msra.mxu0 %v3600
        %3727 = vmatprep.subr.mxu0 0.0
        %3728 = vmatpush1.msra.mxu0 %v3603
        %3729 = vmatprep.subr.mxu0 0.0
        %3730 = vmatpush1.msra.mxu0 %v3606
        %3731 = vmatprep.subr.mxu0 0.0
        %3732 = vmatpush1.msra.mxu0 %v3609
        %3733 = vmatprep.subr.mxu0 0.0
        %3734 = vmatpush1.msra.mxu0 %v3612
        %3735 = vmatprep.subr.mxu0 0.0
        %3736 = vmatpush1.msra.mxu0 %v3615
        %3737 = vmatprep.subr.mxu0 0.0
        %3738 = vmatpush1.msra.mxu0 0.0
        %3739 = vmatprep.subr.mxu0 0.0
        %3740 = vmatpush1.msra.mxu0 0.0
        %3741 = vmatprep.subr.mxu0 0.0
        %3742 = vmatpush1.msra.mxu0 0.0
        %3743 = vmatprep.subr.mxu0 0.0
        %3744 = vmatpush1.msra.mxu0 0.0
        %3745 = vmatprep.subr.mxu0 0.0
        %3746 = vmatpush1.msra.mxu0 0.0
        %3747 = vmatprep.subr.mxu0 0.0
        %3748 = vmatpush1.msra.mxu0 0.0
        %3749 = vmatprep.subr.mxu0 0.0
        %3750 = vmatpush1.msra.mxu0 0.0
        %3751 = vmatprep.subr.mxu0 0.0
        %3752 = vmatpush1.msra.mxu0 0.0
        %3753 = vmatprep.subr.mxu0 0.0
        %3754 = vmatpush1.msra.mxu0 0.0
        %3755 = vmatprep.subr.mxu0 0.0
        %3756 = vmatpush1.msra.mxu0 0.0
        %3757 = vmatprep.subr.mxu0 0.0
        %3758 = vmatpush1.msra.mxu0 0.0
        %3759 = vmatprep.subr.mxu0 0.0
        %3760 = vmatpush1.msra.mxu0 0.0
        %3761 = vmatprep.subr.mxu0 0.0
        %3762 = vmatpush1.msra.mxu0 0.0
        %3763 = vmatprep.subr.mxu0 0.0
        %3764 = vmatpush1.msra.mxu0 0.0
        %3765 = vmatprep.subr.mxu0 0.0
        %3766 = vmatpush1.msra.mxu0 0.0
        %3767 = vmatprep.subr.mxu0 0.0
        %3768 = vmatpush1.msra.mxu0 0.0
        %3769 = vmatprep.mubr.f32.mxu0 0.0
        %3770 = vmatmul.mubr.f32.gmra.mrb[0].mxu0 %v3566
        %v3771 = vpop.f32.mrb[0].mxu0
        %v3772 = vadd.f32 %v3630, %v3771
        %v3773 = vpop.f32.mrb[0].mxu0
        %3774 = vdwg.mxu0
        %3775 = vmatprep.subr.mxu0 0.0
        %3776 = vmatpush1.xpose.msra.mxu0 %v3703
        %3777 = vmatprep.subr.mxu0 0.0
        %3778 = vmatpush1.xpose.msra.mxu0 0.0
        %3779 = vmatprep.subr.mxu0 0.0
        %3780 = vmatpush1.xpose.msra.mxu0 0.0
        %3781 = vmatprep.subr.mxu0 0.0
        %3782 = vmatpush1.xpose.msra.mxu0 0.0
        %3783 = vmatprep.subr.mxu0 0.0
        %3784 = vmatpush1.xpose.msra.mxu0 0.0
        %3785 = vmatprep.subr.mxu0 0.0
        %3786 = vmatpush1.xpose.msra.mxu0 0.0
        %3787 = vmatprep.subr.mxu0 0.0
        %3788 = vmatpush1.xpose.msra.mxu0 0.0
        %3789 = vmatprep.subr.mxu0 0.0
        %3790 = vmatpush1.xpose.msra.mxu0 0.0
        %3791 = vmatprep.subr.mxu0 0.0
        %3792 = vmatpush1.xpose.msra.mxu0 0.0
        %3793 = vmatprep.subr.mxu0 0.0
        %3794 = vmatpush1.xpose.msra.mxu0 0.0
        %3795 = vmatprep.subr.mxu0 0.0
        %3796 = vmatpush1.xpose.msra.mxu0 0.0
        %3797 = vmatprep.subr.mxu0 0.0
        %3798 = vmatpush1.xpose.msra.mxu0 0.0
        %3799 = vmatprep.subr.mxu0 0.0
        %3800 = vmatpush1.xpose.msra.mxu0 0.0
        %3801 = vmatprep.subr.mxu0 0.0
        %3802 = vmatpush1.xpose.msra.mxu0 0.0
        %3803 = vmatprep.subr.mxu0 0.0
        %3804 = vmatpush1.xpose.msra.mxu0 0.0
        %3805 = vmatprep.subr.mxu0 0.0
        %3806 = vmatpush1.xpose.msra.mxu0 0.0
        %3807 = vmatprep.subr.mxu0 0.0
        %3808 = vmatpush1.xpose.msra.mxu0 0.0
        %3809 = vmatprep.subr.mxu0 0.0
        %3810 = vmatpush1.xpose.msra.mxu0 0.0
        %3811 = vmatprep.subr.mxu0 0.0
        %3812 = vmatpush1.xpose.msra.mxu0 0.0
        %3813 = vmatprep.subr.mxu0 0.0
        %3814 = vmatpush1.xpose.msra.mxu0 0.0
        %3815 = vmatprep.subr.mxu0 0.0
        %3816 = vmatpush1.xpose.msra.mxu0 0.0
        %3817 = vmatprep.subr.mxu0 0.0
        %3818 = vmatpush1.xpose.msra.mxu0 0.0
        %3819 = vmatprep.subr.mxu0 0.0
        %3820 = vmatpush1.xpose.msra.mxu0 0.0
        %3821 = vmatprep.subr.mxu0 0.0
        %3822 = vmatpush1.xpose.msra.mxu0 0.0
        %3823 = vmatprep.subr.mxu0 0.0
        %3824 = vmatpush1.xpose.msra.mxu0 0.0
        %3825 = vmatprep.subr.mxu0 0.0
        %3826 = vmatpush1.xpose.msra.mxu0 0.0
        %3827 = vmatprep.subr.mxu0 0.0
        %3828 = vmatpush1.xpose.msra.mxu0 0.0
        %3829 = vmatprep.subr.mxu0 0.0
        %3830 = vmatpush1.xpose.msra.mxu0 0.0
        %3831 = vmatprep.subr.mxu0 0.0
        %3832 = vmatpush1.xpose.msra.mxu0 0.0
        %3833 = vmatprep.subr.mxu0 0.0
        %3834 = vmatpush1.xpose.msra.mxu0 0.0
        %3835 = vmatprep.subr.mxu0 0.0
        %3836 = vmatpush1.xpose.msra.mxu0 0.0
        %3837 = vmatprep.subr.mxu0 0.0
        %3838 = vmatpush1.xpose.msra.mxu0 0.0
        %3839 = vmatprep.mubr.f32.mxu0 0.0
        %3840 = vmatmul.mubr.f32.gmra.mrb[0].mxu0 %v3701
        %v3841 = vpop.f32.mrb[0].mxu0
        %v3842 = vadd.f32 0.0, %v3841
        %v3843 = vpop.f32.mrb[0].mxu0
        %3844 = vdwg.mxu0
        %v3845 = vmul.f32 %v3842, 0.1
        %v3846 = vsel %vm2870, %v3845, -1e+30
        %v3847 = vsel %vm3150, %v3846, -inf
        %3848 = vmax.xlane.f32.xlu0 %v3847
        %v3849 = vpop.xlane.xlu0 %3848
        %v3850 = vsub.f32 %v3846, %v3849
        %v3851 = vmul.f32 %v3850, 1.442695
        %v3852 = vpow.pop %v3851
        %v3853 = vsel %vm3150, %v3852, 0.0
        %3854 = vadd.xlane.f32.xlu0 %v3853
        %v3855 = vpop.xlane.xlu0 %3854
        %v3856 = vrcp.pop %v3855
        %v3857 = vmul.f32 %v3852, %v3856
        %v3859 = vsel %vm3150, %v3857, 0
        %3861 = vmatprep.subr.mxu0 0.0
        %3862 = vmatpush1.msra.mxu0 %v3772
        %3863 = vmatprep.subr.mxu0 0.0
        %3864 = vmatpush1.msra.mxu0 0.0
        %3865 = vmatprep.subr.mxu0 0.0
        %3866 = vmatpush1.msra.mxu0 0.0
        %3867 = vmatprep.subr.mxu0 0.0
        %3868 = vmatpush1.msra.mxu0 0.0
        %3869 = vmatprep.subr.mxu0 0.0
        %3870 = vmatpush1.msra.mxu0 0.0
        %3871 = vmatprep.subr.mxu0 0.0
        %3872 = vmatpush1.msra.mxu0 0.0
        %3873 = vmatprep.subr.mxu0 0.0
        %3874 = vmatpush1.msra.mxu0 0.0
        %3875 = vmatprep.subr.mxu0 0.0
        %3876 = vmatpush1.msra.mxu0 0.0
        %3877 = vmatprep.subr.mxu0 0.0
        %3878 = vmatpush1.msra.mxu0 0.0
        %3879 = vmatprep.subr.mxu0 0.0
        %3880 = vmatpush1.msra.mxu0 0.0
        %3881 = vmatprep.subr.mxu0 0.0
        %3882 = vmatpush1.msra.mxu0 0.0
        %3883 = vmatprep.subr.mxu0 0.0
        %3884 = vmatpush1.msra.mxu0 0.0
        %3885 = vmatprep.subr.mxu0 0.0
        %3886 = vmatpush1.msra.mxu0 0.0
        %3887 = vmatprep.subr.mxu0 0.0
        %3888 = vmatpush1.msra.mxu0 0.0
        %3889 = vmatprep.subr.mxu0 0.0
        %3890 = vmatpush1.msra.mxu0 0.0
        %3891 = vmatprep.subr.mxu0 0.0
        %3892 = vmatpush1.msra.mxu0 0.0
        %3893 = vmatprep.subr.mxu0 0.0
        %3894 = vmatpush1.msra.mxu0 0.0
        %3895 = vmatprep.subr.mxu0 0.0
        %3896 = vmatpush1.msra.mxu0 0.0
        %3897 = vmatprep.subr.mxu0 0.0
        %3898 = vmatpush1.msra.mxu0 0.0
        %3899 = vmatprep.subr.mxu0 0.0
        %3900 = vmatpush1.msra.mxu0 0.0
        %3901 = vmatprep.subr.mxu0 0.0
        %3902 = vmatpush1.msra.mxu0 0.0
        %3903 = vmatprep.subr.mxu0 0.0
        %3904 = vmatpush1.msra.mxu0 0.0
        %3905 = vmatprep.subr.mxu0 0.0
        %3906 = vmatpush1.msra.mxu0 0.0
        %3907 = vmatprep.subr.mxu0 0.0
        %3908 = vmatpush1.msra.mxu0 0.0
        %3909 = vmatprep.subr.mxu0 0.0
        %3910 = vmatpush1.msra.mxu0 0.0
        %3911 = vmatprep.subr.mxu0 0.0
        %3912 = vmatpush1.msra.mxu0 0.0
        %3913 = vmatprep.subr.mxu0 0.0
        %3914 = vmatpush1.msra.mxu0 0.0
        %3915 = vmatprep.subr.mxu0 0.0
        %3916 = vmatpush1.msra.mxu0 0.0
        %3917 = vmatprep.subr.mxu0 0.0
        %3918 = vmatpush1.msra.mxu0 0.0
        %3919 = vmatprep.subr.mxu0 0.0
        %3920 = vmatpush1.msra.mxu0 0.0
        %3921 = vmatprep.subr.mxu0 0.0
        %3922 = vmatpush1.msra.mxu0 0.0
        %3923 = vmatprep.subr.mxu0 0.0
        %3924 = vmatpush1.msra.mxu0 0.0
        %3925 = vmatprep.mubr.f32.mxu0 0.0
        %3926 = vmatmul.mubr.f32.gmra.mrb[0].mxu0 %v3859
        %v3927 = vpop.f32.mrb[0].mxu0
        %v3928 = vadd.f32 0.0, %v3927
        %v3929 = vpop.f32.mrb[0].mxu0
        %3930 = vdwg.mxu0
        %s3931 = scalar_lea.vmem [#allocation20], 128
        %v3932 = vld [vmem:[%s3931] sm:$0xff]
        %v3933 = vld [vmem:[%s3931 + $0x8] sm:$0xff]
        %v3934 = vld [vmem:[%s3931 + $0x10] sm:$0xff]
        %v3935 = vld [vmem:[%s3931 + $0x18] sm:$0xff]
        %v3936 = vld [vmem:[%s3931 + $0x20] sm:$0xff]
        %v3937 = vld [vmem:[%s3931 + $0x28] sm:$0xff]
        %v3938 = vld [vmem:[%s3931 + $0x30] sm:$0xff]
        %v3939 = vld [vmem:[%s3931 + $0x38] sm:$0xff]
        %v3940 = vld [vmem:[%s3931 + $0x40] sm:$0xff]
        %v3941 = vld [vmem:[%s3931 + $0x48] sm:$0xff]
        %v3942 = vld [vmem:[%s3931 + $0x50] sm:$0xff]
        %v3943 = vld [vmem:[%s3931 + $0x58] sm:$0xff]
        %v3944 = vld [vmem:[%s3931 + $0x60] sm:$0xff]
        %v3945 = vld [vmem:[%s3931 + $0x68] sm:$0xff]
        %v3946 = vld [vmem:[%s3931 + $0x70] sm:$0xff]
        %v3947 = vld [vmem:[%s3931 + $0x78] sm:$0xff]
        %s3948 = scalar_lea.vmem [#allocation22], 1
        %v3949 = vld [vmem:[%s3948] sm:$0x1]
        %v3951 = vlaneseq
        %v3952 = vshrl.u32 %v3951, 7
        %v3953 = vsub.s32 0, %v3952
        %v3954 = vrot.slane %v3949, %v3953
        %3956 = vmatprep.subr.mxu0 0.0
        %3957 = vmatpush1.msra.mxu0 %v3932
        %3958 = vmatprep.subr.mxu0 0.0
        %3959 = vmatpush1.msra.mxu0 %v3933
        %3960 = vmatprep.subr.mxu0 0.0
        %3961 = vmatpush1.msra.mxu0 %v3934
        %3962 = vmatprep.subr.mxu0 0.0
        %3963 = vmatpush1.msra.mxu0 %v3935
        %3964 = vmatprep.subr.mxu0 0.0
        %3965 = vmatpush1.msra.mxu0 %v3936
        %3966 = vmatprep.subr.mxu0 0.0
        %3967 = vmatpush1.msra.mxu0 %v3937
        %3968 = vmatprep.subr.mxu0 0.0
        %3969 = vmatpush1.msra.mxu0 %v3938
        %3970 = vmatprep.subr.mxu0 0.0
        %3971 = vmatpush1.msra.mxu0 %v3939
        %3972 = vmatprep.subr.mxu0 0.0
        %3973 = vmatpush1.msra.mxu0 %v3940
        %3974 = vmatprep.subr.mxu0 0.0
        %3975 = vmatpush1.msra.mxu0 %v3941
        %3976 = vmatprep.subr.mxu0 0.0
        %3977 = vmatpush1.msra.mxu0 %v3942
        %3978 = vmatprep.subr.mxu0 0.0
        %3979 = vmatpush1.msra.mxu0 %v3943
        %3980 = vmatprep.subr.mxu0 0.0
        %3981 = vmatpush1.msra.mxu0 %v3944
        %3982 = vmatprep.subr.mxu0 0.0
        %3983 = vmatpush1.msra.mxu0 %v3945
        %3984 = vmatprep.subr.mxu0 0.0
        %3985 = vmatpush1.msra.mxu0 %v3946
        %3986 = vmatprep.subr.mxu0 0.0
        %3987 = vmatpush1.msra.mxu0 %v3947
        %3988 = vmatprep.subr.mxu0 0.0
        %3989 = vmatpush1.msra.mxu0 0.0
        %3990 = vmatprep.subr.mxu0 0.0
        %3991 = vmatpush1.msra.mxu0 0.0
        %3992 = vmatprep.subr.mxu0 0.0
        %3993 = vmatpush1.msra.mxu0 0.0
        %3994 = vmatprep.subr.mxu0 0.0
        %3995 = vmatpush1.msra.mxu0 0.0
        %3996 = vmatprep.subr.mxu0 0.0
        %3997 = vmatpush1.msra.mxu0 0.0
        %3998 = vmatprep.subr.mxu0 0.0
        %3999 = vmatpush1.msra.mxu0 0.0
        %4000 = vmatprep.subr.mxu0 0.0
        %4001 = vmatpush1.msra.mxu0 0.0
        %4002 = vmatprep.subr.mxu0 0.0
        %4003 = vmatpush1.msra.mxu0 0.0
        %4004 = vmatprep.subr.mxu0 0.0
        %4005 = vmatpush1.msra.mxu0 0.0
        %4006 = vmatprep.subr.mxu0 0.0
        %4007 = vmatpush1.msra.mxu0 0.0
        %4008 = vmatprep.subr.mxu0 0.0
        %4009 = vmatpush1.msra.mxu0 0.0
        %4010 = vmatprep.subr.mxu0 0.0
        %4011 = vmatpush1.msra.mxu0 0.0
        %4012 = vmatprep.subr.mxu0 0.0
        %4013 = vmatpush1.msra.mxu0 0.0
        %4014 = vmatprep.subr.mxu0 0.0
        %4015 = vmatpush1.msra.mxu0 0.0
        %4016 = vmatprep.subr.mxu0 0.0
        %4017 = vmatpush1.msra.mxu0 0.0
        %4018 = vmatprep.subr.mxu0 0.0
        %4019 = vmatpush1.msra.mxu0 0.0
        %4020 = vmatprep.mubr.f32.mxu0 0.0
        %4021 = vmatmul.mubr.f32.gmra.mrb[0].mxu0 %v3928
        %v4022 = vpop.f32.mrb[0].mxu0
        %v4023 = vadd.f32 %v3954, %v4022
        %v4024 = vpop.f32.mrb[0].mxu0
        %4025 = vdwg.mxu0
        %v4026 = vadd.f32 %v3566, %v4023
        %s4027 = scalar_lea.vmem [#allocation29], 4
        %v4028 = vld [vmem:[%s4027] sm:$0x1]
        %v4029 = vld [vmem:[%s4027 + $0x1] sm:$0x1]
        %4030 = vadd.xlane.f32.xlu0 %v4026
        %v4031 = vpop.xlane.xlu0 %4030
        %v4032 = vmul.f32 %v4031, 0.01
        %v4033 = vmul.f32 %v4026, %v4026
        %4034 = vadd.xlane.f32.xlu0 %v4033
        %v4035 = vpop.xlane.xlu0 %4034
        %v4036 = vmul.f32 %v4035, 0.01
        %v4037 = vmul.f32 %v4032, %v4032
        %v4038 = vsub.f32 %v4036, %v4037
        %v4039 = vsub.f32 %v4026, %v4032
        %v4040 = vadd.f32 %v4038, 1e-05
        %v4041 = vrsqrt.pop %v4040
        %v4042 = vmul.f32 %v4039, %v4041
        %v4043 = vlaneseq
        %v4044 = vshrl.u32 %v4043, 7
        %v4045 = vsub.s32 0, %v4044
        %v4046 = vrot.slane %v4028, %v4045
        %v4047 = vmul.f32 %v4042, %v4046
        %v4048 = vlaneseq
        %v4049 = vshrl.u32 %v4048, 7
        %v4050 = vsub.s32 0, %v4049
        %v4051 = vrot.slane %v4029, %v4050
        %v4052 = vadd.f32 %v4047, %v4051
        %s4053 = scalar_lea.vmem [#allocation23], 128
        %v4054 = vld [vmem:[%s4053] sm:$0xff]
        %v4055 = vld [vmem:[%s4053 + $0x8] sm:$0xff]
        %v4056 = vld [vmem:[%s4053 + $0x10] sm:$0xff]
        %v4057 = vld [vmem:[%s4053 + $0x18] sm:$0xff]
        %v4058 = vld [vmem:[%s4053 + $0x20] sm:$0xff]
        %v4059 = vld [vmem:[%s4053 + $0x28] sm:$0xff]
        %v4060 = vld [vmem:[%s4053 + $0x30] sm:$0xff]
        %v4061 = vld [vmem:[%s4053 + $0x38] sm:$0xff]
        %v4062 = vld [vmem:[%s4053 + $0x40] sm:$0xff]
        %v4063 = vld [vmem:[%s4053 + $0x48] sm:$0xff]
        %v4064 = vld [vmem:[%s4053 + $0x50] sm:$0xff]
        %v4065 = vld [vmem:[%s4053 + $0x58] sm:$0xff]
        %v4066 = vld [vmem:[%s4053 + $0x60] sm:$0xff]
        %v4067 = vld [vmem:[%s4053 + $0x68] sm:$0xff]
        %v4068 = vld [vmem:[%s4053 + $0x70] sm:$0xff]
        %v4069 = vld [vmem:[%s4053 + $0x78] sm:$0xff]
        %s4070 = scalar_lea.vmem [#allocation25], 1
        %v4071 = vld [vmem:[%s4070] sm:$0x1]
        %v4073 = vlaneseq
        %v4074 = vshrl.u32 %v4073, 7
        %v4075 = vsub.s32 0, %v4074
        %v4076 = vrot.slane %v4071, %v4075
        %4078 = vmatprep.subr.mxu0 0.0
        %4079 = vmatpush1.msra.mxu0 %v4054
        %4080 = vmatprep.subr.mxu0 0.0
        %4081 = vmatpush1.msra.mxu0 %v4055
        %4082 = vmatprep.subr.mxu0 0.0
        %4083 = vmatpush1.msra.mxu0 %v4056
        %4084 = vmatprep.subr.mxu0 0.0
        %4085 = vmatpush1.msra.mxu0 %v4057
        %4086 = vmatprep.subr.mxu0 0.0
        %4087 = vmatpush1.msra.mxu0 %v4058
        %4088 = vmatprep.subr.mxu0 0.0
        %4089 = vmatpush1.msra.mxu0 %v4059
        %4090 = vmatprep.subr.mxu0 0.0
        %4091 = vmatpush1.msra.mxu0 %v4060
        %4092 = vmatprep.subr.mxu0 0.0
        %4093 = vmatpush1.msra.mxu0 %v4061
        %4094 = vmatprep.subr.mxu0 0.0
        %4095 = vmatpush1.msra.mxu0 %v4062
        %4096 = vmatprep.subr.mxu0 0.0
        %4097 = vmatpush1.msra.mxu0 %v4063
        %4098 = vmatprep.subr.mxu0 0.0
        %4099 = vmatpush1.msra.mxu0 %v4064
        %4100 = vmatprep.subr.mxu0 0.0
        %4101 = vmatpush1.msra.mxu0 %v4065
        %4102 = vmatprep.subr.mxu0 0.0
        %4103 = vmatpush1.msra.mxu0 %v4066
        %4104 = vmatprep.subr.mxu0 0.0
        %4105 = vmatpush1.msra.mxu0 %v4067
        %4106 = vmatprep.subr.mxu0 0.0
        %4107 = vmatpush1.msra.mxu0 %v4068
        %4108 = vmatprep.subr.mxu0 0.0
        %4109 = vmatpush1.msra.mxu0 %v4069
        %4110 = vmatprep.subr.mxu0 0.0
        %4111 = vmatpush1.msra.mxu0 0.0
        %4112 = vmatprep.subr.mxu0 0.0
        %4113 = vmatpush1.msra.mxu0 0.0
        %4114 = vmatprep.subr.mxu0 0.0
        %4115 = vmatpush1.msra.mxu0 0.0
        %4116 = vmatprep.subr.mxu0 0.0
        %4117 = vmatpush1.msra.mxu0 0.0
        %4118 = vmatprep.subr.mxu0 0.0
        %4119 = vmatpush1.msra.mxu0 0.0
        %4120 = vmatprep.subr.mxu0 0.0
        %4121 = vmatpush1.msra.mxu0 0.0
        %4122 = vmatprep.subr.mxu0 0.0
        %4123 = vmatpush1.msra.mxu0 0.0
        %4124 = vmatprep.subr.mxu0 0.0
        %4125 = vmatpush1.msra.mxu0 0.0
        %4126 = vmatprep.subr.mxu0 0.0
        %4127 = vmatpush1.msra.mxu0 0.0
        %4128 = vmatprep.subr.mxu0 0.0
        %4129 = vmatpush1.msra.mxu0 0.0
        %4130 = vmatprep.subr.mxu0 0.0
        %4131 = vmatpush1.msra.mxu0 0.0
        %4132 = vmatprep.subr.mxu0 0.0
        %4133 = vmatpush1.msra.mxu0 0.0
        %4134 = vmatprep.subr.mxu0 0.0
        %4135 = vmatpush1.msra.mxu0 0.0
        %4136 = vmatprep.subr.mxu0 0.0
        %4137 = vmatpush1.msra.mxu0 0.0
        %4138 = vmatprep.subr.mxu0 0.0
        %4139 = vmatpush1.msra.mxu0 0.0
        %4140 = vmatprep.subr.mxu0 0.0
        %4141 = vmatpush1.msra.mxu0 0.0
        %4142 = vmatprep.mubr.f32.mxu0 0.0
        %4143 = vmatmul.mubr.f32.gmra.mrb[0].mxu0 %v4052
        %v4144 = vpop.f32.mrb[0].mxu0
        %v4145 = vadd.f32 %v4076, %v4144
        %v4146 = vpop.f32.mrb[0].mxu0
        %4147 = vdwg.mxu0
        %v4148 = vmax.f32 %v4145, 0.0
        %s4149 = scalar_lea.vmem [#allocation26], 128
        %v4150 = vld [vmem:[%s4149] sm:$0xff]
        %v4151 = vld [vmem:[%s4149 + $0x8] sm:$0xff]
        %v4152 = vld [vmem:[%s4149 + $0x10] sm:$0xff]
        %v4153 = vld [vmem:[%s4149 + $0x18] sm:$0xff]
        %v4154 = vld [vmem:[%s4149 + $0x20] sm:$0xff]
        %v4155 = vld [vmem:[%s4149 + $0x28] sm:$0xff]
        %v4156 = vld [vmem:[%s4149 + $0x30] sm:$0xff]
        %v4157 = vld [vmem:[%s4149 + $0x38] sm:$0xff]
        %v4158 = vld [vmem:[%s4149 + $0x40] sm:$0xff]
        %v4159 = vld [vmem:[%s4149 + $0x48] sm:$0xff]
        %v4160 = vld [vmem:[%s4149 + $0x50] sm:$0xff]
        %v4161 = vld [vmem:[%s4149 + $0x58] sm:$0xff]
        %v4162 = vld [vmem:[%s4149 + $0x60] sm:$0xff]
        %v4163 = vld [vmem:[%s4149 + $0x68] sm:$0xff]
        %v4164 = vld [vmem:[%s4149 + $0x70] sm:$0xff]
        %v4165 = vld [vmem:[%s4149 + $0x78] sm:$0xff]
        %s4166 = scalar_lea.vmem [#allocation28], 1
        %v4167 = vld [vmem:[%s4166] sm:$0x1]
        %v4169 = vlaneseq
        %v4170 = vshrl.u32 %v4169, 7
        %v4171 = vsub.s32 0, %v4170
        %v4172 = vrot.slane %v4167, %v4171
        %4174 = vmatprep.subr.mxu0 0.0
        %4175 = vmatpush1.msra.mxu0 %v4150
        %4176 = vmatprep.subr.mxu0 0.0
        %4177 = vmatpush1.msra.mxu0 %v4151
        %4178 = vmatprep.subr.mxu0 0.0
        %4179 = vmatpush1.msra.mxu0 %v4152
        %4180 = vmatprep.subr.mxu0 0.0
        %4181 = vmatpush1.msra.mxu0 %v4153
        %4182 = vmatprep.subr.mxu0 0.0
        %4183 = vmatpush1.msra.mxu0 %v4154
        %4184 = vmatprep.subr.mxu0 0.0
        %4185 = vmatpush1.msra.mxu0 %v4155
        %4186 = vmatprep.subr.mxu0 0.0
        %4187 = vmatpush1.msra.mxu0 %v4156
        %4188 = vmatprep.subr.mxu0 0.0
        %4189 = vmatpush1.msra.mxu0 %v4157
        %4190 = vmatprep.subr.mxu0 0.0
        %4191 = vmatpush1.msra.mxu0 %v4158
        %4192 = vmatprep.subr.mxu0 0.0
        %4193 = vmatpush1.msra.mxu0 %v4159
        %4194 = vmatprep.subr.mxu0 0.0
        %4195 = vmatpush1.msra.mxu0 %v4160
        %4196 = vmatprep.subr.mxu0 0.0
        %4197 = vmatpush1.msra.mxu0 %v4161
        %4198 = vmatprep.subr.mxu0 0.0
        %4199 = vmatpush1.msra.mxu0 %v4162
        %4200 = vmatprep.subr.mxu0 0.0
        %4201 = vmatpush1.msra.mxu0 %v4163
        %4202 = vmatprep.subr.mxu0 0.0
        %4203 = vmatpush1.msra.mxu0 %v4164
        %4204 = vmatprep.subr.mxu0 0.0
        %4205 = vmatpush1.msra.mxu0 %v4165
        %4206 = vmatprep.subr.mxu0 0.0
        %4207 = vmatpush1.msra.mxu0 0.0
        %4208 = vmatprep.subr.mxu0 0.0
        %4209 = vmatpush1.msra.mxu0 0.0
        %4210 = vmatprep.subr.mxu0 0.0
        %4211 = vmatpush1.msra.mxu0 0.0
        %4212 = vmatprep.subr.mxu0 0.0
        %4213 = vmatpush1.msra.mxu0 0.0
        %4214 = vmatprep.subr.mxu0 0.0
        %4215 = vmatpush1.msra.mxu0 0.0
        %4216 = vmatprep.subr.mxu0 0.0
        %4217 = vmatpush1.msra.mxu0 0.0
        %4218 = vmatprep.subr.mxu0 0.0
        %4219 = vmatpush1.msra.mxu0 0.0
        %4220 = vmatprep.subr.mxu0 0.0
        %4221 = vmatpush1.msra.mxu0 0.0
        %4222 = vmatprep.subr.mxu0 0.0
        %4223 = vmatpush1.msra.mxu0 0.0
        %4224 = vmatprep.subr.mxu0 0.0
        %4225 = vmatpush1.msra.mxu0 0.0
        %4226 = vmatprep.subr.mxu0 0.0
        %4227 = vmatpush1.msra.mxu0 0.0
        %4228 = vmatprep.subr.mxu0 0.0
        %4229 = vmatpush1.msra.mxu0 0.0
        %4230 = vmatprep.subr.mxu0 0.0
        %4231 = vmatpush1.msra.mxu0 0.0
        %4232 = vmatprep.subr.mxu0 0.0
        %4233 = vmatpush1.msra.mxu0 0.0
        %4234 = vmatprep.subr.mxu0 0.0
        %4235 = vmatpush1.msra.mxu0 0.0
        %4236 = vmatprep.subr.mxu0 0.0
        %4237 = vmatpush1.msra.mxu0 0.0
        %4238 = vmatprep.mubr.f32.mxu0 0.0
        %4239 = vmatmul.mubr.f32.gmra.mrb[0].mxu0 %v4148
        %v4240 = vpop.f32.mrb[0].mxu0
        %v4241 = vadd.f32 %v4172, %v4240
        %v4242 = vpop.f32.mrb[0].mxu0
        %4243 = vdwg.mxu0
        %v4244 = vadd.f32 %v4052, %v4241
        %v4245 = vld [vmem:[%s4027 + $0x2] sm:$0x1]
        %v4246 = vld [vmem:[%s4027 + $0x3] sm:$0x1]
        %4247 = vadd.xlane.f32.xlu0 %v4244
        %v4248 = vpop.xlane.xlu0 %4247
        %v4249 = vmul.f32 %v4248, 0.01
        %v4250 = vmul.f32 %v4244, %v4244
        %4251 = vadd.xlane.f32.xlu0 %v4250
        %v4252 = vpop.xlane.xlu0 %4251
        %v4253 = vmul.f32 %v4252, 0.01
        %v4254 = vmul.f32 %v4249, %v4249
        %v4255 = vsub.f32 %v4253, %v4254
        %v4256 = vsub.f32 %v4244, %v4249
        %v4257 = vadd.f32 %v4255, 1e-05
        %v4258 = vrsqrt.pop %v4257
        %v4259 = vmul.f32 %v4256, %v4258
        %v4260 = vlaneseq
        %v4261 = vshrl.u32 %v4260, 7
        %v4262 = vsub.s32 0, %v4261
        %v4263 = vrot.slane %v4245, %v4262
        %v4264 = vmul.f32 %v4259, %v4263
        %v4265 = vlaneseq
        %v4266 = vshrl.u32 %v4265, 7
        %v4267 = vsub.s32 0, %v4266
        %v4268 = vrot.slane %v4246, %v4267
        %v4269 = vadd.f32 %v4264, %v4268
        %v4270 = vrot.slane %v4269, 4
        %v4271 = vadd.f32 %v4269, %v4270
        %v4272 = vrot.slane %v4271, 2
        %v4273 = vadd.f32 %v4271, %v4272
        %v4274 = vrot.slane %v4273, 1
        %v4275 = vadd.f32 %v4273, %v4274
        %v4276 = vrcp.pop 8.0
        %v4277 = vmul.f32 %v4275, %v4276
        %v4278 = vrot.slane %v4269, 4
        %v4279 = vmax.f32 %v4269, %v4278
        %v4280 = vrot.slane %v4279, 2
        %v4281 = vmax.f32 %v4279, %v4280
        %v4282 = vrot.slane %v4281, 1
        %v4283 = vmax.f32 %v4281, %v4282
        %v4284 = vld [vmem:[#allocation31] sm:$0xff]
        %v4285 = vld [vmem:[#allocation31 + $0x8] sm:$0xff]
        %v4286 = vld [vmem:[#allocation31 + $0x10] sm:$0xff]
        %v4287 = vld [vmem:[#allocation31 + $0x18] sm:$0xff]
        %v4288 = vld [vmem:[#allocation31 + $0x20] sm:$0xff]
        %v4289 = vld [vmem:[#allocation31 + $0x28] sm:$0xff]
        %v4290 = vld [vmem:[#allocation31 + $0x30] sm:$0xff]
        %v4291 = vld [vmem:[#allocation31 + $0x38] sm:$0xff]
        %v4292 = vld [vmem:[#allocation31 + $0x40] sm:$0xff]
        %v4293 = vld [vmem:[#allocation31 + $0x48] sm:$0xff]
        %v4294 = vld [vmem:[#allocation31 + $0x50] sm:$0xff]
        %v4295 = vld [vmem:[#allocation31 + $0x58] sm:$0xff]
        %v4296 = vld [vmem:[#allocation31 + $0x60] sm:$0xff]
        %v4297 = vld [vmem:[#allocation31 + $0x68] sm:$0xff]
        %v4298 = vld [vmem:[#allocation31 + $0x70] sm:$0xff]
        %v4299 = vld [vmem:[#allocation31 + $0x78] sm:$0xff]
        %v4300 = vld [vmem:[#allocation32] sm:$0xff]
        %v4301 = vld [vmem:[#allocation32 + $0x8] sm:$0xff]
        %v4302 = vld [vmem:[#allocation32 + $0x10] sm:$0xff]
        %v4303 = vld [vmem:[#allocation32 + $0x18] sm:$0xff]
        %v4304 = vld [vmem:[#allocation32 + $0x20] sm:$0xff]
        %v4305 = vld [vmem:[#allocation32 + $0x28] sm:$0xff]
        %v4306 = vld [vmem:[#allocation32 + $0x30] sm:$0xff]
        %v4307 = vld [vmem:[#allocation32 + $0x38] sm:$0xff]
        %v4308 = vld [vmem:[#allocation32 + $0x40] sm:$0xff]
        %v4309 = vld [vmem:[#allocation32 + $0x48] sm:$0xff]
        %v4310 = vld [vmem:[#allocation32 + $0x50] sm:$0xff]
        %v4311 = vld [vmem:[#allocation32 + $0x58] sm:$0xff]
        %v4312 = vld [vmem:[#allocation32 + $0x60] sm:$0xff]
        %v4313 = vld [vmem:[#allocation32 + $0x68] sm:$0xff]
        %v4314 = vld [vmem:[#allocation32 + $0x70] sm:$0xff]
        %v4315 = vld [vmem:[#allocation32 + $0x78] sm:$0xff]
        %4316 = vmatprep.subr.mxu0 0.0
        %4317 = vmatpush1.msra.mxu0 %v4300
        %4318 = vmatprep.subr.mxu0 0.0
        %4319 = vmatpush1.msra.mxu0 %v4301
        %4320 = vmatprep.subr.mxu0 0.0
        %4321 = vmatpush1.msra.mxu0 %v4302
        %4322 = vmatprep.subr.mxu0 0.0
        %4323 = vmatpush1.msra.mxu0 %v4303
        %4324 = vmatprep.subr.mxu0 0.0
        %4325 = vmatpush1.msra.mxu0 %v4304
        %4326 = vmatprep.subr.mxu0 0.0
        %4327 = vmatpush1.msra.mxu0 %v4305
        %4328 = vmatprep.subr.mxu0 0.0
        %4329 = vmatpush1.msra.mxu0 %v4306
        %4330 = vmatprep.subr.mxu0 0.0
        %4331 = vmatpush1.msra.mxu0 %v4307
        %4332 = vmatprep.subr.mxu0 0.0
        %4333 = vmatpush1.msra.mxu0 %v4308
        %4334 = vmatprep.subr.mxu0 0.0
        %4335 = vmatpush1.msra.mxu0 %v4309
        %4336 = vmatprep.subr.mxu0 0.0
        %4337 = vmatpush1.msra.mxu0 %v4310
        %4338 = vmatprep.subr.mxu0 0.0
        %4339 = vmatpush1.msra.mxu0 %v4311
        %4340 = vmatprep.subr.mxu0 0.0
        %4341 = vmatpush1.msra.mxu0 %v4312
        %4342 = vmatprep.subr.mxu0 0.0
        %4343 = vmatpush1.msra.mxu0 %v4313
        %4344 = vmatprep.subr.mxu0 0.0
        %4345 = vmatpush1.msra.mxu0 %v4314
        %4346 = vmatprep.subr.mxu0 0.0
        %4347 = vmatpush1.msra.mxu0 %v4315
        %4348 = vmatprep.subr.mxu0 0.0
        %4349 = vmatpush1.msra.mxu0 0.0
        %4350 = vmatprep.subr.mxu0 0.0
        %4351 = vmatpush1.msra.mxu0 0.0
        %4352 = vmatprep.subr.mxu0 0.0
        %4353 = vmatpush1.msra.mxu0 0.0
        %4354 = vmatprep.subr.mxu0 0.0
        %4355 = vmatpush1.msra.mxu0 0.0
        %4356 = vmatprep.subr.mxu0 0.0
        %4357 = vmatpush1.msra.mxu0 0.0
        %4358 = vmatprep.subr.mxu0 0.0
        %4359 = vmatpush1.msra.mxu0 0.0
        %4360 = vmatprep.subr.mxu0 0.0
        %4361 = vmatpush1.msra.mxu0 0.0
        %4362 = vmatprep.subr.mxu0 0.0
        %4363 = vmatpush1.msra.mxu0 0.0
        %4364 = vmatprep.subr.mxu0 0.0
        %4365 = vmatpush1.msra.mxu0 0.0
        %4366 = vmatprep.subr.mxu0 0.0
        %4367 = vmatpush1.msra.mxu0 0.0
        %4368 = vmatprep.subr.mxu0 0.0
        %4369 = vmatpush1.msra.mxu0 0.0
        %4370 = vmatprep.subr.mxu0 0.0
        %4371 = vmatpush1.msra.mxu0 0.0
        %4372 = vmatprep.subr.mxu0 0.0
        %4373 = vmatpush1.msra.mxu0 0.0
        %4374 = vmatprep.subr.mxu0 0.0
        %4375 = vmatpush1.msra.mxu0 0.0
        %4376 = vmatprep.subr.mxu0 0.0
        %4377 = vmatpush1.msra.mxu0 0.0
        %4378 = vmatprep.subr.mxu0 0.0
        %4379 = vmatpush1.msra.mxu0 0.0
        %4380 = vmatprep.mubr.f32.mxu0 0.0
        %4381 = vmatmul.mubr.f32.gmra.mrb[0].mxu0 %v4283
        %v4382 = vpop.f32.mrb[0].mxu0
        %v4383 = vadd.f32 0.0, %v4382
        %v4384 = vpop.f32.mrb[0].mxu0
        %4385 = vdwg.mxu0
        %4386 = vmatprep.subr.mxu0 0.0
        %4387 = vmatpush1.msra.mxu0 %v4284
        %4388 = vmatprep.subr.mxu0 0.0
        %4389 = vmatpush1.msra.mxu0 %v4285
        %4390 = vmatprep.subr.mxu0 0.0
        %4391 = vmatpush1.msra.mxu0 %v4286
        %4392 = vmatprep.subr.mxu0 0.0
        %4393 = vmatpush1.msra.mxu0 %v4287
        %4394 = vmatprep.subr.mxu0 0.0
        %4395 = vmatpush1.msra.mxu0 %v4288
        %4396 = vmatprep.subr.mxu0 0.0
        %4397 = vmatpush1.msra.mxu0 %v4289
        %4398 = vmatprep.subr.mxu0 0.0
        %4399 = vmatpush1.msra.mxu0 %v4290
        %4400 = vmatprep.subr.mxu0 0.0
        %4401 = vmatpush1.msra.mxu0 %v4291
        %4402 = vmatprep.subr.mxu0 0.0
        %4403 = vmatpush1.msra.mxu0 %v4292
        %4404 = vmatprep.subr.mxu0 0.0
        %4405 = vmatpush1.msra.mxu0 %v4293
        %4406 = vmatprep.subr.mxu0 0.0
        %4407 = vmatpush1.msra.mxu0 %v4294
        %4408 = vmatprep.subr.mxu0 0.0
        %4409 = vmatpush1.msra.mxu0 %v4295
        %4410 = vmatprep.subr.mxu0 0.0
        %4411 = vmatpush1.msra.mxu0 %v4296
        %4412 = vmatprep.subr.mxu0 0.0
        %4413 = vmatpush1.msra.mxu0 %v4297
        %4414 = vmatprep.subr.mxu0 0.0
        %4415 = vmatpush1.msra.mxu0 %v4298
        %4416 = vmatprep.subr.mxu0 0.0
        %4417 = vmatpush1.msra.mxu0 %v4299
        %4418 = vmatprep.subr.mxu0 0.0
        %4419 = vmatpush1.msra.mxu0 0.0
        %4420 = vmatprep.subr.mxu0 0.0
        %4421 = vmatpush1.msra.mxu0 0.0
        %4422 = vmatprep.subr.mxu0 0.0
        %4423 = vmatpush1.msra.mxu0 0.0
        %4424 = vmatprep.subr.mxu0 0.0
        %4425 = vmatpush1.msra.mxu0 0.0
        %4426 = vmatprep.subr.mxu0 0.0
        %4427 = vmatpush1.msra.mxu0 0.0
        %4428 = vmatprep.subr.mxu0 0.0
        %4429 = vmatpush1.msra.mxu0 0.0
        %4430 = vmatprep.subr.mxu0 0.0
        %4431 = vmatpush1.msra.mxu0 0.0
        %4432 = vmatprep.subr.mxu0 0.0
        %4433 = vmatpush1.msra.mxu0 0.0
        %4434 = vmatprep.subr.mxu0 0.0
        %4435 = vmatpush1.msra.mxu0 0.0
        %4436 = vmatprep.subr.mxu0 0.0
        %4437 = vmatpush1.msra.mxu0 0.0
        %4438 = vmatprep.subr.mxu0 0.0
        %4439 = vmatpush1.msra.mxu0 0.0
        %4440 = vmatprep.subr.mxu0 0.0
        %4441 = vmatpush1.msra.mxu0 0.0
        %4442 = vmatprep.subr.mxu0 0.0
        %4443 = vmatpush1.msra.mxu0 0.0
        %4444 = vmatprep.subr.mxu0 0.0
        %4445 = vmatpush1.msra.mxu0 0.0
        %4446 = vmatprep.subr.mxu0 0.0
        %4447 = vmatpush1.msra.mxu0 0.0
        %4448 = vmatprep.subr.mxu0 0.0
        %4449 = vmatpush1.msra.mxu0 0.0
        %4450 = vmatprep.mubr.f32.mxu0 0.0
        %4451 = vmatmul.mubr.f32.gmra.mrb[0].mxu0 %v4277
        %v4452 = vpop.f32.mrb[0].mxu0
        %v4453 = vadd.f32 %v4383, %v4452
        %v4454 = vpop.f32.mrb[0].mxu0
        %4455 = vdwg.mxu0
        %v4456 = vld [vmem:[#allocation34] sm:$0xff]
        %v4457 = vld [vmem:[#allocation34 + $0x8] sm:$0xff]
        %v4458 = vld [vmem:[#allocation34 + $0x10] sm:$0xff]
        %v4459 = vld [vmem:[#allocation34 + $0x18] sm:$0xff]
        %v4460 = vld [vmem:[#allocation34 + $0x20] sm:$0xff]
        %v4461 = vld [vmem:[#allocation34 + $0x28] sm:$0xff]
        %v4462 = vld [vmem:[#allocation34 + $0x30] sm:$0xff]
        %v4463 = vld [vmem:[#allocation34 + $0x38] sm:$0xff]
        %v4465 = vsel %vm2575, %v2865, 0
        %4467 = vmatprep.subr.mxu0 0.0
        %4468 = vmatpush1.msra.mxu0 %v4456
        %4469 = vmatprep.subr.mxu0 0.0
        %4470 = vmatpush1.msra.mxu0 %v4457
        %4471 = vmatprep.subr.mxu0 0.0
        %4472 = vmatpush1.msra.mxu0 %v4458
        %4473 = vmatprep.subr.mxu0 0.0
        %4474 = vmatpush1.msra.mxu0 %v4459
        %4475 = vmatprep.subr.mxu0 0.0
        %4476 = vmatpush1.msra.mxu0 %v4460
        %4477 = vmatprep.subr.mxu0 0.0
        %4478 = vmatpush1.msra.mxu0 %v4461
        %4479 = vmatprep.subr.mxu0 0.0
        %4480 = vmatpush1.msra.mxu0 %v4462
        %4481 = vmatprep.subr.mxu0 0.0
        %4482 = vmatpush1.msra.mxu0 %v4463
        %4483 = vmatprep.subr.mxu0 0.0
        %4484 = vmatpush1.msra.mxu0 0.0
        %4485 = vmatprep.subr.mxu0 0.0
        %4486 = vmatpush1.msra.mxu0 0.0
        %4487 = vmatprep.subr.mxu0 0.0
        %4488 = vmatpush1.msra.mxu0 0.0
        %4489 = vmatprep.subr.mxu0 0.0
        %4490 = vmatpush1.msra.mxu0 0.0
        %4491 = vmatprep.subr.mxu0 0.0
        %4492 = vmatpush1.msra.mxu0 0.0
        %4493 = vmatprep.subr.mxu0 0.0
        %4494 = vmatpush1.msra.mxu0 0.0
        %4495 = vmatprep.subr.mxu0 0.0
        %4496 = vmatpush1.msra.mxu0 0.0
        %4497 = vmatprep.subr.mxu0 0.0
        %4498 = vmatpush1.msra.mxu0 0.0
        %4499 = vmatprep.subr.mxu0 0.0
        %4500 = vmatpush1.msra.mxu0 0.0
        %4501 = vmatprep.subr.mxu0 0.0
        %4502 = vmatpush1.msra.mxu0 0.0
        %4503 = vmatprep.subr.mxu0 0.0
        %4504 = vmatpush1.msra.mxu0 0.0
        %4505 = vmatprep.subr.mxu0 0.0
        %4506 = vmatpush1.msra.mxu0 0.0
        %4507 = vmatprep.subr.mxu0 0.0
        %4508 = vmatpush1.msra.mxu0 0.0
        %4509 = vmatprep.subr.mxu0 0.0
        %4510 = vmatpush1.msra.mxu0 0.0
        %4511 = vmatprep.subr.mxu0 0.0
        %4512 = vmatpush1.msra.mxu0 0.0
        %4513 = vmatprep.subr.mxu0 0.0
        %4514 = vmatpush1.msra.mxu0 0.0
        %4515 = vmatprep.subr.mxu0 0.0
        %4516 = vmatpush1.msra.mxu0 0.0
        %4517 = vmatprep.subr.mxu0 0.0
        %4518 = vmatpush1.msra.mxu0 0.0
        %4519 = vmatprep.subr.mxu0 0.0
        %4520 = vmatpush1.msra.mxu0 0.0
        %4521 = vmatprep.subr.mxu0 0.0
        %4522 = vmatpush1.msra.mxu0 0.0
        %4523 = vmatprep.subr.mxu0 0.0
        %4524 = vmatpush1.msra.mxu0 0.0
        %4525 = vmatprep.subr.mxu0 0.0
        %4526 = vmatpush1.msra.mxu0 0.0
        %4527 = vmatprep.subr.mxu0 0.0
        %4528 = vmatpush1.msra.mxu0 0.0
        %4529 = vmatprep.subr.mxu0 0.0
        %4530 = vmatpush1.msra.mxu0 0.0
        %4531 = vmatprep.mubr.f32.mxu0 0.0
        %4532 = vmatmul.mubr.f32.gmra.mrb[0].mxu0 %v4465
        %v4533 = vpop.f32.mrb[0].mxu0
        %v4534 = vadd.f32 0.0, %v4533
        %v4535 = vpop.f32.mrb[0].mxu0
        %4536 = vdwg.mxu0
        %v4537 = vadd.f32 %v4453, %v4534
        %v4538 = vld [vmem:[#allocation35] sm:$0x1]
        %v4539 = vadd.f32 %v4537, %v4538
        %v4540 = vmax.f32 %v4539, 0.0
        %v4541 = vld [vmem:[%s23] sm:$0xff]
        %v4542 = vld [vmem:[%s23 + $0x8] sm:$0xff]
        %v4543 = vld [vmem:[%s23 + $0x10] sm:$0xff]
        %v4544 = vld [vmem:[%s23 + $0x18] sm:$0xff]
        %v4545 = vld [vmem:[%s23 + $0x20] sm:$0xff]
        %v4546 = vld [vmem:[%s23 + $0x28] sm:$0xff]
        %v4547 = vld [vmem:[%s23 + $0x30] sm:$0xff]
        %v4548 = vld [vmem:[%s23 + $0x38] sm:$0xff]
        %v4549 = vld [vmem:[%s23 + $0x40] sm:$0xff]
        %v4550 = vld [vmem:[%s23 + $0x48] sm:$0xff]
        %v4551 = vld [vmem:[%s23 + $0x50] sm:$0xff]
        %v4552 = vld [vmem:[%s23 + $0x58] sm:$0xff]
        %v4553 = vld [vmem:[%s23 + $0x60] sm:$0xff]
        %v4554 = vld [vmem:[%s23 + $0x68] sm:$0xff]
        %v4555 = vld [vmem:[%s23 + $0x70] sm:$0xff]
        %v4556 = vld [vmem:[%s23 + $0x78] sm:$0xff]
        %v4557 = vld [vmem:[#allocation37] sm:$0x1]
        %4558 = vmatprep.subr.mxu0 0.0
        %4559 = vmatpush1.msra.mxu0 %v4541
        %4560 = vmatprep.subr.mxu0 0.0
        %4561 = vmatpush1.msra.mxu0 %v4542
        %4562 = vmatprep.subr.mxu0 0.0
        %4563 = vmatpush1.msra.mxu0 %v4543
        %4564 = vmatprep.subr.mxu0 0.0
        %4565 = vmatpush1.msra.mxu0 %v4544
        %4566 = vmatprep.subr.mxu0 0.0
        %4567 = vmatpush1.msra.mxu0 %v4545
        %4568 = vmatprep.subr.mxu0 0.0
        %4569 = vmatpush1.msra.mxu0 %v4546
        %4570 = vmatprep.subr.mxu0 0.0
        %4571 = vmatpush1.msra.mxu0 %v4547
        %4572 = vmatprep.subr.mxu0 0.0
        %4573 = vmatpush1.msra.mxu0 %v4548
        %4574 = vmatprep.subr.mxu0 0.0
        %4575 = vmatpush1.msra.mxu0 %v4549
        %4576 = vmatprep.subr.mxu0 0.0
        %4577 = vmatpush1.msra.mxu0 %v4550
        %4578 = vmatprep.subr.mxu0 0.0
        %4579 = vmatpush1.msra.mxu0 %v4551
        %4580 = vmatprep.subr.mxu0 0.0
        %4581 = vmatpush1.msra.mxu0 %v4552
        %4582 = vmatprep.subr.mxu0 0.0
        %4583 = vmatpush1.msra.mxu0 %v4553
        %4584 = vmatprep.subr.mxu0 0.0
        %4585 = vmatpush1.msra.mxu0 %v4554
        %4586 = vmatprep.subr.mxu0 0.0
        %4587 = vmatpush1.msra.mxu0 %v4555
        %4588 = vmatprep.subr.mxu0 0.0
        %4589 = vmatpush1.msra.mxu0 %v4556
        %4590 = vmatprep.subr.mxu0 0.0
        %4591 = vmatpush1.msra.mxu0 0.0
        %4592 = vmatprep.subr.mxu0 0.0
        %4593 = vmatpush1.msra.mxu0 0.0
        %4594 = vmatprep.subr.mxu0 0.0
        %4595 = vmatpush1.msra.mxu0 0.0
        %4596 = vmatprep.subr.mxu0 0.0
        %4597 = vmatpush1.msra.mxu0 0.0
        %4598 = vmatprep.subr.mxu0 0.0
        %4599 = vmatpush1.msra.mxu0 0.0
        %4600 = vmatprep.subr.mxu0 0.0
        %4601 = vmatpush1.msra.mxu0 0.0
        %4602 = vmatprep.subr.mxu0 0.0
        %4603 = vmatpush1.msra.mxu0 0.0
        %4604 = vmatprep.subr.mxu0 0.0
        %4605 = vmatpush1.msra.mxu0 0.0
        %4606 = vmatprep.subr.mxu0 0.0
        %4607 = vmatpush1.msra.mxu0 0.0
        %4608 = vmatprep.subr.mxu0 0.0
        %4609 = vmatpush1.msra.mxu0 0.0
        %4610 = vmatprep.subr.mxu0 0.0
        %4611 = vmatpush1.msra.mxu0 0.0
        %4612 = vmatprep.subr.mxu0 0.0
        %4613 = vmatpush1.msra.mxu0 0.0
        %4614 = vmatprep.subr.mxu0 0.0
        %4615 = vmatpush1.msra.mxu0 0.0
        %4616 = vmatprep.subr.mxu0 0.0
        %4617 = vmatpush1.msra.mxu0 0.0
        %4618 = vmatprep.subr.mxu0 0.0
        %4619 = vmatpush1.msra.mxu0 0.0
        %4620 = vmatprep.subr.mxu0 0.0
        %4621 = vmatpush1.msra.mxu0 0.0
        %4622 = vmatprep.mubr.f32.mxu0 0.0
        %4623 = vmatmul.mubr.f32.gmra.mrb[0].mxu0 %v4540
        %v4624 = vpop.f32.mrb[0].mxu0
        %v4625 = vadd.f32 %v4557, %v4624
        %v4626 = vpop.f32.mrb[0].mxu0
        %4627 = vdwg.mxu0
        %vm4628 = vcmask 49152
        %4629 = vst.msk [vmem:[%s1033] sm:$0x1] %vm4628, %v4625
        %s4630 = sand.u32 %s592, 1
        %s4631 = scalar_lea.sflag [#allocation10], %s4630
        %s4632 = sand.u32 %s592, 1
        %s4633 = scalar_lea.vmem [#allocation38], %s4632
        // Predicated region
        $region197: #{multimodal_forward.1} parent=119 // pred_check
          %p4634 = pneg %p602
        $region198: #{multimodal_forward.1} parent=119 // pred_check_branch
          %4636 = sbr.rel (%p4634) target = $region200
        $region199: #{multimodal_forward.1} parent=119 // pred_region
          %s4638 = ssub.s32 16, 16
          %4639 = vsyncadd %s4631, %s4638
          %s4640 = smul.addr %s49, 16
          %s4641 = scalar_lea.hbm %s25, %s4640
          %s4643 = sshll.u32 %s4633, 4
          %s4644 = int_to_ptr.vmem [resolvable:$true] %s4643
          %4646 = dma.vmem_to_hbm [thread:$0]  %s4644, 16, %s4641, %s4631
        $region200: #{multimodal_forward.1} parent=119 // pred_fallthru
          _
      $region120: #{multimodal_forward.1} parent=5 // pred_fallthru
        _
      %p4647 = scmp.le.s32.totalorder 2, %s44
      // Predicated region
      $region201: #{multimodal_forward.1} parent=5 // pred_check
        %p4648 = pneg %p4647
      $region202: #{multimodal_forward.1} parent=5 // pred_check_branch
        %4650 = sbr.rel (%p4648) target = $region204
      $region203: #{multimodal_forward.1} parent=5 // pred_region
        %s4651 = ssub.s32 %s44, 2
        // Predicated region
        $region205: #{multimodal_forward.1} parent=203 // pred_check
          %p4652 = pneg %p608
        $region206: #{multimodal_forward.1} parent=203 // pred_check_branch
          %4654 = sbr.rel (%p4652) target = $region208
        $region207: #{multimodal_forward.1} parent=203 // pred_region
          %s4655 = sand.u32 %s593, 1
          %s4656 = scalar_lea.sflag [#allocation10], %s4655
          %s4657 = sand.u32 %s593, 1
          %s4658 = scalar_lea.vmem [#allocation38], %s4657
          %4659 = dma.done %s4656, 16
        $region208: #{multimodal_forward.1} parent=203 // pred_fallthru
          _
      $region204: #{multimodal_forward.1} parent=5 // pred_fallthru
        _
    $region6: #{multimodal_forward.1} parent=1 // loop_footer
      %s48 = sadd.s32 1, %s44
    $region7: #{multimodal_forward.1} parent=1 // loop_footer_branch
      %43 = sbr.rel target = $region3
    $region8: #{multimodal_forward.1} parent=1 // loop_exit
      _
    %4660 = vsyncpa [#allocation9], 1
    %s4661 = scalar_lea.sflag [#allocation9], 1
    %4662 = vsyncpa %s4661, 1
    %4663 = vsyncpa [#allocation12], 1
    %4664 = vsyncpa [#allocation15], 1
    %4665 = vsyncpa [#allocation18], 1
    %4666 = vsyncpa [#allocation21], 1
    %4667 = vsyncpa [#allocation24], 1
    %4668 = vsyncpa [#allocation27], 1
    %4669 = vsyncpa [#allocation30], 1
    %4670 = vsyncpa [#allocation33], 1
    %4671 = vsyncpa [#allocation36], 1
    %4672 = vsyncpa [#allocation10], 1
    %s4673 = scalar_lea.sflag [#allocation10], 1
    %4674 = vsyncpa %s4673, 1

</llo_original>
